<compile_context>
chip_gen: v7x
topology: tpu7x:2x2x1
jax: 0.10.0
libtpu: 0.0.40
codegen_flags: <defaults>
</compile_context>

<pallas_src>
from functools import partial

import numpy as np
import jax
import jax.numpy as jnp
from jax.experimental import pallas as pl
from jax.experimental.pallas import tpu as pltpu


def _round_up(x, m):
    return (x + m - 1) // m * m


def _pad_gate_cols(w, H, Hp):
    """Pad the last dim from 4H to 4Hp, keeping the PyTorch gate order (i,f,g,o)
    and placing gate k in columns [k*Hp, k*Hp + H) (rest zero)."""
    if Hp == H:
        return w
    pad = [(0, 0)] * (w.ndim - 1) + [(0, Hp - H)]
    parts = [jnp.pad(w[..., k * H:(k + 1) * H], pad) for k in range(4)]
    return jnp.concatenate(parts, axis=-1)


# ----------------------------- tiled linear kernel -------------------------- #

def _linear_kernel(x_ref, w_ref, b_ref, o_ref):
    # o = x @ w + b      x:[tm,K]  w:[K,tn]  b:[1,tn]
    o_ref[...] = (
        jnp.dot(x_ref[...], w_ref[...], preferred_element_type=jnp.float32)
        + b_ref[...]
    ).astype(o_ref.dtype)


def linear_pallas(x, w, b, *, tm=256, tn=512):
    """y = x @ w + b with a (M-tiles, N-tiles) parallel grid, 128-aligned blocks.
    Inputs are zero-padded to legal tile sizes and the result is sliced back."""
    M, K = x.shape
    N = w.shape[1]
    Mp = _round_up(M, 8)
    Kp = _round_up(K, 128)
    Np = _round_up(N, 128)
    tm = min(tm, Mp)
    tn = min(tn, Np)
    Mp = _round_up(Mp, tm)
    Np = _round_up(Np, tn)

    xp = jnp.zeros((Mp, Kp), x.dtype).at[:M, :K].set(x)
    wp = jnp.zeros((Kp, Np), w.dtype).at[:K, :N].set(w)
    bp = jnp.zeros((1, Np), jnp.float32).at[0, :N].set(
        jnp.asarray(b, jnp.float32).reshape(-1))

    out = pl.pallas_call(
        _linear_kernel,
        out_shape=jax.ShapeDtypeStruct((Mp, Np), jnp.float32),
        grid=(Mp // tm, Np // tn),
        in_specs=[
            pl.BlockSpec((tm, Kp), lambda i, j: (i, 0)),
            pl.BlockSpec((Kp, tn), lambda i, j: (0, j)),
            pl.BlockSpec((1, tn), lambda i, j: (0, j)),
        ],
        out_specs=pl.BlockSpec((tm, tn), lambda i, j: (i, j)),
        compiler_params=pltpu.CompilerParams(
            dimension_semantics=("parallel", "parallel")),
    )(xp, wp, bp)
    return out[:M, :N]


# ------------------------------ recurrent LSTM kernel ------------------------ #

def _lstm_kernel(gx_ref, vis_ref, whh_ref, mask_ref, out_ref, h_scr, c_scr):
    # gx_ref  : [Tc, Bb, 4Hp] f32   precomputed x @ W_ih (token part), time-major
    # vis_ref : [Bb, 4Hp]     f32   visual_emb @ W_ih_vis + (b_ih + b_hh)
    # whh_ref : [Hp, 4Hp]     compute dtype
    # mask_ref: [Tc, Bb, 1]   f32   1.0 where t < length[b] else 0.0
    # out_ref : [Tc, Bb, Hp]  f32
    tci = pl.program_id(1)

    @pl.when(tci == 0)
    def _():
        h_scr[...] = jnp.zeros_like(h_scr)
        c_scr[...] = jnp.zeros_like(c_scr)

    Hp = h_scr.shape[-1]
    Tc = gx_ref.shape[0]
    vis = vis_ref[...]                         # hoisted (constant over the chunk)
    whh = whh_ref[...]

    def step(j, carry):
        h, c = carry
        gates = gx_ref[j] + vis + jnp.dot(
            h.astype(whh.dtype), whh, preferred_element_type=jnp.float32)
        # gate slices are 128-aligned (Hp is a multiple of 128); f32 gate math.
        i_g = jax.nn.sigmoid(gates[:, 0 * Hp:1 * Hp])
        f_g = jax.nn.sigmoid(gates[:, 1 * Hp:2 * Hp])
        g_g = jnp.tanh(gates[:, 2 * Hp:3 * Hp])
        o_g = jax.nn.sigmoid(gates[:, 3 * Hp:4 * Hp])
        c = f_g * c + i_g * g_g
        h = o_g * jnp.tanh(c)
        # pack/pad semantics: zero the output for padded timesteps.
        out_ref[j] = (h * mask_ref[j]).astype(out_ref.dtype)
        return h, c

    h, c = jax.lax.fori_loop(0, Tc, step, (h_scr[...], c_scr[...]), unroll=True)
    h_scr[...] = h
    c_scr[...] = c


def lstm_recurrence_pallas(gx, vis_gates, w_hh, mask, Bb, Tc):
    """gx: [Tp, Bp, 4Hp]; vis_gates: [Bp, 4Hp]; w_hh: [Hp, 4Hp]; mask: [Tp, Bp, 1]
    Returns masked hidden states, time-major: [Tp, Bp, Hp]."""
    Tp, Bp, G4 = gx.shape
    Hp = G4 // 4
    return pl.pallas_call(
        _lstm_kernel,
        out_shape=jax.ShapeDtypeStruct((Tp, Bp, Hp), jnp.float32),
        grid=(Bp // Bb, Tp // Tc),
        in_specs=[
            pl.BlockSpec((Tc, Bb, 4 * Hp), lambda bi, ti: (ti, bi, 0)),
            pl.BlockSpec((Bb, 4 * Hp), lambda bi, ti: (bi, 0)),
            pl.BlockSpec((Hp, 4 * Hp), lambda bi, ti: (0, 0)),
            pl.BlockSpec((Tc, Bb, 1), lambda bi, ti: (ti, bi, 0)),
        ],
        out_specs=pl.BlockSpec((Tc, Bb, Hp), lambda bi, ti: (ti, bi, 0)),
        scratch_shapes=[
            pltpu.VMEM((Bb, Hp), jnp.float32),   # h state
            pltpu.VMEM((Bb, Hp), jnp.float32),   # c state
        ],
        compiler_params=pltpu.CompilerParams(
            dimension_semantics=("parallel", "arbitrary")),
    )(gx, vis_gates, w_hh, mask)


# --------------------------- QGen forward wrapper --------------------------- #

def init_qgen_params(key, num_embeddings, embedding_dim, hidden_size,
                     visual_embedding_dim, visual_dim, padding_idx=0):
    ks = jax.random.split(key, 8)
    s = 0.1
    E, H, Ve = embedding_dim, hidden_size, visual_embedding_dim
    params = {
        # Linear weights stored as [in, out] (transposed vs. PyTorch [out, in])
        "W_vis": jax.random.normal(ks[0], (visual_dim, Ve), jnp.float32) * s,
        "b_vis": jax.random.normal(ks[1], (1, Ve), jnp.float32) * s,
        "emb": jax.random.normal(ks[2], (num_embeddings, E), jnp.float32) * s,
        "W_ih": jax.random.normal(ks[3], (E + Ve, 4 * H), jnp.float32) * s,
        "W_hh": jax.random.normal(ks[4], (H, 4 * H), jnp.float32) * s,
        "b_lstm": jax.random.normal(ks[5], (1, 4 * H), jnp.float32) * s,  # b_ih + b_hh
        "W_h2v": jax.random.normal(ks[6], (H, num_embeddings), jnp.float32) * s,
        "b_h2v": jax.random.normal(ks[7], (1, num_embeddings), jnp.float32) * s,
    }
    params["emb"] = params["emb"].at[padding_idx].set(0.0)  # padding_idx row = 0
    return params


@partial(jax.jit, static_argnames=("out_T", "return_hidden", "compute_dtype"))
def _qgen_forward_impl(params, input_ids, length, fc8, *, out_T, return_hidden,
                       compute_dtype):
    B, T = input_ids.shape
    E = params["emb"].shape[1]
    H = params["W_hh"].shape[0]
    V = params["W_h2v"].shape[1]
    Hp = _round_up(H, 128)
    Vp = _round_up(V, 128)
    cdt = compute_dtype

    # padded batch / time-chunk sizes for the recurrent kernel
    Bb = min(_round_up(B, 8), 64)
    Bp = _round_up(B, Bb)
    Tc = min(_round_up(T, 8), 32)
    Tp = _round_up(T, Tc)

    # gate-padded LSTM weights (each gate occupies a lane-aligned Hp block)
    W_ih_emb_p = _pad_gate_cols(params["W_ih"][:E], H, Hp)       # [E,  4Hp]
    W_ih_vis_p = _pad_gate_cols(params["W_ih"][E:], H, Hp)       # [Ve, 4Hp]
    b_gates = _pad_gate_cols(params["b_lstm"], H, Hp)            # [1,  4Hp]
    W_hh_p = jnp.zeros((Hp, 4 * Hp), jnp.float32).at[:H].set(
        _pad_gate_cols(params["W_hh"], H, Hp))                   # [Hp, 4Hp]

    # --- visual path (no [B,T,Ve] tile / concat is ever materialized) ---
    visual_emb = linear_pallas(fc8.astype(cdt), params["W_vis"].astype(cdt),
                               params["b_vis"])                  # [B, Ve]
    vis_gates = linear_pallas(visual_emb.astype(cdt), W_ih_vis_p.astype(cdt),
                              b_gates)                           # [B, 4Hp]
    vis_gates = jnp.pad(vis_gates, ((0, Bp - B), (0, 0)))        # [Bp, 4Hp]

    # --- token path: hoisted input projection (one big MXU matmul) ---
    emb = params["emb"][input_ids]                               # [B, T, E] gather
    emb_tm = jnp.swapaxes(emb, 0, 1).reshape(T * B, E)           # time-major rows
    gx = linear_pallas(emb_tm.astype(cdt), W_ih_emb_p.astype(cdt),
                       jnp.zeros((1, 4 * Hp), jnp.float32))      # [T*B, 4Hp]
    gx = gx.reshape(T, B, 4 * Hp)
    gx = jnp.pad(gx, ((0, Tp - T), (0, Bp - B), (0, 0)))         # [Tp, Bp, 4Hp]

    # --- pack/pad mask (precomputed; no per-step length compare in the kernel) ---
    len_p = jnp.pad(length.astype(jnp.int32), (0, Bp - B))
    mask = (jnp.arange(Tp, dtype=jnp.int32)[:, None] < len_p[None, :])
    mask = mask.astype(jnp.float32)[:, :, None]                  # [Tp, Bp, 1]

    # --- recurrence (only h @ W_hh per step inside the sequential loop) ---
    outs_tm = lstm_recurrence_pallas(gx, vis_gates, W_hh_p.astype(cdt),
                                     mask, Bb, Tc)               # [Tp, Bp, Hp]

    outputs = jnp.swapaxes(outs_tm[:out_T, :B, :], 0, 1)         # [B, out_T, Hp]

    if return_hidden:
        return outputs[:, :, :H]

    # --- h2v projection, lane-dense (V padded to a multiple of 128) ---
    W_h2v_p = jnp.zeros((Hp, Vp), jnp.float32).at[:H, :V].set(params["W_h2v"])
    b_h2v_p = jnp.zeros((1, Vp), jnp.float32).at[0, :V].set(
        params["b_h2v"].reshape(-1))
    logits = linear_pallas(outputs.reshape(B * out_T, Hp).astype(cdt),
                           W_h2v_p.astype(cdt), b_h2v_p)         # [B*out_T, Vp]
    return logits.reshape(B, out_T, Vp)[:, :, :V]


def qgen_forward(params, input_ids, length, fc8, max_length=None,
                 return_hidden=False, compute_dtype=jnp.float32):
    if max_length is not None:
        out_T = int(max_length)
    else:
        # pad_packed_sequence default pads to max(length); needs concrete lengths.
        out_T = int(jax.device_get(jnp.max(length)))
    return _qgen_forward_impl(params, input_ids, length, fc8, out_T=out_T,
                              return_hidden=return_hidden,
                              compute_dtype=compute_dtype)


# ------------------------------ pure-JAX reference --------------------------- #

def qgen_forward_ref(params, input_ids, length, fc8):
    B, T = input_ids.shape
    H = params["W_hh"].shape[0]
    visual = fc8 @ params["W_vis"] + params["b_vis"]
    visual = jnp.tile(visual[:, None, :], (1, T, 1))
    emb = params["emb"][input_ids]
    x = jnp.concatenate([emb, visual], axis=-1)

    def step(carry, x_t):
        h, c = carry
        g = x_t @ params["W_ih"] + h @ params["W_hh"] + params["b_lstm"]
        i = jax.nn.sigmoid(g[:, :H]); f = jax.nn.sigmoid(g[:, H:2 * H])
        gg = jnp.tanh(g[:, 2 * H:3 * H]); o = jax.nn.sigmoid(g[:, 3 * H:])
        c = f * c + i * gg
        h = o * jnp.tanh(c)
        return (h, c), h

    (_, _), hs = jax.lax.scan(step, (jnp.zeros((B, H)), jnp.zeros((B, H))),
                              jnp.swapaxes(x, 0, 1))
    hs = jnp.swapaxes(hs, 0, 1)
    mask = jnp.arange(T)[None, :, None] < length[:, None, None]
    hs = jnp.where(mask, hs, 0.0)
    return hs @ params["W_h2v"] + params["b_h2v"]


# ----------------------------------- main ----------------------------------- #

if __name__ == "__main__":
    # TODO(synk): the PyTorch `inference` method (data-dependent greedy/sampling
    # decode loop) is not implemented here; only the training forward pass is.
    num_embeddings = 50
    embedding_dim = 16
    hidden_size = 32
    visual_embedding_dim = 16
    visual_dim = 64
    B, T = 4, 8

    key = jax.random.PRNGKey(0)
    kp, ki, kf = jax.random.split(key, 3)

    params = init_qgen_params(kp, num_embeddings, embedding_dim, hidden_size,
                              visual_embedding_dim, visual_dim, padding_idx=0)

    input_ids = jax.random.randint(ki, (B, T), 0, num_embeddings, dtype=jnp.int32)
    length = jnp.array([8, 5, 3, 6], dtype=jnp.int32)   # max(length) == T
    fc8 = jax.random.normal(kf, (B, visual_dim), jnp.float32)

    # f32 path: strict check against the pure-JAX reference
    logits = qgen_forward(params, input_ids, length, fc8)
    logits = jax.block_until_ready(logits)
    ref = qgen_forward_ref(params, input_ids, length, fc8)
    np.testing.assert_allclose(np.asarray(logits), np.asarray(ref),
                               rtol=1e-4, atol=1e-4)

    # return_hidden path (exercised for coverage)
    hidden = qgen_forward(params, input_ids, length, fc8, return_hidden=True)
    hidden = jax.block_until_ready(hidden)

    # bf16 MXU path: loose check (f32 accumulation / gate math retained)
    logits_bf16 = qgen_forward(params, input_ids, length, fc8,
                               compute_dtype=jnp.bfloat16)
    logits_bf16 = jax.block_until_ready(logits_bf16)
    np.testing.assert_allclose(np.asarray(logits_bf16), np.asarray(ref),
                               rtol=1e-1, atol=1e-1)

    print("KERNEL_OK")
</pallas_src>

<mosaic_0001>
module attributes {stable_mosaic.version = 11 : i64} {
  func.func @_linear_kernel(%arg0: i32, %arg1: i32, %arg2: memref<8x128xf32, #tpu.memory_space<vmem>>, %arg3: memref<128x128xf32, #tpu.memory_space<vmem>>, %arg4: memref<1x128xf32, #tpu.memory_space<vmem>>, %arg5: memref<8x128xf32, #tpu.memory_space<vmem>>) attributes {dimension_semantics = [#tpu.dimension_semantics<parallel>, #tpu.dimension_semantics<parallel>], iteration_bounds = array<i64: 1, 1>, scalar_prefetch = 0 : i64, scratch_operands = 0 : i64, tpu.core_type = #tpu.core_type<tc>, window_params = [{transform_indices = @transform_0, window_bounds = array<i64: 8, 128>}, {transform_indices = @transform_1, window_bounds = array<i64: 128, 128>}, {transform_indices = @transform_2, window_bounds = array<i64: 1, 128>}, {transform_indices = @transform_3, window_bounds = array<i64: 8, 128>}]} {
    %c0 = arith.constant 0 : index
    %c0_0 = arith.constant 0 : index
    %0 = vector.load %arg2[%c0, %c0_0] : memref<8x128xf32, #tpu.memory_space<vmem>>, vector<8x128xf32>
    %c0_1 = arith.constant 0 : index
    %c0_2 = arith.constant 0 : index
    %1 = vector.load %arg3[%c0_1, %c0_2] : memref<128x128xf32, #tpu.memory_space<vmem>>, vector<128x128xf32>
    %cst = arith.constant dense<0.000000e+00> : vector<8x128xf32>
    %2 = tpu.matmul %0, %1, %cst {dimension_numbers = #tpu.dot_dimension_numbers<[1], [0], [0], [1], [0, 0, 1, 1], [], []>} : vector<8x128xf32>, vector<128x128xf32>, vector<8x128xf32> -> vector<8x128xf32>
    %c0_3 = arith.constant 0 : index
    %c0_4 = arith.constant 0 : index
    %3 = vector.load %arg4[%c0_3, %c0_4] : memref<1x128xf32, #tpu.memory_space<vmem>>, vector<1x128xf32>
    %4 = vector.broadcast %3 : vector<1x128xf32> to vector<8x128xf32>
    %5 = arith.addf %2, %4 : vector<8x128xf32>
    %c0_5 = arith.constant 0 : index
    %c0_6 = arith.constant 0 : index
    %6 = vector.load %arg5[%c0_5, %c0_6] : memref<8x128xf32, #tpu.memory_space<vmem>>, vector<8x128xf32>
    tpu.vector_store %arg5[%c0_5, %c0_6], %5 {strides = array<i32>} : memref<8x128xf32, #tpu.memory_space<vmem>>, vector<8x128xf32>,
    return
  }
  func.func @transform_0(%arg0: i32, %arg1: i32) -> (i32, i32) {
    %c0_i32 = arith.constant 0 : i32
    %c0_i32_0 = arith.constant 0 : i32
    return %arg0, %c0_i32 : i32, i32
  }
  func.func @transform_1(%arg0: i32, %arg1: i32) -> (i32, i32) {
    %c0_i32 = arith.constant 0 : i32
    %c0_i32_0 = arith.constant 0 : i32
    return %c0_i32, %arg1 : i32, i32
  }
  func.func @transform_2(%arg0: i32, %arg1: i32) -> (i32, i32) {
    %c0_i32 = arith.constant 0 : i32
    %c0_i32_0 = arith.constant 0 : i32
    return %c0_i32, %arg1 : i32, i32
  }
  func.func @transform_3(%arg0: i32, %arg1: i32) -> (i32, i32) {
    %c0_i32 = arith.constant 0 : i32
    return %arg0, %arg1 : i32, i32
  }
}

module attributes {stable_mosaic.version = 11 : i64} {
  func.func @_linear_kernel(%arg0: i32, %arg1: i32, %arg2: memref<8x128xf32, #tpu.memory_space<vmem>>, %arg3: memref<128x512xf32, #tpu.memory_space<vmem>>, %arg4: memref<1x512xf32, #tpu.memory_space<vmem>>, %arg5: memref<8x512xf32, #tpu.memory_space<vmem>>) attributes {dimension_semantics = [#tpu.dimension_semantics<parallel>, #tpu.dimension_semantics<parallel>], iteration_bounds = array<i64: 1, 1>, scalar_prefetch = 0 : i64, scratch_operands = 0 : i64, tpu.core_type = #tpu.core_type<tc>, window_params = [{transform_indices = @transform_0, window_bounds = array<i64: 8, 128>}, {transform_indices = @transform_1, window_bounds = array<i64: 128, 512>}, {transform_indices = @transform_2, window_bounds = array<i64: 1, 512>}, {transform_indices = @transform_3, window_bounds = array<i64: 8, 512>}]} {
    %c0 = arith.constant 0 : index
    %c0_0 = arith.constant 0 : index
    %0 = vector.load %arg2[%c0, %c0_0] : memref<8x128xf32, #tpu.memory_space<vmem>>, vector<8x128xf32>
    %c0_1 = arith.constant 0 : index
    %c0_2 = arith.constant 0 : index
    %1 = vector.load %arg3[%c0_1, %c0_2] : memref<128x512xf32, #tpu.memory_space<vmem>>, vector<128x512xf32>
    %cst = arith.constant dense<0.000000e+00> : vector<8x512xf32>
    %2 = tpu.matmul %0, %1, %cst {dimension_numbers = #tpu.dot_dimension_numbers<[1], [0], [0], [1], [0, 0, 1, 1], [], []>} : vector<8x128xf32>, vector<128x512xf32>, vector<8x512xf32> -> vector<8x512xf32>
    %c0_3 = arith.constant 0 : index
    %c0_4 = arith.constant 0 : index
    %3 = vector.load %arg4[%c0_3, %c0_4] : memref<1x512xf32, #tpu.memory_space<vmem>>, vector<1x512xf32>
    %4 = vector.broadcast %3 : vector<1x512xf32> to vector<8x512xf32>
    %5 = arith.addf %2, %4 : vector<8x512xf32>
    %c0_5 = arith.constant 0 : index
    %c0_6 = arith.constant 0 : index
    %6 = vector.load %arg5[%c0_5, %c0_6] : memref<8x512xf32, #tpu.memory_space<vmem>>, vector<8x512xf32>
    tpu.vector_store %arg5[%c0_5, %c0_6], %5 {strides = array<i32>} : memref<8x512xf32, #tpu.memory_space<vmem>>, vector<8x512xf32>,
    return
  }
  func.func @transform_0(%arg0: i32, %arg1: i32) -> (i32, i32) {
    %c0_i32 = arith.constant 0 : i32
    %c0_i32_0 = arith.constant 0 : i32
    return %arg0, %c0_i32 : i32, i32
  }
  func.func @transform_1(%arg0: i32, %arg1: i32) -> (i32, i32) {
    %c0_i32 = arith.constant 0 : i32
    %c0_i32_0 = arith.constant 0 : i32
    return %c0_i32, %arg1 : i32, i32
  }
  func.func @transform_2(%arg0: i32, %arg1: i32) -> (i32, i32) {
    %c0_i32 = arith.constant 0 : i32
    %c0_i32_0 = arith.constant 0 : i32
    return %c0_i32, %arg1 : i32, i32
  }
  func.func @transform_3(%arg0: i32, %arg1: i32) -> (i32, i32) {
    %c0_i32 = arith.constant 0 : i32
    return %arg0, %arg1 : i32, i32
  }
}

module attributes {stable_mosaic.version = 11 : i64} {
  func.func @_linear_kernel(%arg0: i32, %arg1: i32, %arg2: memref<32x128xf32, #tpu.memory_space<vmem>>, %arg3: memref<128x512xf32, #tpu.memory_space<vmem>>, %arg4: memref<1x512xf32, #tpu.memory_space<vmem>>, %arg5: memref<32x512xf32, #tpu.memory_space<vmem>>) attributes {dimension_semantics = [#tpu.dimension_semantics<parallel>, #tpu.dimension_semantics<parallel>], iteration_bounds = array<i64: 1, 1>, scalar_prefetch = 0 : i64, scratch_operands = 0 : i64, tpu.core_type = #tpu.core_type<tc>, window_params = [{transform_indices = @transform_0, window_bounds = array<i64: 32, 128>}, {transform_indices = @transform_1, window_bounds = array<i64: 128, 512>}, {transform_indices = @transform_2, window_bounds = array<i64: 1, 512>}, {transform_indices = @transform_3, window_bounds = array<i64: 32, 512>}]} {
    %c0 = arith.constant 0 : index
    %c0_0 = arith.constant 0 : index
    %0 = vector.load %arg2[%c0, %c0_0] : memref<32x128xf32, #tpu.memory_space<vmem>>, vector<32x128xf32>
    %c0_1 = arith.constant 0 : index
    %c0_2 = arith.constant 0 : index
    %1 = vector.load %arg3[%c0_1, %c0_2] : memref<128x512xf32, #tpu.memory_space<vmem>>, vector<128x512xf32>
    %cst = arith.constant dense<0.000000e+00> : vector<32x512xf32>
    %2 = tpu.matmul %0, %1, %cst {dimension_numbers = #tpu.dot_dimension_numbers<[1], [0], [0], [1], [0, 0, 1, 1], [], []>} : vector<32x128xf32>, vector<128x512xf32>, vector<32x512xf32> -> vector<32x512xf32>
    %c0_3 = arith.constant 0 : index
    %c0_4 = arith.constant 0 : index
    %3 = vector.load %arg4[%c0_3, %c0_4] : memref<1x512xf32, #tpu.memory_space<vmem>>, vector<1x512xf32>
    %4 = vector.broadcast %3 : vector<1x512xf32> to vector<32x512xf32>
    %5 = arith.addf %2, %4 : vector<32x512xf32>
    %c0_5 = arith.constant 0 : index
    %c0_6 = arith.constant 0 : index
    %6 = vector.load %arg5[%c0_5, %c0_6] : memref<32x512xf32, #tpu.memory_space<vmem>>, vector<32x512xf32>
    tpu.vector_store %arg5[%c0_5, %c0_6], %5 {strides = array<i32>} : memref<32x512xf32, #tpu.memory_space<vmem>>, vector<32x512xf32>,
    return
  }
  func.func @transform_0(%arg0: i32, %arg1: i32) -> (i32, i32) {
    %c0_i32 = arith.constant 0 : i32
    %c0_i32_0 = arith.constant 0 : i32
    return %arg0, %c0_i32 : i32, i32
  }
  func.func @transform_1(%arg0: i32, %arg1: i32) -> (i32, i32) {
    %c0_i32 = arith.constant 0 : i32
    %c0_i32_0 = arith.constant 0 : i32
    return %c0_i32, %arg1 : i32, i32
  }
  func.func @transform_2(%arg0: i32, %arg1: i32) -> (i32, i32) {
    %c0_i32 = arith.constant 0 : i32
    %c0_i32_0 = arith.constant 0 : i32
    return %c0_i32, %arg1 : i32, i32
  }
  func.func @transform_3(%arg0: i32, %arg1: i32) -> (i32, i32) {
    %c0_i32 = arith.constant 0 : i32
    return %arg0, %arg1 : i32, i32
  }
}

module attributes {stable_mosaic.version = 11 : i64} {
  func.func @_lstm_kernel(%arg0: i32, %arg1: i32, %arg2: memref<8x8x512xf32, #tpu.memory_space<vmem>>, %arg3: memref<8x512xf32, #tpu.memory_space<vmem>>, %arg4: memref<128x512xf32, #tpu.memory_space<vmem>>, %arg5: memref<8x8x1xf32, #tpu.memory_space<vmem>>, %arg6: memref<8x8x128xf32, #tpu.memory_space<vmem>>, %arg7: memref<8x128xf32, #tpu.memory_space<vmem>>, %arg8: memref<8x128xf32, #tpu.memory_space<vmem>>) attributes {dimension_semantics = [#tpu.dimension_semantics<parallel>, #tpu.dimension_semantics<arbitrary>], iteration_bounds = array<i64: 1, 1>, scalar_prefetch = 0 : i64, scratch_operands = 2 : i64, tpu.core_type = #tpu.core_type<tc>, window_params = [{transform_indices = @transform_0, window_bounds = array<i64: 8, 8, 512>}, {transform_indices = @transform_1, window_bounds = array<i64: 8, 512>}, {pipeline_mode = #tpu.pipeline_mode<synchronous>, transform_indices = @transform_2, window_bounds = array<i64: 128, 512>}, {transform_indices = @transform_3, window_bounds = array<i64: 8, 8, 1>}, {transform_indices = @transform_4, window_bounds = array<i64: 8, 8, 128>}]} {
    %c0_i32 = arith.constant 0 : i32
    %0 = arith.cmpi eq, %arg1, %c0_i32 : i32
    %1 = arith.extui %0 : i1 to i32
    %c0_i32_0 = arith.constant 0 : i32
    %2 = arith.cmpi ne, %1, %c0_i32_0 : i32
    scf.if %2 {
      %cst_92 = arith.constant 0.000000e+00 : f32
      %329 = vector.broadcast %cst_92 : f32 to vector<8x128xf32>
      %c0_93 = arith.constant 0 : index
      %c0_94 = arith.constant 0 : index
      %330 = vector.load %arg7[%c0_93, %c0_94] : memref<8x128xf32, #tpu.memory_space<vmem>>, vector<8x128xf32>
      tpu.vector_store %arg7[%c0_93, %c0_94], %329 {strides = array<i32>} : memref<8x128xf32, #tpu.memory_space<vmem>>, vector<8x128xf32>,
      %cst_95 = arith.constant 0.000000e+00 : f32
      %331 = vector.broadcast %cst_95 : f32 to vector<8x128xf32>
      %c0_96 = arith.constant 0 : index
      %c0_97 = arith.constant 0 : index
      %332 = vector.load %arg8[%c0_96, %c0_97] : memref<8x128xf32, #tpu.memory_space<vmem>>, vector<8x128xf32>
      tpu.vector_store %arg8[%c0_96, %c0_97], %331 {strides = array<i32>} : memref<8x128xf32, #tpu.memory_space<vmem>>, vector<8x128xf32>,
    } else {
    }
    %c0 = arith.constant 0 : index
    %c0_1 = arith.constant 0 : index
    %3 = vector.load %arg3[%c0, %c0_1] : memref<8x512xf32, #tpu.memory_space<vmem>>, vector<8x512xf32>
    %c0_2 = arith.constant 0 : index
    %c0_3 = arith.constant 0 : index
    %4 = vector.load %arg4[%c0_2, %c0_3] : memref<128x512xf32, #tpu.memory_space<vmem>>, vector<128x512xf32>
    %c0_4 = arith.constant 0 : index
    %c0_5 = arith.constant 0 : index
    %5 = vector.load %arg7[%c0_4, %c0_5] : memref<8x128xf32, #tpu.memory_space<vmem>>, vector<8x128xf32>
    %c0_6 = arith.constant 0 : index
    %c0_7 = arith.constant 0 : index
    %6 = vector.load %arg8[%c0_6, %c0_7] : memref<8x128xf32, #tpu.memory_space<vmem>>, vector<8x128xf32>
    %c0_i32_8 = arith.constant 0 : i32
    %7 = arith.index_cast %c0_i32_8 : i32 to index
    %c0_9 = arith.constant 0 : index
    %c0_10 = arith.constant 0 : index
    %8 = vector.load %arg2[%7, %c0_9, %c0_10] : memref<8x8x512xf32, #tpu.memory_space<vmem>>, vector<1x8x512xf32>
    %9 = vector.shape_cast %8 : vector<1x8x512xf32> to vector<8x512xf32>
    %10 = arith.addf %9, %3 : vector<8x512xf32>
    %cst = arith.constant dense<0.000000e+00> : vector<8x512xf32>
    %11 = tpu.matmul %5, %4, %cst {dimension_numbers = #tpu.dot_dimension_numbers<[1], [0], [0], [1], [0, 0, 1, 1], [], []>} : vector<8x128xf32>, vector<128x512xf32>, vector<8x512xf32> -> vector<8x512xf32>
    %12 = arith.addf %10, %11 : vector<8x512xf32>
    %13 = vector.extract_strided_slice %12 {offsets = [0, 0], sizes = [8, 128], strides = [1, 1]} : vector<8x512xf32> to vector<8x128xf32>
    %14 = arith.negf %13 : vector<8x128xf32>
    %15 = math.exp %14 : vector<8x128xf32>
    %cst_11 = arith.constant 1.000000e+00 : f32
    %16 = vector.broadcast %cst_11 : f32 to vector<8x128xf32>
    %17 = arith.addf %16, %15 : vector<8x128xf32>
    %18 = arith.divf %16, %17 : vector<8x128xf32>
    %19 = vector.extract_strided_slice %12 {offsets = [0, 128], sizes = [8, 128], strides = [1, 1]} : vector<8x512xf32> to vector<8x128xf32>
    %20 = arith.negf %19 : vector<8x128xf32>
    %21 = math.exp %20 : vector<8x128xf32>
    %cst_12 = arith.constant 1.000000e+00 : f32
    %22 = vector.broadcast %cst_12 : f32 to vector<8x128xf32>
    %23 = arith.addf %22, %21 : vector<8x128xf32>
    %24 = arith.divf %22, %23 : vector<8x128xf32>
    %25 = vector.extract_strided_slice %12 {offsets = [0, 256], sizes = [8, 128], strides = [1, 1]} : vector<8x512xf32> to vector<8x128xf32>
    %26 = math.tanh %25 : vector<8x128xf32>
    %27 = vector.extract_strided_slice %12 {offsets = [0, 384], sizes = [8, 128], strides = [1, 1]} : vector<8x512xf32> to vector<8x128xf32>
    %28 = arith.negf %27 : vector<8x128xf32>
    %29 = math.exp %28 : vector<8x128xf32>
    %cst_13 = arith.constant 1.000000e+00 : f32
    %30 = vector.broadcast %cst_13 : f32 to vector<8x128xf32>
    %31 = arith.addf %30, %29 : vector<8x128xf32>
    %32 = arith.divf %30, %31 : vector<8x128xf32>
    %33 = arith.mulf %24, %6 : vector<8x128xf32>
    %34 = arith.mulf %18, %26 : vector<8x128xf32>
    %35 = arith.addf %33, %34 : vector<8x128xf32>
    %36 = math.tanh %35 : vector<8x128xf32>
    %37 = arith.mulf %32, %36 : vector<8x128xf32>
    %38 = arith.index_cast %c0_i32_8 : i32 to index
    %c0_14 = arith.constant 0 : index
    %c0_15 = arith.constant 0 : index
    %39 = vector.load %arg5[%38, %c0_14, %c0_15] : memref<8x8x1xf32, #tpu.memory_space<vmem>>, vector<1x8x1xf32>
    %40 = vector.shape_cast %39 : vector<1x8x1xf32> to vector<8x1xf32>
    %41 = vector.broadcast %40 : vector<8x1xf32> to vector<8x128xf32>
    %42 = arith.mulf %37, %41 : vector<8x128xf32>
    %43 = arith.index_cast %c0_i32_8 : i32 to index
    %c0_16 = arith.constant 0 : index
    %c0_17 = arith.constant 0 : index
    %44 = vector.load %arg6[%43, %c0_16, %c0_17] : memref<8x8x128xf32, #tpu.memory_space<vmem>>, vector<1x8x128xf32>
    %45 = vector.shape_cast %44 : vector<1x8x128xf32> to vector<8x128xf32>
    %46 = vector.shape_cast %42 : vector<8x128xf32> to vector<1x8x128xf32>
    tpu.vector_store %arg6[%43, %c0_16, %c0_17], %46 {strides = array<i32>} : memref<8x8x128xf32, #tpu.memory_space<vmem>>, vector<1x8x128xf32>,
    %c1_i32 = arith.constant 1 : i32
    %47 = arith.index_cast %c1_i32 : i32 to index
    %c0_18 = arith.constant 0 : index
    %c0_19 = arith.constant 0 : index
    %48 = vector.load %arg2[%47, %c0_18, %c0_19] : memref<8x8x512xf32, #tpu.memory_space<vmem>>, vector<1x8x512xf32>
    %49 = vector.shape_cast %48 : vector<1x8x512xf32> to vector<8x512xf32>
    %50 = arith.addf %49, %3 : vector<8x512xf32>
    %cst_20 = arith.constant dense<0.000000e+00> : vector<8x512xf32>
    %51 = tpu.matmul %37, %4, %cst_20 {dimension_numbers = #tpu.dot_dimension_numbers<[1], [0], [0], [1], [0, 0, 1, 1], [], []>} : vector<8x128xf32>, vector<128x512xf32>, vector<8x512xf32> -> vector<8x512xf32>
    %52 = arith.addf %50, %51 : vector<8x512xf32>
    %53 = vector.extract_strided_slice %52 {offsets = [0, 0], sizes = [8, 128], strides = [1, 1]} : vector<8x512xf32> to vector<8x128xf32>
    %54 = arith.negf %53 : vector<8x128xf32>
    %55 = math.exp %54 : vector<8x128xf32>
    %cst_21 = arith.constant 1.000000e+00 : f32
    %56 = vector.broadcast %cst_21 : f32 to vector<8x128xf32>
    %57 = arith.addf %56, %55 : vector<8x128xf32>
    %58 = arith.divf %56, %57 : vector<8x128xf32>
    %59 = vector.extract_strided_slice %52 {offsets = [0, 128], sizes = [8, 128], strides = [1, 1]} : vector<8x512xf32> to vector<8x128xf32>
    %60 = arith.negf %59 : vector<8x128xf32>
    %61 = math.exp %60 : vector<8x128xf32>
    %cst_22 = arith.constant 1.000000e+00 : f32
    %62 = vector.broadcast %cst_22 : f32 to vector<8x128xf32>
    %63 = arith.addf %62, %61 : vector<8x128xf32>
    %64 = arith.divf %62, %63 : vector<8x128xf32>
    %65 = vector.extract_strided_slice %52 {offsets = [0, 256], sizes = [8, 128], strides = [1, 1]} : vector<8x512xf32> to vector<8x128xf32>
    %66 = math.tanh %65 : vector<8x128xf32>
    %67 = vector.extract_strided_slice %52 {offsets = [0, 384], sizes = [8, 128], strides = [1, 1]} : vector<8x512xf32> to vector<8x128xf32>
    %68 = arith.negf %67 : vector<8x128xf32>
    %69 = math.exp %68 : vector<8x128xf32>
    %cst_23 = arith.constant 1.000000e+00 : f32
    %70 = vector.broadcast %cst_23 : f32 to vector<8x128xf32>
    %71 = arith.addf %70, %69 : vector<8x128xf32>
    %72 = arith.divf %70, %71 : vector<8x128xf32>
    %73 = arith.mulf %64, %35 : vector<8x128xf32>
    %74 = arith.mulf %58, %66 : vector<8x128xf32>
    %75 = arith.addf %73, %74 : vector<8x128xf32>
    %76 = math.tanh %75 : vector<8x128xf32>
    %77 = arith.mulf %72, %76 : vector<8x128xf32>
    %78 = arith.index_cast %c1_i32 : i32 to index
    %c0_24 = arith.constant 0 : index
    %c0_25 = arith.constant 0 : index
    %79 = vector.load %arg5[%78, %c0_24, %c0_25] : memref<8x8x1xf32, #tpu.memory_space<vmem>>, vector<1x8x1xf32>
    %80 = vector.shape_cast %79 : vector<1x8x1xf32> to vector<8x1xf32>
    %81 = vector.broadcast %80 : vector<8x1xf32> to vector<8x128xf32>
    %82 = arith.mulf %77, %81 : vector<8x128xf32>
    %83 = arith.index_cast %c1_i32 : i32 to index
    %c0_26 = arith.constant 0 : index
    %c0_27 = arith.constant 0 : index
    %84 = vector.load %arg6[%83, %c0_26, %c0_27] : memref<8x8x128xf32, #tpu.memory_space<vmem>>, vector<1x8x128xf32>
    %85 = vector.shape_cast %84 : vector<1x8x128xf32> to vector<8x128xf32>
    %86 = vector.shape_cast %82 : vector<8x128xf32> to vector<1x8x128xf32>
    tpu.vector_store %arg6[%83, %c0_26, %c0_27], %86 {strides = array<i32>} : memref<8x8x128xf32, #tpu.memory_space<vmem>>, vector<1x8x128xf32>,
    %c2_i32 = arith.constant 2 : i32
    %87 = arith.index_cast %c2_i32 : i32 to index
    %c0_28 = arith.constant 0 : index
    %c0_29 = arith.constant 0 : index
    %88 = vector.load %arg2[%87, %c0_28, %c0_29] : memref<8x8x512xf32, #tpu.memory_space<vmem>>, vector<1x8x512xf32>
    %89 = vector.shape_cast %88 : vector<1x8x512xf32> to vector<8x512xf32>
    %90 = arith.addf %89, %3 : vector<8x512xf32>
    %cst_30 = arith.constant dense<0.000000e+00> : vector<8x512xf32>
    %91 = tpu.matmul %77, %4, %cst_30 {dimension_numbers = #tpu.dot_dimension_numbers<[1], [0], [0], [1], [0, 0, 1, 1], [], []>} : vector<8x128xf32>, vector<128x512xf32>, vector<8x512xf32> -> vector<8x512xf32>
    %92 = arith.addf %90, %91 : vector<8x512xf32>
    %93 = vector.extract_strided_slice %92 {offsets = [0, 0], sizes = [8, 128], strides = [1, 1]} : vector<8x512xf32> to vector<8x128xf32>
    %94 = arith.negf %93 : vector<8x128xf32>
    %95 = math.exp %94 : vector<8x128xf32>
    %cst_31 = arith.constant 1.000000e+00 : f32
    %96 = vector.broadcast %cst_31 : f32 to vector<8x128xf32>
    %97 = arith.addf %96, %95 : vector<8x128xf32>
    %98 = arith.divf %96, %97 : vector<8x128xf32>
    %99 = vector.extract_strided_slice %92 {offsets = [0, 128], sizes = [8, 128], strides = [1, 1]} : vector<8x512xf32> to vector<8x128xf32>
    %100 = arith.negf %99 : vector<8x128xf32>
    %101 = math.exp %100 : vector<8x128xf32>
    %cst_32 = arith.constant 1.000000e+00 : f32
    %102 = vector.broadcast %cst_32 : f32 to vector<8x128xf32>
    %103 = arith.addf %102, %101 : vector<8x128xf32>
    %104 = arith.divf %102, %103 : vector<8x128xf32>
    %105 = vector.extract_strided_slice %92 {offsets = [0, 256], sizes = [8, 128], strides = [1, 1]} : vector<8x512xf32> to vector<8x128xf32>
    %106 = math.tanh %105 : vector<8x128xf32>
    %107 = vector.extract_strided_slice %92 {offsets = [0, 384], sizes = [8, 128], strides = [1, 1]} : vector<8x512xf32> to vector<8x128xf32>
    %108 = arith.negf %107 : vector<8x128xf32>
    %109 = math.exp %108 : vector<8x128xf32>
    %cst_33 = arith.constant 1.000000e+00 : f32
    %110 = vector.broadcast %cst_33 : f32 to vector<8x128xf32>
    %111 = arith.addf %110, %109 : vector<8x128xf32>
    %112 = arith.divf %110, %111 : vector<8x128xf32>
    %113 = arith.mulf %104, %75 : vector<8x128xf32>
    %114 = arith.mulf %98, %106 : vector<8x128xf32>
    %115 = arith.addf %113, %114 : vector<8x128xf32>
    %116 = math.tanh %115 : vector<8x128xf32>
    %117 = arith.mulf %112, %116 : vector<8x128xf32>
    %118 = arith.index_cast %c2_i32 : i32 to index
    %c0_34 = arith.constant 0 : index
    %c0_35 = arith.constant 0 : index
    %119 = vector.load %arg5[%118, %c0_34, %c0_35] : memref<8x8x1xf32, #tpu.memory_space<vmem>>, vector<1x8x1xf32>
    %120 = vector.shape_cast %119 : vector<1x8x1xf32> to vector<8x1xf32>
    %121 = vector.broadcast %120 : vector<8x1xf32> to vector<8x128xf32>
    %122 = arith.mulf %117, %121 : vector<8x128xf32>
    %123 = arith.index_cast %c2_i32 : i32 to index
    %c0_36 = arith.constant 0 : index
    %c0_37 = arith.constant 0 : index
    %124 = vector.load %arg6[%123, %c0_36, %c0_37] : memref<8x8x128xf32, #tpu.memory_space<vmem>>, vector<1x8x128xf32>
    %125 = vector.shape_cast %124 : vector<1x8x128xf32> to vector<8x128xf32>
    %126 = vector.shape_cast %122 : vector<8x128xf32> to vector<1x8x128xf32>
    tpu.vector_store %arg6[%123, %c0_36, %c0_37], %126 {strides = array<i32>} : memref<8x8x128xf32, #tpu.memory_space<vmem>>, vector<1x8x128xf32>,
    %c3_i32 = arith.constant 3 : i32
    %127 = arith.index_cast %c3_i32 : i32 to index
    %c0_38 = arith.constant 0 : index
    %c0_39 = arith.constant 0 : index
    %128 = vector.load %arg2[%127, %c0_38, %c0_39] : memref<8x8x512xf32, #tpu.memory_space<vmem>>, vector<1x8x512xf32>
    %129 = vector.shape_cast %128 : vector<1x8x512xf32> to vector<8x512xf32>
    %130 = arith.addf %129, %3 : vector<8x512xf32>
    %cst_40 = arith.constant dense<0.000000e+00> : vector<8x512xf32>
    %131 = tpu.matmul %117, %4, %cst_40 {dimension_numbers = #tpu.dot_dimension_numbers<[1], [0], [0], [1], [0, 0, 1, 1], [], []>} : vector<8x128xf32>, vector<128x512xf32>, vector<8x512xf32> -> vector<8x512xf32>
    %132 = arith.addf %130, %131 : vector<8x512xf32>
    %133 = vector.extract_strided_slice %132 {offsets = [0, 0], sizes = [8, 128], strides = [1, 1]} : vector<8x512xf32> to vector<8x128xf32>
    %134 = arith.negf %133 : vector<8x128xf32>
    %135 = math.exp %134 : vector<8x128xf32>
    %cst_41 = arith.constant 1.000000e+00 : f32
    %136 = vector.broadcast %cst_41 : f32 to vector<8x128xf32>
    %137 = arith.addf %136, %135 : vector<8x128xf32>
    %138 = arith.divf %136, %137 : vector<8x128xf32>
    %139 = vector.extract_strided_slice %132 {offsets = [0, 128], sizes = [8, 128], strides = [1, 1]} : vector<8x512xf32> to vector<8x128xf32>
    %140 = arith.negf %139 : vector<8x128xf32>
    %141 = math.exp %140 : vector<8x128xf32>
    %cst_42 = arith.constant 1.000000e+00 : f32
    %142 = vector.broadcast %cst_42 : f32 to vector<8x128xf32>
    %143 = arith.addf %142, %141 : vector<8x128xf32>
    %144 = arith.divf %142, %143 : vector<8x128xf32>
    %145 = vector.extract_strided_slice %132 {offsets = [0, 256], sizes = [8, 128], strides = [1, 1]} : vector<8x512xf32> to vector<8x128xf32>
    %146 = math.tanh %145 : vector<8x128xf32>
    %147 = vector.extract_strided_slice %132 {offsets = [0, 384], sizes = [8, 128], strides = [1, 1]} : vector<8x512xf32> to vector<8x128xf32>
    %148 = arith.negf %147 : vector<8x128xf32>
    %149 = math.exp %148 : vector<8x128xf32>
    %cst_43 = arith.constant 1.000000e+00 : f32
    %150 = vector.broadcast %cst_43 : f32 to vector<8x128xf32>
    %151 = arith.addf %150, %149 : vector<8x128xf32>
    %152 = arith.divf %150, %151 : vector<8x128xf32>
    %153 = arith.mulf %144, %115 : vector<8x128xf32>
    %154 = arith.mulf %138, %146 : vector<8x128xf32>
    %155 = arith.addf %153, %154 : vector<8x128xf32>
    %156 = math.tanh %155 : vector<8x128xf32>
    %157 = arith.mulf %152, %156 : vector<8x128xf32>
    %158 = arith.index_cast %c3_i32 : i32 to index
    %c0_44 = arith.constant 0 : index
    %c0_45 = arith.constant 0 : index
    %159 = vector.load %arg5[%158, %c0_44, %c0_45] : memref<8x8x1xf32, #tpu.memory_space<vmem>>, vector<1x8x1xf32>
    %160 = vector.shape_cast %159 : vector<1x8x1xf32> to vector<8x1xf32>
    %161 = vector.broadcast %160 : vector<8x1xf32> to vector<8x128xf32>
    %162 = arith.mulf %157, %161 : vector<8x128xf32>
    %163 = arith.index_cast %c3_i32 : i32 to index
    %c0_46 = arith.constant 0 : index
    %c0_47 = arith.constant 0 : index
    %164 = vector.load %arg6[%163, %c0_46, %c0_47] : memref<8x8x128xf32, #tpu.memory_space<vmem>>, vector<1x8x128xf32>
    %165 = vector.shape_cast %164 : vector<1x8x128xf32> to vector<8x128xf32>
    %166 = vector.shape_cast %162 : vector<8x128xf32> to vector<1x8x128xf32>
    tpu.vector_store %arg6[%163, %c0_46, %c0_47], %166 {strides = array<i32>} : memref<8x8x128xf32, #tpu.memory_space<vmem>>, vector<1x8x128xf32>,
    %c4_i32 = arith.constant 4 : i32
    %167 = arith.index_cast %c4_i32 : i32 to index
    %c0_48 = arith.constant 0 : index
    %c0_49 = arith.constant 0 : index
    %168 = vector.load %arg2[%167, %c0_48, %c0_49] : memref<8x8x512xf32, #tpu.memory_space<vmem>>, vector<1x8x512xf32>
    %169 = vector.shape_cast %168 : vector<1x8x512xf32> to vector<8x512xf32>
    %170 = arith.addf %169, %3 : vector<8x512xf32>
    %cst_50 = arith.constant dense<0.000000e+00> : vector<8x512xf32>
    %171 = tpu.matmul %157, %4, %cst_50 {dimension_numbers = #tpu.dot_dimension_numbers<[1], [0], [0], [1], [0, 0, 1, 1], [], []>} : vector<8x128xf32>, vector<128x512xf32>, vector<8x512xf32> -> vector<8x512xf32>
    %172 = arith.addf %170, %171 : vector<8x512xf32>
    %173 = vector.extract_strided_slice %172 {offsets = [0, 0], sizes = [8, 128], strides = [1, 1]} : vector<8x512xf32> to vector<8x128xf32>
    %174 = arith.negf %173 : vector<8x128xf32>
    %175 = math.exp %174 : vector<8x128xf32>
    %cst_51 = arith.constant 1.000000e+00 : f32
    %176 = vector.broadcast %cst_51 : f32 to vector<8x128xf32>
    %177 = arith.addf %176, %175 : vector<8x128xf32>
    %178 = arith.divf %176, %177 : vector<8x128xf32>
    %179 = vector.extract_strided_slice %172 {offsets = [0, 128], sizes = [8, 128], strides = [1, 1]} : vector<8x512xf32> to vector<8x128xf32>
    %180 = arith.negf %179 : vector<8x128xf32>
    %181 = math.exp %180 : vector<8x128xf32>
    %cst_52 = arith.constant 1.000000e+00 : f32
    %182 = vector.broadcast %cst_52 : f32 to vector<8x128xf32>
    %183 = arith.addf %182, %181 : vector<8x128xf32>
    %184 = arith.divf %182, %183 : vector<8x128xf32>
    %185 = vector.extract_strided_slice %172 {offsets = [0, 256], sizes = [8, 128], strides = [1, 1]} : vector<8x512xf32> to vector<8x128xf32>
    %186 = math.tanh %185 : vector<8x128xf32>
    %187 = vector.extract_strided_slice %172 {offsets = [0, 384], sizes = [8, 128], strides = [1, 1]} : vector<8x512xf32> to vector<8x128xf32>
    %188 = arith.negf %187 : vector<8x128xf32>
    %189 = math.exp %188 : vector<8x128xf32>
    %cst_53 = arith.constant 1.000000e+00 : f32
    %190 = vector.broadcast %cst_53 : f32 to vector<8x128xf32>
    %191 = arith.addf %190, %189 : vector<8x128xf32>
    %192 = arith.divf %190, %191 : vector<8x128xf32>
    %193 = arith.mulf %184, %155 : vector<8x128xf32>
    %194 = arith.mulf %178, %186 : vector<8x128xf32>
    %195 = arith.addf %193, %194 : vector<8x128xf32>
    %196 = math.tanh %195 : vector<8x128xf32>
    %197 = arith.mulf %192, %196 : vector<8x128xf32>
    %198 = arith.index_cast %c4_i32 : i32 to index
    %c0_54 = arith.constant 0 : index
    %c0_55 = arith.constant 0 : index
    %199 = vector.load %arg5[%198, %c0_54, %c0_55] : memref<8x8x1xf32, #tpu.memory_space<vmem>>, vector<1x8x1xf32>
    %200 = vector.shape_cast %199 : vector<1x8x1xf32> to vector<8x1xf32>
    %201 = vector.broadcast %200 : vector<8x1xf32> to vector<8x128xf32>
    %202 = arith.mulf %197, %201 : vector<8x128xf32>
    %203 = arith.index_cast %c4_i32 : i32 to index
    %c0_56 = arith.constant 0 : index
    %c0_57 = arith.constant 0 : index
    %204 = vector.load %arg6[%203, %c0_56, %c0_57] : memref<8x8x128xf32, #tpu.memory_space<vmem>>, vector<1x8x128xf32>
    %205 = vector.shape_cast %204 : vector<1x8x128xf32> to vector<8x128xf32>
    %206 = vector.shape_cast %202 : vector<8x128xf32> to vector<1x8x128xf32>
    tpu.vector_store %arg6[%203, %c0_56, %c0_57], %206 {strides = array<i32>} : memref<8x8x128xf32, #tpu.memory_space<vmem>>, vector<1x8x128xf32>,
    %c5_i32 = arith.constant 5 : i32
    %207 = arith.index_cast %c5_i32 : i32 to index
    %c0_58 = arith.constant 0 : index
    %c0_59 = arith.constant 0 : index
    %208 = vector.load %arg2[%207, %c0_58, %c0_59] : memref<8x8x512xf32, #tpu.memory_space<vmem>>, vector<1x8x512xf32>
    %209 = vector.shape_cast %208 : vector<1x8x512xf32> to vector<8x512xf32>
    %210 = arith.addf %209, %3 : vector<8x512xf32>
    %cst_60 = arith.constant dense<0.000000e+00> : vector<8x512xf32>
    %211 = tpu.matmul %197, %4, %cst_60 {dimension_numbers = #tpu.dot_dimension_numbers<[1], [0], [0], [1], [0, 0, 1, 1], [], []>} : vector<8x128xf32>, vector<128x512xf32>, vector<8x512xf32> -> vector<8x512xf32>
    %212 = arith.addf %210, %211 : vector<8x512xf32>
    %213 = vector.extract_strided_slice %212 {offsets = [0, 0], sizes = [8, 128], strides = [1, 1]} : vector<8x512xf32> to vector<8x128xf32>
    %214 = arith.negf %213 : vector<8x128xf32>
    %215 = math.exp %214 : vector<8x128xf32>
    %cst_61 = arith.constant 1.000000e+00 : f32
    %216 = vector.broadcast %cst_61 : f32 to vector<8x128xf32>
    %217 = arith.addf %216, %215 : vector<8x128xf32>
    %218 = arith.divf %216, %217 : vector<8x128xf32>
    %219 = vector.extract_strided_slice %212 {offsets = [0, 128], sizes = [8, 128], strides = [1, 1]} : vector<8x512xf32> to vector<8x128xf32>
    %220 = arith.negf %219 : vector<8x128xf32>
    %221 = math.exp %220 : vector<8x128xf32>
    %cst_62 = arith.constant 1.000000e+00 : f32
    %222 = vector.broadcast %cst_62 : f32 to vector<8x128xf32>
    %223 = arith.addf %222, %221 : vector<8x128xf32>
    %224 = arith.divf %222, %223 : vector<8x128xf32>
    %225 = vector.extract_strided_slice %212 {offsets = [0, 256], sizes = [8, 128], strides = [1, 1]} : vector<8x512xf32> to vector<8x128xf32>
    %226 = math.tanh %225 : vector<8x128xf32>
    %227 = vector.extract_strided_slice %212 {offsets = [0, 384], sizes = [8, 128], strides = [1, 1]} : vector<8x512xf32> to vector<8x128xf32>
    %228 = arith.negf %227 : vector<8x128xf32>
    %229 = math.exp %228 : vector<8x128xf32>
    %cst_63 = arith.constant 1.000000e+00 : f32
    %230 = vector.broadcast %cst_63 : f32 to vector<8x128xf32>
    %231 = arith.addf %230, %229 : vector<8x128xf32>
    %232 = arith.divf %230, %231 : vector<8x128xf32>
    %233 = arith.mulf %224, %195 : vector<8x128xf32>
    %234 = arith.mulf %218, %226 : vector<8x128xf32>
    %235 = arith.addf %233, %234 : vector<8x128xf32>
    %236 = math.tanh %235 : vector<8x128xf32>
    %237 = arith.mulf %232, %236 : vector<8x128xf32>
    %238 = arith.index_cast %c5_i32 : i32 to index
    %c0_64 = arith.constant 0 : index
    %c0_65 = arith.constant 0 : index
    %239 = vector.load %arg5[%238, %c0_64, %c0_65] : memref<8x8x1xf32, #tpu.memory_space<vmem>>, vector<1x8x1xf32>
    %240 = vector.shape_cast %239 : vector<1x8x1xf32> to vector<8x1xf32>
    %241 = vector.broadcast %240 : vector<8x1xf32> to vector<8x128xf32>
    %242 = arith.mulf %237, %241 : vector<8x128xf32>
    %243 = arith.index_cast %c5_i32 : i32 to index
    %c0_66 = arith.constant 0 : index
    %c0_67 = arith.constant 0 : index
    %244 = vector.load %arg6[%243, %c0_66, %c0_67] : memref<8x8x128xf32, #tpu.memory_space<vmem>>, vector<1x8x128xf32>
    %245 = vector.shape_cast %244 : vector<1x8x128xf32> to vector<8x128xf32>
    %246 = vector.shape_cast %242 : vector<8x128xf32> to vector<1x8x128xf32>
    tpu.vector_store %arg6[%243, %c0_66, %c0_67], %246 {strides = array<i32>} : memref<8x8x128xf32, #tpu.memory_space<vmem>>, vector<1x8x128xf32>,
    %c6_i32 = arith.constant 6 : i32
    %247 = arith.index_cast %c6_i32 : i32 to index
    %c0_68 = arith.constant 0 : index
    %c0_69 = arith.constant 0 : index
    %248 = vector.load %arg2[%247, %c0_68, %c0_69] : memref<8x8x512xf32, #tpu.memory_space<vmem>>, vector<1x8x512xf32>
    %249 = vector.shape_cast %248 : vector<1x8x512xf32> to vector<8x512xf32>
    %250 = arith.addf %249, %3 : vector<8x512xf32>
    %cst_70 = arith.constant dense<0.000000e+00> : vector<8x512xf32>
    %251 = tpu.matmul %237, %4, %cst_70 {dimension_numbers = #tpu.dot_dimension_numbers<[1], [0], [0], [1], [0, 0, 1, 1], [], []>} : vector<8x128xf32>, vector<128x512xf32>, vector<8x512xf32> -> vector<8x512xf32>
    %252 = arith.addf %250, %251 : vector<8x512xf32>
    %253 = vector.extract_strided_slice %252 {offsets = [0, 0], sizes = [8, 128], strides = [1, 1]} : vector<8x512xf32> to vector<8x128xf32>
    %254 = arith.negf %253 : vector<8x128xf32>
    %255 = math.exp %254 : vector<8x128xf32>
    %cst_71 = arith.constant 1.000000e+00 : f32
    %256 = vector.broadcast %cst_71 : f32 to vector<8x128xf32>
    %257 = arith.addf %256, %255 : vector<8x128xf32>
    %258 = arith.divf %256, %257 : vector<8x128xf32>
    %259 = vector.extract_strided_slice %252 {offsets = [0, 128], sizes = [8, 128], strides = [1, 1]} : vector<8x512xf32> to vector<8x128xf32>
    %260 = arith.negf %259 : vector<8x128xf32>
    %261 = math.exp %260 : vector<8x128xf32>
    %cst_72 = arith.constant 1.000000e+00 : f32
    %262 = vector.broadcast %cst_72 : f32 to vector<8x128xf32>
    %263 = arith.addf %262, %261 : vector<8x128xf32>
    %264 = arith.divf %262, %263 : vector<8x128xf32>
    %265 = vector.extract_strided_slice %252 {offsets = [0, 256], sizes = [8, 128], strides = [1, 1]} : vector<8x512xf32> to vector<8x128xf32>
    %266 = math.tanh %265 : vector<8x128xf32>
    %267 = vector.extract_strided_slice %252 {offsets = [0, 384], sizes = [8, 128], strides = [1, 1]} : vector<8x512xf32> to vector<8x128xf32>
    %268 = arith.negf %267 : vector<8x128xf32>
    %269 = math.exp %268 : vector<8x128xf32>
    %cst_73 = arith.constant 1.000000e+00 : f32
    %270 = vector.broadcast %cst_73 : f32 to vector<8x128xf32>
    %271 = arith.addf %270, %269 : vector<8x128xf32>
    %272 = arith.divf %270, %271 : vector<8x128xf32>
    %273 = arith.mulf %264, %235 : vector<8x128xf32>
    %274 = arith.mulf %258, %266 : vector<8x128xf32>
    %275 = arith.addf %273, %274 : vector<8x128xf32>
    %276 = math.tanh %275 : vector<8x128xf32>
    %277 = arith.mulf %272, %276 : vector<8x128xf32>
    %278 = arith.index_cast %c6_i32 : i32 to index
    %c0_74 = arith.constant 0 : index
    %c0_75 = arith.constant 0 : index
    %279 = vector.load %arg5[%278, %c0_74, %c0_75] : memref<8x8x1xf32, #tpu.memory_space<vmem>>, vector<1x8x1xf32>
    %280 = vector.shape_cast %279 : vector<1x8x1xf32> to vector<8x1xf32>
    %281 = vector.broadcast %280 : vector<8x1xf32> to vector<8x128xf32>
    %282 = arith.mulf %277, %281 : vector<8x128xf32>
    %283 = arith.index_cast %c6_i32 : i32 to index
    %c0_76 = arith.constant 0 : index
    %c0_77 = arith.constant 0 : index
    %284 = vector.load %arg6[%283, %c0_76, %c0_77] : memref<8x8x128xf32, #tpu.memory_space<vmem>>, vector<1x8x128xf32>
    %285 = vector.shape_cast %284 : vector<1x8x128xf32> to vector<8x128xf32>
    %286 = vector.shape_cast %282 : vector<8x128xf32> to vector<1x8x128xf32>
    tpu.vector_store %arg6[%283, %c0_76, %c0_77], %286 {strides = array<i32>} : memref<8x8x128xf32, #tpu.memory_space<vmem>>, vector<1x8x128xf32>,
    %c7_i32 = arith.constant 7 : i32
    %287 = arith.index_cast %c7_i32 : i32 to index
    %c0_78 = arith.constant 0 : index
    %c0_79 = arith.constant 0 : index
    %288 = vector.load %arg2[%287, %c0_78, %c0_79] : memref<8x8x512xf32, #tpu.memory_space<vmem>>, vector<1x8x512xf32>
    %289 = vector.shape_cast %288 : vector<1x8x512xf32> to vector<8x512xf32>
    %290 = arith.addf %289, %3 : vector<8x512xf32>
    %cst_80 = arith.constant dense<0.000000e+00> : vector<8x512xf32>
    %291 = tpu.matmul %277, %4, %cst_80 {dimension_numbers = #tpu.dot_dimension_numbers<[1], [0], [0], [1], [0, 0, 1, 1], [], []>} : vector<8x128xf32>, vector<128x512xf32>, vector<8x512xf32> -> vector<8x512xf32>
    %292 = arith.addf %290, %291 : vector<8x512xf32>
    %293 = vector.extract_strided_slice %292 {offsets = [0, 0], sizes = [8, 128], strides = [1, 1]} : vector<8x512xf32> to vector<8x128xf32>
    %294 = arith.negf %293 : vector<8x128xf32>
    %295 = math.exp %294 : vector<8x128xf32>
    %cst_81 = arith.constant 1.000000e+00 : f32
    %296 = vector.broadcast %cst_81 : f32 to vector<8x128xf32>
    %297 = arith.addf %296, %295 : vector<8x128xf32>
    %298 = arith.divf %296, %297 : vector<8x128xf32>
    %299 = vector.extract_strided_slice %292 {offsets = [0, 128], sizes = [8, 128], strides = [1, 1]} : vector<8x512xf32> to vector<8x128xf32>
    %300 = arith.negf %299 : vector<8x128xf32>
    %301 = math.exp %300 : vector<8x128xf32>
    %cst_82 = arith.constant 1.000000e+00 : f32
    %302 = vector.broadcast %cst_82 : f32 to vector<8x128xf32>
    %303 = arith.addf %302, %301 : vector<8x128xf32>
    %304 = arith.divf %302, %303 : vector<8x128xf32>
    %305 = vector.extract_strided_slice %292 {offsets = [0, 256], sizes = [8, 128], strides = [1, 1]} : vector<8x512xf32> to vector<8x128xf32>
    %306 = math.tanh %305 : vector<8x128xf32>
    %307 = vector.extract_strided_slice %292 {offsets = [0, 384], sizes = [8, 128], strides = [1, 1]} : vector<8x512xf32> to vector<8x128xf32>
    %308 = arith.negf %307 : vector<8x128xf32>
    %309 = math.exp %308 : vector<8x128xf32>
    %cst_83 = arith.constant 1.000000e+00 : f32
    %310 = vector.broadcast %cst_83 : f32 to vector<8x128xf32>
    %311 = arith.addf %310, %309 : vector<8x128xf32>
    %312 = arith.divf %310, %311 : vector<8x128xf32>
    %313 = arith.mulf %304, %275 : vector<8x128xf32>
    %314 = arith.mulf %298, %306 : vector<8x128xf32>
    %315 = arith.addf %313, %314 : vector<8x128xf32>
    %316 = math.tanh %315 : vector<8x128xf32>
    %317 = arith.mulf %312, %316 : vector<8x128xf32>
    %318 = arith.index_cast %c7_i32 : i32 to index
    %c0_84 = arith.constant 0 : index
    %c0_85 = arith.constant 0 : index
    %319 = vector.load %arg5[%318, %c0_84, %c0_85] : memref<8x8x1xf32, #tpu.memory_space<vmem>>, vector<1x8x1xf32>
    %320 = vector.shape_cast %319 : vector<1x8x1xf32> to vector<8x1xf32>
    %321 = vector.broadcast %320 : vector<8x1xf32> to vector<8x128xf32>
    %322 = arith.mulf %317, %321 : vector<8x128xf32>
    %323 = arith.index_cast %c7_i32 : i32 to index
    %c0_86 = arith.constant 0 : index
    %c0_87 = arith.constant 0 : index
    %324 = vector.load %arg6[%323, %c0_86, %c0_87] : memref<8x8x128xf32, #tpu.memory_space<vmem>>, vector<1x8x128xf32>
    %325 = vector.shape_cast %324 : vector<1x8x128xf32> to vector<8x128xf32>
    %326 = vector.shape_cast %322 : vector<8x128xf32> to vector<1x8x128xf32>
    tpu.vector_store %arg6[%323, %c0_86, %c0_87], %326 {strides = array<i32>} : memref<8x8x128xf32, #tpu.memory_space<vmem>>, vector<1x8x128xf32>,
    %c8_i32 = arith.constant 8 : i32
    %c0_88 = arith.constant 0 : index
    %c0_89 = arith.constant 0 : index
    %327 = vector.load %arg7[%c0_88, %c0_89] : memref<8x128xf32, #tpu.memory_space<vmem>>, vector<8x128xf32>
    tpu.vector_store %arg7[%c0_88, %c0_89], %317 {strides = array<i32>} : memref<8x128xf32, #tpu.memory_space<vmem>>, vector<8x128xf32>,
    %c0_90 = arith.constant 0 : index
    %c0_91 = arith.constant 0 : index
    %328 = vector.load %arg8[%c0_90, %c0_91] : memref<8x128xf32, #tpu.memory_space<vmem>>, vector<8x128xf32>
    tpu.vector_store %arg8[%c0_90, %c0_91], %315 {strides = array<i32>} : memref<8x128xf32, #tpu.memory_space<vmem>>, vector<8x128xf32>,
    return
  }
  func.func @transform_0(%arg0: i32, %arg1: i32) -> (i32, i32, i32) {
    %c0_i32 = arith.constant 0 : i32
    %c0_i32_0 = arith.constant 0 : i32
    return %arg1, %arg0, %c0_i32 : i32, i32, i32
  }
  func.func @transform_1(%arg0: i32, %arg1: i32) -> (i32, i32) {
    %c0_i32 = arith.constant 0 : i32
    %c0_i32_0 = arith.constant 0 : i32
    return %arg0, %c0_i32 : i32, i32
  }
  func.func @transform_2(%arg0: i32, %arg1: i32) -> (i32, i32) {
    %c0_i32 = arith.constant 0 : i32
    %c0_i32_0 = arith.constant 0 : i32
    %c0_i32_1 = arith.constant 0 : i32
    return %c0_i32, %c0_i32_0 : i32, i32
  }
  func.func @transform_3(%arg0: i32, %arg1: i32) -> (i32, i32, i32) {
    %c0_i32 = arith.constant 0 : i32
    %c0_i32_0 = arith.constant 0 : i32
    return %arg1, %arg0, %c0_i32 : i32, i32, i32
  }
  func.func @transform_4(%arg0: i32, %arg1: i32) -> (i32, i32, i32) {
    %c0_i32 = arith.constant 0 : i32
    %c0_i32_0 = arith.constant 0 : i32
    return %arg1, %arg0, %c0_i32 : i32, i32, i32
  }
}

module attributes {stable_mosaic.version = 11 : i64} {
  func.func @_linear_kernel(%arg0: i32, %arg1: i32, %arg2: memref<32x128xf32, #tpu.memory_space<vmem>>, %arg3: memref<128x128xf32, #tpu.memory_space<vmem>>, %arg4: memref<1x128xf32, #tpu.memory_space<vmem>>, %arg5: memref<32x128xf32, #tpu.memory_space<vmem>>) attributes {dimension_semantics = [#tpu.dimension_semantics<parallel>, #tpu.dimension_semantics<parallel>], iteration_bounds = array<i64: 1, 1>, scalar_prefetch = 0 : i64, scratch_operands = 0 : i64, tpu.core_type = #tpu.core_type<tc>, window_params = [{transform_indices = @transform_0, window_bounds = array<i64: 32, 128>}, {transform_indices = @transform_1, window_bounds = array<i64: 128, 128>}, {transform_indices = @transform_2, window_bounds = array<i64: 1, 128>}, {transform_indices = @transform_3, window_bounds = array<i64: 32, 128>}]} {
    %c0 = arith.constant 0 : index
    %c0_0 = arith.constant 0 : index
    %0 = vector.load %arg2[%c0, %c0_0] : memref<32x128xf32, #tpu.memory_space<vmem>>, vector<32x128xf32>
    %c0_1 = arith.constant 0 : index
    %c0_2 = arith.constant 0 : index
    %1 = vector.load %arg3[%c0_1, %c0_2] : memref<128x128xf32, #tpu.memory_space<vmem>>, vector<128x128xf32>
    %cst = arith.constant dense<0.000000e+00> : vector<32x128xf32>
    %2 = tpu.matmul %0, %1, %cst {dimension_numbers = #tpu.dot_dimension_numbers<[1], [0], [0], [1], [0, 0, 1, 1], [], []>} : vector<32x128xf32>, vector<128x128xf32>, vector<32x128xf32> -> vector<32x128xf32>
    %c0_3 = arith.constant 0 : index
    %c0_4 = arith.constant 0 : index
    %3 = vector.load %arg4[%c0_3, %c0_4] : memref<1x128xf32, #tpu.memory_space<vmem>>, vector<1x128xf32>
    %4 = vector.broadcast %3 : vector<1x128xf32> to vector<32x128xf32>
    %5 = arith.addf %2, %4 : vector<32x128xf32>
    %c0_5 = arith.constant 0 : index
    %c0_6 = arith.constant 0 : index
    %6 = vector.load %arg5[%c0_5, %c0_6] : memref<32x128xf32, #tpu.memory_space<vmem>>, vector<32x128xf32>
    tpu.vector_store %arg5[%c0_5, %c0_6], %5 {strides = array<i32>} : memref<32x128xf32, #tpu.memory_space<vmem>>, vector<32x128xf32>,
    return
  }
  func.func @transform_0(%arg0: i32, %arg1: i32) -> (i32, i32) {
    %c0_i32 = arith.constant 0 : i32
    %c0_i32_0 = arith.constant 0 : i32
    return %arg0, %c0_i32 : i32, i32
  }
  func.func @transform_1(%arg0: i32, %arg1: i32) -> (i32, i32) {
    %c0_i32 = arith.constant 0 : i32
    %c0_i32_0 = arith.constant 0 : i32
    return %c0_i32, %arg1 : i32, i32
  }
  func.func @transform_2(%arg0: i32, %arg1: i32) -> (i32, i32) {
    %c0_i32 = arith.constant 0 : i32
    %c0_i32_0 = arith.constant 0 : i32
    return %c0_i32, %arg1 : i32, i32
  }
  func.func @transform_3(%arg0: i32, %arg1: i32) -> (i32, i32) {
    %c0_i32 = arith.constant 0 : i32
    return %arg0, %arg1 : i32, i32
  }
}

</mosaic_0001>

<llo_original>
// kernel: _qgen_forward_impl.5
$region0: #{_qgen_forward_impl.5}
  #allocation0 [shape = 'u32[]', space=smem, size = 0x4, offset = 0x4, fixed_abs, tag = 'smem constant byte address 0x4 - core index']
  #allocation1 [shape = 'u32[144,128]{1,0:T(1,128)}', space=vmem, size = 0x12000, scoped, tag = 'internal scratch']
  %s0 = inlined_call_operand.vmem [shape: f32[8,128], index: 0, kind: input, shape index: {}]
  %s1 = inlined_call_operand.vmem [shape: f32[128,128], index: 1, kind: input, shape index: {}]
  %s2 = inlined_call_operand.vmem [shape: f32[1,128], index: 2, kind: input, shape index: {}]
  %s3 = inlined_call_operand.vmem [shape: f32[8,128], index: 3, kind: output, shape index: {}]
  %s4 = sld [smem:[#allocation0]]
  $region22: #{_qgen_forward_impl.5} parent=0
    _
  %s6 = ssub.s32 1, %s4
  %s7 = scalar_select 0, %s6, %s4
  // Predicated region
  $region2: #{_qgen_forward_impl.5} parent=0 // pred_check
    _
  $region3: #{_qgen_forward_impl.5} parent=0 // pred_check_branch
    %9 = sbr.rel (0) target = $region5
  $region4: #{_qgen_forward_impl.5} parent=0 // pred_region
    _
  $region5: #{_qgen_forward_impl.5} parent=0 // pred_fallthru
    _
  // Predicated region
  $region6: #{_qgen_forward_impl.5} parent=0 // pred_check
    _
  $region7: #{_qgen_forward_impl.5} parent=0 // pred_check_branch
    %11 = sbr.rel (0) target = $region9
  $region8: #{_qgen_forward_impl.5} parent=0 // pred_region
    _
  $region9: #{_qgen_forward_impl.5} parent=0 // pred_fallthru
    _
  // Predicated region
  $region10: #{_qgen_forward_impl.5} parent=0 // pred_check
    _
  $region11: #{_qgen_forward_impl.5} parent=0 // pred_check_branch
    %13 = sbr.rel (0) target = $region13
  $region12: #{_qgen_forward_impl.5} parent=0 // pred_region
    _
  $region13: #{_qgen_forward_impl.5} parent=0 // pred_fallthru
    _
  %v14 = vld [vmem:[%s0] sm:$0xff]
  %v15 = vld [vmem:[%s1] sm:$0xff]
  %v16 = vld [vmem:[%s1 + $0x8] sm:$0xff]
  %v17 = vld [vmem:[%s1 + $0x10] sm:$0xff]
  %v18 = vld [vmem:[%s1 + $0x18] sm:$0xff]
  %v19 = vld [vmem:[%s1 + $0x20] sm:$0xff]
  %v20 = vld [vmem:[%s1 + $0x28] sm:$0xff]
  %v21 = vld [vmem:[%s1 + $0x30] sm:$0xff]
  %v22 = vld [vmem:[%s1 + $0x38] sm:$0xff]
  %v23 = vld [vmem:[%s1 + $0x40] sm:$0xff]
  %v24 = vld [vmem:[%s1 + $0x48] sm:$0xff]
  %v25 = vld [vmem:[%s1 + $0x50] sm:$0xff]
  %v26 = vld [vmem:[%s1 + $0x58] sm:$0xff]
  %v27 = vld [vmem:[%s1 + $0x60] sm:$0xff]
  %v28 = vld [vmem:[%s1 + $0x68] sm:$0xff]
  %v29 = vld [vmem:[%s1 + $0x70] sm:$0xff]
  %v30 = vld [vmem:[%s1 + $0x78] sm:$0xff]
  %v31 = vld [vmem:[%s2] sm:$0x1]
  %v33 = vlaneseq
  %v34 = vshrl.u32 %v33, 7
  %v35 = vsub.s32 0, %v34
  %v36 = vrot.slane %v31, %v35
  %38 = vmatprep.subr.mxu0 0.0
  %39 = vmatpush1.msra.mxu0 %v15
  %40 = vmatprep.subr.mxu0 0.0
  %41 = vmatpush1.msra.mxu0 %v16
  %42 = vmatprep.subr.mxu0 0.0
  %43 = vmatpush1.msra.mxu0 %v17
  %44 = vmatprep.subr.mxu0 0.0
  %45 = vmatpush1.msra.mxu0 %v18
  %46 = vmatprep.subr.mxu0 0.0
  %47 = vmatpush1.msra.mxu0 %v19
  %48 = vmatprep.subr.mxu0 0.0
  %49 = vmatpush1.msra.mxu0 %v20
  %50 = vmatprep.subr.mxu0 0.0
  %51 = vmatpush1.msra.mxu0 %v21
  %52 = vmatprep.subr.mxu0 0.0
  %53 = vmatpush1.msra.mxu0 %v22
  %54 = vmatprep.subr.mxu0 0.0
  %55 = vmatpush1.msra.mxu0 %v23
  %56 = vmatprep.subr.mxu0 0.0
  %57 = vmatpush1.msra.mxu0 %v24
  %58 = vmatprep.subr.mxu0 0.0
  %59 = vmatpush1.msra.mxu0 %v25
  %60 = vmatprep.subr.mxu0 0.0
  %61 = vmatpush1.msra.mxu0 %v26
  %62 = vmatprep.subr.mxu0 0.0
  %63 = vmatpush1.msra.mxu0 %v27
  %64 = vmatprep.subr.mxu0 0.0
  %65 = vmatpush1.msra.mxu0 %v28
  %66 = vmatprep.subr.mxu0 0.0
  %67 = vmatpush1.msra.mxu0 %v29
  %68 = vmatprep.subr.mxu0 0.0
  %69 = vmatpush1.msra.mxu0 %v30
  %70 = vmatprep.subr.mxu0 0.0
  %71 = vmatpush1.msra.mxu0 0.0
  %72 = vmatprep.subr.mxu0 0.0
  %73 = vmatpush1.msra.mxu0 0.0
  %74 = vmatprep.subr.mxu0 0.0
  %75 = vmatpush1.msra.mxu0 0.0
  %76 = vmatprep.subr.mxu0 0.0
  %77 = vmatpush1.msra.mxu0 0.0
  %78 = vmatprep.subr.mxu0 0.0
  %79 = vmatpush1.msra.mxu0 0.0
  %80 = vmatprep.subr.mxu0 0.0
  %81 = vmatpush1.msra.mxu0 0.0
  %82 = vmatprep.subr.mxu0 0.0
  %83 = vmatpush1.msra.mxu0 0.0
  %84 = vmatprep.subr.mxu0 0.0
  %85 = vmatpush1.msra.mxu0 0.0
  %86 = vmatprep.subr.mxu0 0.0
  %87 = vmatpush1.msra.mxu0 0.0
  %88 = vmatprep.subr.mxu0 0.0
  %89 = vmatpush1.msra.mxu0 0.0
  %90 = vmatprep.subr.mxu0 0.0
  %91 = vmatpush1.msra.mxu0 0.0
  %92 = vmatprep.subr.mxu0 0.0
  %93 = vmatpush1.msra.mxu0 0.0
  %94 = vmatprep.subr.mxu0 0.0
  %95 = vmatpush1.msra.mxu0 0.0
  %96 = vmatprep.subr.mxu0 0.0
  %97 = vmatpush1.msra.mxu0 0.0
  %98 = vmatprep.subr.mxu0 0.0
  %99 = vmatpush1.msra.mxu0 0.0
  %100 = vmatprep.subr.mxu0 0.0
  %101 = vmatpush1.msra.mxu0 0.0
  %102 = vmatprep.mubr.f32.mxu0 0.0
  %103 = vmatmul.mubr.f32.gmra.mrb[0].mxu0 %v14
  %v104 = vpop.f32.mrb[0].mxu0
  %v105 = vadd.f32 %v36, %v104
  %v106 = vpop.f32.mrb[0].mxu0
  %107 = vdwg.mxu0
  %108 = vst [vmem:[%s3] sm:$0xff] %v105
  // Predicated region
  $region14: #{_qgen_forward_impl.5} parent=0 // pred_check
    _
  $region15: #{_qgen_forward_impl.5} parent=0 // pred_check_branch
    %110 = sbr.rel (0) target = $region17
  $region16: #{_qgen_forward_impl.5} parent=0 // pred_region
    _
  $region17: #{_qgen_forward_impl.5} parent=0 // pred_fallthru
    _
  // Predicated region
  $region18: #{_qgen_forward_impl.5} parent=0 // pred_check
    _
  $region19: #{_qgen_forward_impl.5} parent=0 // pred_check_branch
    %112 = sbr.rel (0) target = $region21
  $region20: #{_qgen_forward_impl.5} parent=0 // pred_region
    _
  $region21: #{_qgen_forward_impl.5} parent=0 // pred_fallthru
    _

// kernel: _qgen_forward_impl.6
$region0: #{_qgen_forward_impl.6}
  #allocation0 [shape = 'u32[]', space=smem, size = 0x4, offset = 0x4, fixed_abs, tag = 'smem constant byte address 0x4 - core index']
  #allocation1 [shape = 'u32[144,128]{1,0:T(1,128)}', space=vmem, size = 0x12000, scoped, tag = 'internal scratch']
  %s0 = inlined_call_operand.vmem [shape: f32[8,128], index: 0, kind: input, shape index: {}]
  %s1 = inlined_call_operand.vmem [shape: f32[128,512], index: 1, kind: input, shape index: {}]
  %s2 = inlined_call_operand.vmem [shape: f32[1,512], index: 2, kind: input, shape index: {}]
  %s3 = inlined_call_operand.vmem [shape: f32[8,512], index: 3, kind: output, shape index: {}]
  %s4 = sld [smem:[#allocation0]]
  $region22: #{_qgen_forward_impl.6} parent=0
    _
  %s6 = ssub.s32 1, %s4
  %s7 = scalar_select 0, %s6, %s4
  // Predicated region
  $region2: #{_qgen_forward_impl.6} parent=0 // pred_check
    _
  $region3: #{_qgen_forward_impl.6} parent=0 // pred_check_branch
    %9 = sbr.rel (0) target = $region5
  $region4: #{_qgen_forward_impl.6} parent=0 // pred_region
    _
  $region5: #{_qgen_forward_impl.6} parent=0 // pred_fallthru
    _
  // Predicated region
  $region6: #{_qgen_forward_impl.6} parent=0 // pred_check
    _
  $region7: #{_qgen_forward_impl.6} parent=0 // pred_check_branch
    %11 = sbr.rel (0) target = $region9
  $region8: #{_qgen_forward_impl.6} parent=0 // pred_region
    _
  $region9: #{_qgen_forward_impl.6} parent=0 // pred_fallthru
    _
  // Predicated region
  $region10: #{_qgen_forward_impl.6} parent=0 // pred_check
    _
  $region11: #{_qgen_forward_impl.6} parent=0 // pred_check_branch
    %13 = sbr.rel (0) target = $region13
  $region12: #{_qgen_forward_impl.6} parent=0 // pred_region
    _
  $region13: #{_qgen_forward_impl.6} parent=0 // pred_fallthru
    _
  %v14 = vld [vmem:[%s0] sm:$0xff]
  %v15 = vld [vmem:[%s1] sm:$0xff]
  %v16 = vld [vmem:[%s1 + $0x8] sm:$0xff]
  %v17 = vld [vmem:[%s1 + $0x10] sm:$0xff]
  %v18 = vld [vmem:[%s1 + $0x18] sm:$0xff]
  %v19 = vld [vmem:[%s1 + $0x20] sm:$0xff]
  %v20 = vld [vmem:[%s1 + $0x28] sm:$0xff]
  %v21 = vld [vmem:[%s1 + $0x30] sm:$0xff]
  %v22 = vld [vmem:[%s1 + $0x38] sm:$0xff]
  %v23 = vld [vmem:[%s1 + $0x40] sm:$0xff]
  %v24 = vld [vmem:[%s1 + $0x48] sm:$0xff]
  %v25 = vld [vmem:[%s1 + $0x50] sm:$0xff]
  %v26 = vld [vmem:[%s1 + $0x58] sm:$0xff]
  %v27 = vld [vmem:[%s1 + $0x60] sm:$0xff]
  %v28 = vld [vmem:[%s1 + $0x68] sm:$0xff]
  %v29 = vld [vmem:[%s1 + $0x70] sm:$0xff]
  %v30 = vld [vmem:[%s1 + $0x78] sm:$0xff]
  %v31 = vld [vmem:[%s1 + $0x80] sm:$0xff]
  %v32 = vld [vmem:[%s1 + $0x88] sm:$0xff]
  %v33 = vld [vmem:[%s1 + $0x90] sm:$0xff]
  %v34 = vld [vmem:[%s1 + $0x98] sm:$0xff]
  %v35 = vld [vmem:[%s1 + $0xa0] sm:$0xff]
  %v36 = vld [vmem:[%s1 + $0xa8] sm:$0xff]
  %v37 = vld [vmem:[%s1 + $0xb0] sm:$0xff]
  %v38 = vld [vmem:[%s1 + $0xb8] sm:$0xff]
  %v39 = vld [vmem:[%s1 + $0xc0] sm:$0xff]
  %v40 = vld [vmem:[%s1 + $0xc8] sm:$0xff]
  %v41 = vld [vmem:[%s1 + $0xd0] sm:$0xff]
  %v42 = vld [vmem:[%s1 + $0xd8] sm:$0xff]
  %v43 = vld [vmem:[%s1 + $0xe0] sm:$0xff]
  %v44 = vld [vmem:[%s1 + $0xe8] sm:$0xff]
  %v45 = vld [vmem:[%s1 + $0xf0] sm:$0xff]
  %v46 = vld [vmem:[%s1 + $0xf8] sm:$0xff]
  %v47 = vld [vmem:[%s1 + $0x100] sm:$0xff]
  %v48 = vld [vmem:[%s1 + $0x108] sm:$0xff]
  %v49 = vld [vmem:[%s1 + $0x110] sm:$0xff]
  %v50 = vld [vmem:[%s1 + $0x118] sm:$0xff]
  %v51 = vld [vmem:[%s1 + $0x120] sm:$0xff]
  %v52 = vld [vmem:[%s1 + $0x128] sm:$0xff]
  %v53 = vld [vmem:[%s1 + $0x130] sm:$0xff]
  %v54 = vld [vmem:[%s1 + $0x138] sm:$0xff]
  %v55 = vld [vmem:[%s1 + $0x140] sm:$0xff]
  %v56 = vld [vmem:[%s1 + $0x148] sm:$0xff]
  %v57 = vld [vmem:[%s1 + $0x150] sm:$0xff]
  %v58 = vld [vmem:[%s1 + $0x158] sm:$0xff]
  %v59 = vld [vmem:[%s1 + $0x160] sm:$0xff]
  %v60 = vld [vmem:[%s1 + $0x168] sm:$0xff]
  %v61 = vld [vmem:[%s1 + $0x170] sm:$0xff]
  %v62 = vld [vmem:[%s1 + $0x178] sm:$0xff]
  %v63 = vld [vmem:[%s1 + $0x180] sm:$0xff]
  %v64 = vld [vmem:[%s1 + $0x188] sm:$0xff]
  %v65 = vld [vmem:[%s1 + $0x190] sm:$0xff]
  %v66 = vld [vmem:[%s1 + $0x198] sm:$0xff]
  %v67 = vld [vmem:[%s1 + $0x1a0] sm:$0xff]
  %v68 = vld [vmem:[%s1 + $0x1a8] sm:$0xff]
  %v69 = vld [vmem:[%s1 + $0x1b0] sm:$0xff]
  %v70 = vld [vmem:[%s1 + $0x1b8] sm:$0xff]
  %v71 = vld [vmem:[%s1 + $0x1c0] sm:$0xff]
  %v72 = vld [vmem:[%s1 + $0x1c8] sm:$0xff]
  %v73 = vld [vmem:[%s1 + $0x1d0] sm:$0xff]
  %v74 = vld [vmem:[%s1 + $0x1d8] sm:$0xff]
  %v75 = vld [vmem:[%s1 + $0x1e0] sm:$0xff]
  %v76 = vld [vmem:[%s1 + $0x1e8] sm:$0xff]
  %v77 = vld [vmem:[%s1 + $0x1f0] sm:$0xff]
  %v78 = vld [vmem:[%s1 + $0x1f8] sm:$0xff]
  %v79 = vld [vmem:[%s2] sm:$0xf]
  %v81 = vlaneseq
  %v82 = vshrl.u32 %v81, 7
  %v83 = vsub.s32 0, %v82
  %v84 = vrot.slane %v79, %v83
  %v85 = vlaneseq
  %v86 = vshrl.u32 %v85, 7
  %v87 = vsub.s32 1, %v86
  %v88 = vrot.slane %v79, %v87
  %v89 = vlaneseq
  %v90 = vshrl.u32 %v89, 7
  %v91 = vsub.s32 2, %v90
  %v92 = vrot.slane %v79, %v91
  %v93 = vlaneseq
  %v94 = vshrl.u32 %v93, 7
  %v95 = vsub.s32 3, %v94
  %v96 = vrot.slane %v79, %v95
  %101 = vmatprep.subr.mxu0 %v16
  %102 = vmatpush1.msra.mxu0 %v15
  %103 = vmatprep.subr.mxu0 %v20
  %104 = vmatpush1.msra.mxu0 %v19
  %105 = vmatprep.subr.mxu0 %v24
  %106 = vmatpush1.msra.mxu0 %v23
  %107 = vmatprep.subr.mxu0 %v28
  %108 = vmatpush1.msra.mxu0 %v27
  %109 = vmatprep.subr.mxu0 %v32
  %110 = vmatpush1.msra.mxu0 %v31
  %111 = vmatprep.subr.mxu0 %v36
  %112 = vmatpush1.msra.mxu0 %v35
  %113 = vmatprep.subr.mxu0 %v40
  %114 = vmatpush1.msra.mxu0 %v39
  %115 = vmatprep.subr.mxu0 %v44
  %116 = vmatpush1.msra.mxu0 %v43
  %117 = vmatprep.subr.mxu0 %v48
  %118 = vmatpush1.msra.mxu0 %v47
  %119 = vmatprep.subr.mxu0 %v52
  %120 = vmatpush1.msra.mxu0 %v51
  %121 = vmatprep.subr.mxu0 %v56
  %122 = vmatpush1.msra.mxu0 %v55
  %123 = vmatprep.subr.mxu0 %v60
  %124 = vmatpush1.msra.mxu0 %v59
  %125 = vmatprep.subr.mxu0 %v64
  %126 = vmatpush1.msra.mxu0 %v63
  %127 = vmatprep.subr.mxu0 %v68
  %128 = vmatpush1.msra.mxu0 %v67
  %129 = vmatprep.subr.mxu0 %v72
  %130 = vmatpush1.msra.mxu0 %v71
  %131 = vmatprep.subr.mxu0 %v76
  %132 = vmatpush1.msra.mxu0 %v75
  %133 = vmatprep.subr.mxu0 0.0
  %134 = vmatpush1.msra.mxu0 0.0
  %135 = vmatprep.subr.mxu0 0.0
  %136 = vmatpush1.msra.mxu0 0.0
  %137 = vmatprep.subr.mxu0 0.0
  %138 = vmatpush1.msra.mxu0 0.0
  %139 = vmatprep.subr.mxu0 0.0
  %140 = vmatpush1.msra.mxu0 0.0
  %141 = vmatprep.subr.mxu0 0.0
  %142 = vmatpush1.msra.mxu0 0.0
  %143 = vmatprep.subr.mxu0 0.0
  %144 = vmatpush1.msra.mxu0 0.0
  %145 = vmatprep.subr.mxu0 0.0
  %146 = vmatpush1.msra.mxu0 0.0
  %147 = vmatprep.subr.mxu0 0.0
  %148 = vmatpush1.msra.mxu0 0.0
  %149 = vmatprep.subr.mxu0 0.0
  %150 = vmatpush1.msra.mxu0 0.0
  %151 = vmatprep.subr.mxu0 0.0
  %152 = vmatpush1.msra.mxu0 0.0
  %153 = vmatprep.subr.mxu0 0.0
  %154 = vmatpush1.msra.mxu0 0.0
  %155 = vmatprep.subr.mxu0 0.0
  %156 = vmatpush1.msra.mxu0 0.0
  %157 = vmatprep.subr.mxu0 0.0
  %158 = vmatpush1.msra.mxu0 0.0
  %159 = vmatprep.subr.mxu0 0.0
  %160 = vmatpush1.msra.mxu0 0.0
  %161 = vmatprep.subr.mxu0 0.0
  %162 = vmatpush1.msra.mxu0 0.0
  %163 = vmatprep.subr.mxu0 0.0
  %164 = vmatpush1.msra.mxu0 0.0
  %165 = vmatprep.mubr.f32.mxu0 0.0
  %166 = vmatmul.mubr.f32.gmra.mrb[0].mxu0 %v14
  %v167 = vpop.f32.mrb[0].mxu0
  %v168 = vadd.f32 %v84, %v167
  %v169 = vpop.f32.mrb[0].mxu0
  %v170 = vadd.f32 %v88, %v169
  %171 = vdwg.mxu0
  %172 = vmatprep.subr.mxu0 %v18
  %173 = vmatpush1.msra.mxu0 %v17
  %174 = vmatprep.subr.mxu0 %v22
  %175 = vmatpush1.msra.mxu0 %v21
  %176 = vmatprep.subr.mxu0 %v26
  %177 = vmatpush1.msra.mxu0 %v25
  %178 = vmatprep.subr.mxu0 %v30
  %179 = vmatpush1.msra.mxu0 %v29
  %180 = vmatprep.subr.mxu0 %v34
  %181 = vmatpush1.msra.mxu0 %v33
  %182 = vmatprep.subr.mxu0 %v38
  %183 = vmatpush1.msra.mxu0 %v37
  %184 = vmatprep.subr.mxu0 %v42
  %185 = vmatpush1.msra.mxu0 %v41
  %186 = vmatprep.subr.mxu0 %v46
  %187 = vmatpush1.msra.mxu0 %v45
  %188 = vmatprep.subr.mxu0 %v50
  %189 = vmatpush1.msra.mxu0 %v49
  %190 = vmatprep.subr.mxu0 %v54
  %191 = vmatpush1.msra.mxu0 %v53
  %192 = vmatprep.subr.mxu0 %v58
  %193 = vmatpush1.msra.mxu0 %v57
  %194 = vmatprep.subr.mxu0 %v62
  %195 = vmatpush1.msra.mxu0 %v61
  %196 = vmatprep.subr.mxu0 %v66
  %197 = vmatpush1.msra.mxu0 %v65
  %198 = vmatprep.subr.mxu0 %v70
  %199 = vmatpush1.msra.mxu0 %v69
  %200 = vmatprep.subr.mxu0 %v74
  %201 = vmatpush1.msra.mxu0 %v73
  %202 = vmatprep.subr.mxu0 %v78
  %203 = vmatpush1.msra.mxu0 %v77
  %204 = vmatprep.subr.mxu0 0.0
  %205 = vmatpush1.msra.mxu0 0.0
  %206 = vmatprep.subr.mxu0 0.0
  %207 = vmatpush1.msra.mxu0 0.0
  %208 = vmatprep.subr.mxu0 0.0
  %209 = vmatpush1.msra.mxu0 0.0
  %210 = vmatprep.subr.mxu0 0.0
  %211 = vmatpush1.msra.mxu0 0.0
  %212 = vmatprep.subr.mxu0 0.0
  %213 = vmatpush1.msra.mxu0 0.0
  %214 = vmatprep.subr.mxu0 0.0
  %215 = vmatpush1.msra.mxu0 0.0
  %216 = vmatprep.subr.mxu0 0.0
  %217 = vmatpush1.msra.mxu0 0.0
  %218 = vmatprep.subr.mxu0 0.0
  %219 = vmatpush1.msra.mxu0 0.0
  %220 = vmatprep.subr.mxu0 0.0
  %221 = vmatpush1.msra.mxu0 0.0
  %222 = vmatprep.subr.mxu0 0.0
  %223 = vmatpush1.msra.mxu0 0.0
  %224 = vmatprep.subr.mxu0 0.0
  %225 = vmatpush1.msra.mxu0 0.0
  %226 = vmatprep.subr.mxu0 0.0
  %227 = vmatpush1.msra.mxu0 0.0
  %228 = vmatprep.subr.mxu0 0.0
  %229 = vmatpush1.msra.mxu0 0.0
  %230 = vmatprep.subr.mxu0 0.0
  %231 = vmatpush1.msra.mxu0 0.0
  %232 = vmatprep.subr.mxu0 0.0
  %233 = vmatpush1.msra.mxu0 0.0
  %234 = vmatprep.subr.mxu0 0.0
  %235 = vmatpush1.msra.mxu0 0.0
  %236 = vmatprep.mubr.f32.mxu0 0.0
  %237 = vmatmul.mubr.f32.gmra.mrb[0].mxu0 %v14
  %v238 = vpop.f32.mrb[0].mxu0
  %v239 = vadd.f32 %v92, %v238
  %v240 = vpop.f32.mrb[0].mxu0
  %v241 = vadd.f32 %v96, %v240
  %242 = vdwg.mxu0
  %243 = vst [vmem:[%s3] sm:$0xff] %v168
  %244 = vst [vmem:[%s3 + $0x8] sm:$0xff] %v170
  %245 = vst [vmem:[%s3 + $0x10] sm:$0xff] %v239
  %246 = vst [vmem:[%s3 + $0x18] sm:$0xff] %v241
  // Predicated region
  $region14: #{_qgen_forward_impl.6} parent=0 // pred_check
    _
  $region15: #{_qgen_forward_impl.6} parent=0 // pred_check_branch
    %248 = sbr.rel (0) target = $region17
  $region16: #{_qgen_forward_impl.6} parent=0 // pred_region
    _
  $region17: #{_qgen_forward_impl.6} parent=0 // pred_fallthru
    _
  // Predicated region
  $region18: #{_qgen_forward_impl.6} parent=0 // pred_check
    _
  $region19: #{_qgen_forward_impl.6} parent=0 // pred_check_branch
    %250 = sbr.rel (0) target = $region21
  $region20: #{_qgen_forward_impl.6} parent=0 // pred_region
    _
  $region21: #{_qgen_forward_impl.6} parent=0 // pred_fallthru
    _

// kernel: _qgen_forward_impl.7
$region0: #{_qgen_forward_impl.7}
  #allocation0 [shape = 'u32[]', space=smem, size = 0x4, offset = 0x4, fixed_abs, tag = 'smem constant byte address 0x4 - core index']
  #allocation1 [shape = 'u32[144,128]{1,0:T(1,128)}', space=vmem, size = 0x12000, scoped, tag = 'internal scratch']
  %s0 = inlined_call_operand.vmem [shape: f32[32,128], index: 0, kind: input, shape index: {}]
  %s1 = inlined_call_operand.vmem [shape: f32[128,512], index: 1, kind: input, shape index: {}]
  %s2 = inlined_call_operand.vmem [shape: f32[1,512], index: 2, kind: input, shape index: {}]
  %s3 = inlined_call_operand.vmem [shape: f32[32,512], index: 3, kind: output, shape index: {}]
  %s4 = sld [smem:[#allocation0]]
  $region22: #{_qgen_forward_impl.7} parent=0
    _
  %s6 = ssub.s32 1, %s4
  %s7 = scalar_select 0, %s6, %s4
  // Predicated region
  $region2: #{_qgen_forward_impl.7} parent=0 // pred_check
    _
  $region3: #{_qgen_forward_impl.7} parent=0 // pred_check_branch
    %9 = sbr.rel (0) target = $region5
  $region4: #{_qgen_forward_impl.7} parent=0 // pred_region
    _
  $region5: #{_qgen_forward_impl.7} parent=0 // pred_fallthru
    _
  // Predicated region
  $region6: #{_qgen_forward_impl.7} parent=0 // pred_check
    _
  $region7: #{_qgen_forward_impl.7} parent=0 // pred_check_branch
    %11 = sbr.rel (0) target = $region9
  $region8: #{_qgen_forward_impl.7} parent=0 // pred_region
    _
  $region9: #{_qgen_forward_impl.7} parent=0 // pred_fallthru
    _
  // Predicated region
  $region10: #{_qgen_forward_impl.7} parent=0 // pred_check
    _
  $region11: #{_qgen_forward_impl.7} parent=0 // pred_check_branch
    %13 = sbr.rel (0) target = $region13
  $region12: #{_qgen_forward_impl.7} parent=0 // pred_region
    _
  $region13: #{_qgen_forward_impl.7} parent=0 // pred_fallthru
    _
  %v14 = vld [vmem:[%s0] sm:$0xff]
  %v15 = vld [vmem:[%s0 + $0x8] sm:$0xff]
  %v16 = vld [vmem:[%s0 + $0x10] sm:$0xff]
  %v17 = vld [vmem:[%s0 + $0x18] sm:$0xff]
  %v18 = vld [vmem:[%s1] sm:$0xff]
  %v19 = vld [vmem:[%s1 + $0x8] sm:$0xff]
  %v20 = vld [vmem:[%s1 + $0x10] sm:$0xff]
  %v21 = vld [vmem:[%s1 + $0x18] sm:$0xff]
  %v22 = vld [vmem:[%s1 + $0x20] sm:$0xff]
  %v23 = vld [vmem:[%s1 + $0x28] sm:$0xff]
  %v24 = vld [vmem:[%s1 + $0x30] sm:$0xff]
  %v25 = vld [vmem:[%s1 + $0x38] sm:$0xff]
  %v26 = vld [vmem:[%s1 + $0x40] sm:$0xff]
  %v27 = vld [vmem:[%s1 + $0x48] sm:$0xff]
  %v28 = vld [vmem:[%s1 + $0x50] sm:$0xff]
  %v29 = vld [vmem:[%s1 + $0x58] sm:$0xff]
  %v30 = vld [vmem:[%s1 + $0x60] sm:$0xff]
  %v31 = vld [vmem:[%s1 + $0x68] sm:$0xff]
  %v32 = vld [vmem:[%s1 + $0x70] sm:$0xff]
  %v33 = vld [vmem:[%s1 + $0x78] sm:$0xff]
  %v34 = vld [vmem:[%s1 + $0x80] sm:$0xff]
  %v35 = vld [vmem:[%s1 + $0x88] sm:$0xff]
  %v36 = vld [vmem:[%s1 + $0x90] sm:$0xff]
  %v37 = vld [vmem:[%s1 + $0x98] sm:$0xff]
  %v38 = vld [vmem:[%s1 + $0xa0] sm:$0xff]
  %v39 = vld [vmem:[%s1 + $0xa8] sm:$0xff]
  %v40 = vld [vmem:[%s1 + $0xb0] sm:$0xff]
  %v41 = vld [vmem:[%s1 + $0xb8] sm:$0xff]
  %v42 = vld [vmem:[%s1 + $0xc0] sm:$0xff]
  %v43 = vld [vmem:[%s1 + $0xc8] sm:$0xff]
  %v44 = vld [vmem:[%s1 + $0xd0] sm:$0xff]
  %v45 = vld [vmem:[%s1 + $0xd8] sm:$0xff]
  %v46 = vld [vmem:[%s1 + $0xe0] sm:$0xff]
  %v47 = vld [vmem:[%s1 + $0xe8] sm:$0xff]
  %v48 = vld [vmem:[%s1 + $0xf0] sm:$0xff]
  %v49 = vld [vmem:[%s1 + $0xf8] sm:$0xff]
  %v50 = vld [vmem:[%s1 + $0x100] sm:$0xff]
  %v51 = vld [vmem:[%s1 + $0x108] sm:$0xff]
  %v52 = vld [vmem:[%s1 + $0x110] sm:$0xff]
  %v53 = vld [vmem:[%s1 + $0x118] sm:$0xff]
  %v54 = vld [vmem:[%s1 + $0x120] sm:$0xff]
  %v55 = vld [vmem:[%s1 + $0x128] sm:$0xff]
  %v56 = vld [vmem:[%s1 + $0x130] sm:$0xff]
  %v57 = vld [vmem:[%s1 + $0x138] sm:$0xff]
  %v58 = vld [vmem:[%s1 + $0x140] sm:$0xff]
  %v59 = vld [vmem:[%s1 + $0x148] sm:$0xff]
  %v60 = vld [vmem:[%s1 + $0x150] sm:$0xff]
  %v61 = vld [vmem:[%s1 + $0x158] sm:$0xff]
  %v62 = vld [vmem:[%s1 + $0x160] sm:$0xff]
  %v63 = vld [vmem:[%s1 + $0x168] sm:$0xff]
  %v64 = vld [vmem:[%s1 + $0x170] sm:$0xff]
  %v65 = vld [vmem:[%s1 + $0x178] sm:$0xff]
  %v66 = vld [vmem:[%s1 + $0x180] sm:$0xff]
  %v67 = vld [vmem:[%s1 + $0x188] sm:$0xff]
  %v68 = vld [vmem:[%s1 + $0x190] sm:$0xff]
  %v69 = vld [vmem:[%s1 + $0x198] sm:$0xff]
  %v70 = vld [vmem:[%s1 + $0x1a0] sm:$0xff]
  %v71 = vld [vmem:[%s1 + $0x1a8] sm:$0xff]
  %v72 = vld [vmem:[%s1 + $0x1b0] sm:$0xff]
  %v73 = vld [vmem:[%s1 + $0x1b8] sm:$0xff]
  %v74 = vld [vmem:[%s1 + $0x1c0] sm:$0xff]
  %v75 = vld [vmem:[%s1 + $0x1c8] sm:$0xff]
  %v76 = vld [vmem:[%s1 + $0x1d0] sm:$0xff]
  %v77 = vld [vmem:[%s1 + $0x1d8] sm:$0xff]
  %v78 = vld [vmem:[%s1 + $0x1e0] sm:$0xff]
  %v79 = vld [vmem:[%s1 + $0x1e8] sm:$0xff]
  %v80 = vld [vmem:[%s1 + $0x1f0] sm:$0xff]
  %v81 = vld [vmem:[%s1 + $0x1f8] sm:$0xff]
  %v82 = vld [vmem:[%s2] sm:$0xf]
  %v84 = vlaneseq
  %v85 = vshrl.u32 %v84, 7
  %v86 = vsub.s32 0, %v85
  %v87 = vrot.slane %v82, %v86
  %v88 = vlaneseq
  %v89 = vshrl.u32 %v88, 7
  %v90 = vsub.s32 1, %v89
  %v91 = vrot.slane %v82, %v90
  %v92 = vlaneseq
  %v93 = vshrl.u32 %v92, 7
  %v94 = vsub.s32 2, %v93
  %v95 = vrot.slane %v82, %v94
  %v96 = vlaneseq
  %v97 = vshrl.u32 %v96, 7
  %v98 = vsub.s32 3, %v97
  %v99 = vrot.slane %v82, %v98
  %104 = vmatprep.subr.mxu0 %v19
  %105 = vmatpush1.msra.mxu0 %v18
  %106 = vmatprep.subr.mxu0 %v23
  %107 = vmatpush1.msra.mxu0 %v22
  %108 = vmatprep.subr.mxu0 %v27
  %109 = vmatpush1.msra.mxu0 %v26
  %110 = vmatprep.subr.mxu0 %v31
  %111 = vmatpush1.msra.mxu0 %v30
  %112 = vmatprep.subr.mxu0 %v35
  %113 = vmatpush1.msra.mxu0 %v34
  %114 = vmatprep.subr.mxu0 %v39
  %115 = vmatpush1.msra.mxu0 %v38
  %116 = vmatprep.subr.mxu0 %v43
  %117 = vmatpush1.msra.mxu0 %v42
  %118 = vmatprep.subr.mxu0 %v47
  %119 = vmatpush1.msra.mxu0 %v46
  %120 = vmatprep.subr.mxu0 %v51
  %121 = vmatpush1.msra.mxu0 %v50
  %122 = vmatprep.subr.mxu0 %v55
  %123 = vmatpush1.msra.mxu0 %v54
  %124 = vmatprep.subr.mxu0 %v59
  %125 = vmatpush1.msra.mxu0 %v58
  %126 = vmatprep.subr.mxu0 %v63
  %127 = vmatpush1.msra.mxu0 %v62
  %128 = vmatprep.subr.mxu0 %v67
  %129 = vmatpush1.msra.mxu0 %v66
  %130 = vmatprep.subr.mxu0 %v71
  %131 = vmatpush1.msra.mxu0 %v70
  %132 = vmatprep.subr.mxu0 %v75
  %133 = vmatpush1.msra.mxu0 %v74
  %134 = vmatprep.subr.mxu0 %v79
  %135 = vmatpush1.msra.mxu0 %v78
  %136 = vmatprep.subr.mxu0 0.0
  %137 = vmatpush1.msra.mxu0 0.0
  %138 = vmatprep.subr.mxu0 0.0
  %139 = vmatpush1.msra.mxu0 0.0
  %140 = vmatprep.subr.mxu0 0.0
  %141 = vmatpush1.msra.mxu0 0.0
  %142 = vmatprep.subr.mxu0 0.0
  %143 = vmatpush1.msra.mxu0 0.0
  %144 = vmatprep.subr.mxu0 0.0
  %145 = vmatpush1.msra.mxu0 0.0
  %146 = vmatprep.subr.mxu0 0.0
  %147 = vmatpush1.msra.mxu0 0.0
  %148 = vmatprep.subr.mxu0 0.0
  %149 = vmatpush1.msra.mxu0 0.0
  %150 = vmatprep.subr.mxu0 0.0
  %151 = vmatpush1.msra.mxu0 0.0
  %152 = vmatprep.subr.mxu0 0.0
  %153 = vmatpush1.msra.mxu0 0.0
  %154 = vmatprep.subr.mxu0 0.0
  %155 = vmatpush1.msra.mxu0 0.0
  %156 = vmatprep.subr.mxu0 0.0
  %157 = vmatpush1.msra.mxu0 0.0
  %158 = vmatprep.subr.mxu0 0.0
  %159 = vmatpush1.msra.mxu0 0.0
  %160 = vmatprep.subr.mxu0 0.0
  %161 = vmatpush1.msra.mxu0 0.0
  %162 = vmatprep.subr.mxu0 0.0
  %163 = vmatpush1.msra.mxu0 0.0
  %164 = vmatprep.subr.mxu0 0.0
  %165 = vmatpush1.msra.mxu0 0.0
  %166 = vmatprep.subr.mxu0 0.0
  %167 = vmatpush1.msra.mxu0 0.0
  %168 = vmatprep.mubr.f32.mxu0 0.0
  %169 = vmatmul.mubr.f32.gmra.mrb[0].mxu0 %v14
  %v170 = vpop.f32.mrb[0].mxu0
  %v171 = vadd.f32 %v87, %v170
  %v172 = vpop.f32.mrb[0].mxu0
  %v173 = vadd.f32 %v91, %v172
  %174 = vmatprep.mubr.f32.mxu0 0.0
  %175 = vmatmul.mubr.f32.gmra.mrb[0].mxu0 %v15
  %v176 = vpop.f32.mrb[0].mxu0
  %v177 = vadd.f32 %v87, %v176
  %v178 = vpop.f32.mrb[0].mxu0
  %v179 = vadd.f32 %v91, %v178
  %180 = vmatprep.mubr.f32.mxu0 0.0
  %181 = vmatmul.mubr.f32.gmra.mrb[0].mxu0 %v16
  %v182 = vpop.f32.mrb[0].mxu0
  %v183 = vadd.f32 %v87, %v182
  %v184 = vpop.f32.mrb[0].mxu0
  %v185 = vadd.f32 %v91, %v184
  %186 = vmatprep.mubr.f32.mxu0 0.0
  %187 = vmatmul.mubr.f32.gmra.mrb[0].mxu0 %v17
  %v188 = vpop.f32.mrb[0].mxu0
  %v189 = vadd.f32 %v87, %v188
  %v190 = vpop.f32.mrb[0].mxu0
  %v191 = vadd.f32 %v91, %v190
  %192 = vdwg.mxu0
  %193 = vmatprep.subr.mxu0 %v21
  %194 = vmatpush1.msra.mxu0 %v20
  %195 = vmatprep.subr.mxu0 %v25
  %196 = vmatpush1.msra.mxu0 %v24
  %197 = vmatprep.subr.mxu0 %v29
  %198 = vmatpush1.msra.mxu0 %v28
  %199 = vmatprep.subr.mxu0 %v33
  %200 = vmatpush1.msra.mxu0 %v32
  %201 = vmatprep.subr.mxu0 %v37
  %202 = vmatpush1.msra.mxu0 %v36
  %203 = vmatprep.subr.mxu0 %v41
  %204 = vmatpush1.msra.mxu0 %v40
  %205 = vmatprep.subr.mxu0 %v45
  %206 = vmatpush1.msra.mxu0 %v44
  %207 = vmatprep.subr.mxu0 %v49
  %208 = vmatpush1.msra.mxu0 %v48
  %209 = vmatprep.subr.mxu0 %v53
  %210 = vmatpush1.msra.mxu0 %v52
  %211 = vmatprep.subr.mxu0 %v57
  %212 = vmatpush1.msra.mxu0 %v56
  %213 = vmatprep.subr.mxu0 %v61
  %214 = vmatpush1.msra.mxu0 %v60
  %215 = vmatprep.subr.mxu0 %v65
  %216 = vmatpush1.msra.mxu0 %v64
  %217 = vmatprep.subr.mxu0 %v69
  %218 = vmatpush1.msra.mxu0 %v68
  %219 = vmatprep.subr.mxu0 %v73
  %220 = vmatpush1.msra.mxu0 %v72
  %221 = vmatprep.subr.mxu0 %v77
  %222 = vmatpush1.msra.mxu0 %v76
  %223 = vmatprep.subr.mxu0 %v81
  %224 = vmatpush1.msra.mxu0 %v80
  %225 = vmatprep.subr.mxu0 0.0
  %226 = vmatpush1.msra.mxu0 0.0
  %227 = vmatprep.subr.mxu0 0.0
  %228 = vmatpush1.msra.mxu0 0.0
  %229 = vmatprep.subr.mxu0 0.0
  %230 = vmatpush1.msra.mxu0 0.0
  %231 = vmatprep.subr.mxu0 0.0
  %232 = vmatpush1.msra.mxu0 0.0
  %233 = vmatprep.subr.mxu0 0.0
  %234 = vmatpush1.msra.mxu0 0.0
  %235 = vmatprep.subr.mxu0 0.0
  %236 = vmatpush1.msra.mxu0 0.0
  %237 = vmatprep.subr.mxu0 0.0
  %238 = vmatpush1.msra.mxu0 0.0
  %239 = vmatprep.subr.mxu0 0.0
  %240 = vmatpush1.msra.mxu0 0.0
  %241 = vmatprep.subr.mxu0 0.0
  %242 = vmatpush1.msra.mxu0 0.0
  %243 = vmatprep.subr.mxu0 0.0
  %244 = vmatpush1.msra.mxu0 0.0
  %245 = vmatprep.subr.mxu0 0.0
  %246 = vmatpush1.msra.mxu0 0.0
  %247 = vmatprep.subr.mxu0 0.0
  %248 = vmatpush1.msra.mxu0 0.0
  %249 = vmatprep.subr.mxu0 0.0
  %250 = vmatpush1.msra.mxu0 0.0
  %251 = vmatprep.subr.mxu0 0.0
  %252 = vmatpush1.msra.mxu0 0.0
  %253 = vmatprep.subr.mxu0 0.0
  %254 = vmatpush1.msra.mxu0 0.0
  %255 = vmatprep.subr.mxu0 0.0
  %256 = vmatpush1.msra.mxu0 0.0
  %257 = vmatprep.mubr.f32.mxu0 0.0
  %258 = vmatmul.mubr.f32.gmra.mrb[0].mxu0 %v14
  %v259 = vpop.f32.mrb[0].mxu0
  %v260 = vadd.f32 %v95, %v259
  %v261 = vpop.f32.mrb[0].mxu0
  %v262 = vadd.f32 %v99, %v261
  %263 = vmatprep.mubr.f32.mxu0 0.0
  %264 = vmatmul.mubr.f32.gmra.mrb[0].mxu0 %v15
  %v265 = vpop.f32.mrb[0].mxu0
  %v266 = vadd.f32 %v95, %v265
  %v267 = vpop.f32.mrb[0].mxu0
  %v268 = vadd.f32 %v99, %v267
  %269 = vmatprep.mubr.f32.mxu0 0.0
  %270 = vmatmul.mubr.f32.gmra.mrb[0].mxu0 %v16
  %v271 = vpop.f32.mrb[0].mxu0
  %v272 = vadd.f32 %v95, %v271
  %v273 = vpop.f32.mrb[0].mxu0
  %v274 = vadd.f32 %v99, %v273
  %275 = vmatprep.mubr.f32.mxu0 0.0
  %276 = vmatmul.mubr.f32.gmra.mrb[0].mxu0 %v17
  %v277 = vpop.f32.mrb[0].mxu0
  %v278 = vadd.f32 %v95, %v277
  %v279 = vpop.f32.mrb[0].mxu0
  %v280 = vadd.f32 %v99, %v279
  %281 = vdwg.mxu0
  %282 = vst [vmem:[%s3] sm:$0xff] %v171
  %283 = vst [vmem:[%s3 + $0x8] sm:$0xff] %v173
  %284 = vst [vmem:[%s3 + $0x10] sm:$0xff] %v260
  %285 = vst [vmem:[%s3 + $0x18] sm:$0xff] %v262
  %286 = vst [vmem:[%s3 + $0x20] sm:$0xff] %v177
  %287 = vst [vmem:[%s3 + $0x28] sm:$0xff] %v179
  %288 = vst [vmem:[%s3 + $0x30] sm:$0xff] %v266
  %289 = vst [vmem:[%s3 + $0x38] sm:$0xff] %v268
  %290 = vst [vmem:[%s3 + $0x40] sm:$0xff] %v183
  %291 = vst [vmem:[%s3 + $0x48] sm:$0xff] %v185
  %292 = vst [vmem:[%s3 + $0x50] sm:$0xff] %v272
  %293 = vst [vmem:[%s3 + $0x58] sm:$0xff] %v274
  %294 = vst [vmem:[%s3 + $0x60] sm:$0xff] %v189
  %295 = vst [vmem:[%s3 + $0x68] sm:$0xff] %v191
  %296 = vst [vmem:[%s3 + $0x70] sm:$0xff] %v278
  %297 = vst [vmem:[%s3 + $0x78] sm:$0xff] %v280
  // Predicated region
  $region14: #{_qgen_forward_impl.7} parent=0 // pred_check
    _
  $region15: #{_qgen_forward_impl.7} parent=0 // pred_check_branch
    %299 = sbr.rel (0) target = $region17
  $region16: #{_qgen_forward_impl.7} parent=0 // pred_region
    _
  $region17: #{_qgen_forward_impl.7} parent=0 // pred_fallthru
    _
  // Predicated region
  $region18: #{_qgen_forward_impl.7} parent=0 // pred_check
    _
  $region19: #{_qgen_forward_impl.7} parent=0 // pred_check_branch
    %301 = sbr.rel (0) target = $region21
  $region20: #{_qgen_forward_impl.7} parent=0 // pred_region
    _
  $region21: #{_qgen_forward_impl.7} parent=0 // pred_fallthru
    _

// kernel: _qgen_forward_impl.9
$region0: #{_qgen_forward_impl.9}
  #allocation0 [shape = 'u32[]', space=smem, size = 0x4, offset = 0x4, fixed_abs, tag = 'smem constant byte address 0x4 - core index']
  #allocation1 [shape = 'u32[144,128]{1,0:T(1,128)}', space=vmem, size = 0x12000, scoped, tag = 'internal scratch']
  %s0 = inlined_call_operand.vmem [shape: f32[32,128], index: 0, kind: input, shape index: {}]
  %s1 = inlined_call_operand.vmem [shape: f32[128,128], index: 1, kind: input, shape index: {}]
  %s2 = inlined_call_operand.vmem [shape: f32[1,128], index: 2, kind: input, shape index: {}]
  %s3 = inlined_call_operand.hbm [shape: f32[32,128], index: 3, kind: output, shape index: {}]
  %s4 = sld [smem:[#allocation0]]
  $region22: #{_qgen_forward_impl.9} parent=0
    _
  %s6 = ssub.s32 1, %s4
  %s7 = scalar_select 0, %s6, %s4
  $region1: #{_qgen_forward_impl.9} parent=0
    #allocation2 [shape = 'u8[16384]{0}', space=vmem, size = 0x4000, scoped, tag = 'output window, operand 0, single buffered']
    #allocation3 [shape = 's32[1]{0}', space=sflag, size = 0x4, scoped, tag = 'scoped memory for _qgen_forward_impl.9']
    %8 = vsyncpa [#allocation3], 0
    // Predicated region
    $region2: #{_qgen_forward_impl.9} parent=1 // pred_check
      _
    $region3: #{_qgen_forward_impl.9} parent=1 // pred_check_branch
      %10 = sbr.rel (0) target = $region5
    $region4: #{_qgen_forward_impl.9} parent=1 // pred_region
      _
    $region5: #{_qgen_forward_impl.9} parent=1 // pred_fallthru
      _
    // Predicated region
    $region6: #{_qgen_forward_impl.9} parent=1 // pred_check
      _
    $region7: #{_qgen_forward_impl.9} parent=1 // pred_check_branch
      %12 = sbr.rel (0) target = $region9
    $region8: #{_qgen_forward_impl.9} parent=1 // pred_region
      _
    $region9: #{_qgen_forward_impl.9} parent=1 // pred_fallthru
      _
    // Predicated region
    $region10: #{_qgen_forward_impl.9} parent=1 // pred_check
      _
    $region11: #{_qgen_forward_impl.9} parent=1 // pred_check_branch
      %14 = sbr.rel (0) target = $region13
    $region12: #{_qgen_forward_impl.9} parent=1 // pred_region
      _
    $region13: #{_qgen_forward_impl.9} parent=1 // pred_fallthru
      _
    %v15 = vld [vmem:[%s0] sm:$0xff]
    %v16 = vld [vmem:[%s0 + $0x8] sm:$0xff]
    %v17 = vld [vmem:[%s0 + $0x10] sm:$0xff]
    %v18 = vld [vmem:[%s0 + $0x18] sm:$0xff]
    %v19 = vld [vmem:[%s1] sm:$0xff]
    %v20 = vld [vmem:[%s1 + $0x8] sm:$0xff]
    %v21 = vld [vmem:[%s1 + $0x10] sm:$0xff]
    %v22 = vld [vmem:[%s1 + $0x18] sm:$0xff]
    %v23 = vld [vmem:[%s1 + $0x20] sm:$0xff]
    %v24 = vld [vmem:[%s1 + $0x28] sm:$0xff]
    %v25 = vld [vmem:[%s1 + $0x30] sm:$0xff]
    %v26 = vld [vmem:[%s1 + $0x38] sm:$0xff]
    %v27 = vld [vmem:[%s1 + $0x40] sm:$0xff]
    %v28 = vld [vmem:[%s1 + $0x48] sm:$0xff]
    %v29 = vld [vmem:[%s1 + $0x50] sm:$0xff]
    %v30 = vld [vmem:[%s1 + $0x58] sm:$0xff]
    %v31 = vld [vmem:[%s1 + $0x60] sm:$0xff]
    %v32 = vld [vmem:[%s1 + $0x68] sm:$0xff]
    %v33 = vld [vmem:[%s1 + $0x70] sm:$0xff]
    %v34 = vld [vmem:[%s1 + $0x78] sm:$0xff]
    %v35 = vld [vmem:[%s2] sm:$0x1]
    %v37 = vlaneseq
    %v38 = vshrl.u32 %v37, 7
    %v39 = vsub.s32 0, %v38
    %v40 = vrot.slane %v35, %v39
    %42 = vmatprep.subr.mxu0 0.0
    %43 = vmatpush1.msra.mxu0 %v19
    %44 = vmatprep.subr.mxu0 0.0
    %45 = vmatpush1.msra.mxu0 %v20
    %46 = vmatprep.subr.mxu0 0.0
    %47 = vmatpush1.msra.mxu0 %v21
    %48 = vmatprep.subr.mxu0 0.0
    %49 = vmatpush1.msra.mxu0 %v22
    %50 = vmatprep.subr.mxu0 0.0
    %51 = vmatpush1.msra.mxu0 %v23
    %52 = vmatprep.subr.mxu0 0.0
    %53 = vmatpush1.msra.mxu0 %v24
    %54 = vmatprep.subr.mxu0 0.0
    %55 = vmatpush1.msra.mxu0 %v25
    %56 = vmatprep.subr.mxu0 0.0
    %57 = vmatpush1.msra.mxu0 %v26
    %58 = vmatprep.subr.mxu0 0.0
    %59 = vmatpush1.msra.mxu0 %v27
    %60 = vmatprep.subr.mxu0 0.0
    %61 = vmatpush1.msra.mxu0 %v28
    %62 = vmatprep.subr.mxu0 0.0
    %63 = vmatpush1.msra.mxu0 %v29
    %64 = vmatprep.subr.mxu0 0.0
    %65 = vmatpush1.msra.mxu0 %v30
    %66 = vmatprep.subr.mxu0 0.0
    %67 = vmatpush1.msra.mxu0 %v31
    %68 = vmatprep.subr.mxu0 0.0
    %69 = vmatpush1.msra.mxu0 %v32
    %70 = vmatprep.subr.mxu0 0.0
    %71 = vmatpush1.msra.mxu0 %v33
    %72 = vmatprep.subr.mxu0 0.0
    %73 = vmatpush1.msra.mxu0 %v34
    %74 = vmatprep.subr.mxu0 0.0
    %75 = vmatpush1.msra.mxu0 0.0
    %76 = vmatprep.subr.mxu0 0.0
    %77 = vmatpush1.msra.mxu0 0.0
    %78 = vmatprep.subr.mxu0 0.0
    %79 = vmatpush1.msra.mxu0 0.0
    %80 = vmatprep.subr.mxu0 0.0
    %81 = vmatpush1.msra.mxu0 0.0
    %82 = vmatprep.subr.mxu0 0.0
    %83 = vmatpush1.msra.mxu0 0.0
    %84 = vmatprep.subr.mxu0 0.0
    %85 = vmatpush1.msra.mxu0 0.0
    %86 = vmatprep.subr.mxu0 0.0
    %87 = vmatpush1.msra.mxu0 0.0
    %88 = vmatprep.subr.mxu0 0.0
    %89 = vmatpush1.msra.mxu0 0.0
    %90 = vmatprep.subr.mxu0 0.0
    %91 = vmatpush1.msra.mxu0 0.0
    %92 = vmatprep.subr.mxu0 0.0
    %93 = vmatpush1.msra.mxu0 0.0
    %94 = vmatprep.subr.mxu0 0.0
    %95 = vmatpush1.msra.mxu0 0.0
    %96 = vmatprep.subr.mxu0 0.0
    %97 = vmatpush1.msra.mxu0 0.0
    %98 = vmatprep.subr.mxu0 0.0
    %99 = vmatpush1.msra.mxu0 0.0
    %100 = vmatprep.subr.mxu0 0.0
    %101 = vmatpush1.msra.mxu0 0.0
    %102 = vmatprep.subr.mxu0 0.0
    %103 = vmatpush1.msra.mxu0 0.0
    %104 = vmatprep.subr.mxu0 0.0
    %105 = vmatpush1.msra.mxu0 0.0
    %106 = vmatprep.mubr.f32.mxu0 0.0
    %107 = vmatmul.mubr.f32.gmra.mrb[0].mxu0 %v15
    %v108 = vpop.f32.mrb[0].mxu0
    %v109 = vadd.f32 %v40, %v108
    %v110 = vpop.f32.mrb[0].mxu0
    %111 = vmatprep.mubr.f32.mxu0 0.0
    %112 = vmatmul.mubr.f32.gmra.mrb[0].mxu0 %v16
    %v113 = vpop.f32.mrb[0].mxu0
    %v114 = vadd.f32 %v40, %v113
    %v115 = vpop.f32.mrb[0].mxu0
    %116 = vmatprep.mubr.f32.mxu0 0.0
    %117 = vmatmul.mubr.f32.gmra.mrb[0].mxu0 %v17
    %v118 = vpop.f32.mrb[0].mxu0
    %v119 = vadd.f32 %v40, %v118
    %v120 = vpop.f32.mrb[0].mxu0
    %121 = vmatprep.mubr.f32.mxu0 0.0
    %122 = vmatmul.mubr.f32.gmra.mrb[0].mxu0 %v18
    %v123 = vpop.f32.mrb[0].mxu0
    %v124 = vadd.f32 %v40, %v123
    %v125 = vpop.f32.mrb[0].mxu0
    %126 = vdwg.mxu0
    %127 = vst [vmem:[#allocation2] sm:$0xff] %v109
    %128 = vst [vmem:[#allocation2 + $0x8] sm:$0xff] %v114
    %129 = vst [vmem:[#allocation2 + $0x10] sm:$0xff] %v119
    %130 = vst [vmem:[#allocation2 + $0x18] sm:$0xff] %v124
    // Predicated region
    $region14: #{_qgen_forward_impl.9} parent=1 // pred_check
      _
    $region15: #{_qgen_forward_impl.9} parent=1 // pred_check_branch
      %132 = sbr.rel (0) target = $region17
    $region16: #{_qgen_forward_impl.9} parent=1 // pred_region
      %s134 = ssub.s32 512, 512
      %135 = vsyncadd [#allocation3], %s134
      %s136 = sshll.u32 [#allocation2], 4
      %s137 = int_to_ptr.vmem [resolvable:$true] %s136
      %142 = dma.vmem_to_hbm [thread:$0]  %s137, 512, %s3, [#allocation3], 128, 128, 8
    $region17: #{_qgen_forward_impl.9} parent=1 // pred_fallthru
      _
    // Predicated region
    $region18: #{_qgen_forward_impl.9} parent=1 // pred_check
      _
    $region19: #{_qgen_forward_impl.9} parent=1 // pred_check_branch
      %144 = sbr.rel (0) target = $region21
    $region20: #{_qgen_forward_impl.9} parent=1 // pred_region
      %145 = dma.done [#allocation3], 512
    $region21: #{_qgen_forward_impl.9} parent=1 // pred_fallthru
      _
    %146 = vsyncpa [#allocation3], 1

// kernel: _qgen_forward_impl.8
$region0: #{_qgen_forward_impl.8}
  #allocation0 [shape = 'u32[]', space=smem, size = 0x4, offset = 0x4, fixed_abs, tag = 'smem constant byte address 0x4 - core index']
  #allocation1 [shape = 'u32[144,128]{1,0:T(1,128)}', space=vmem, size = 0x12000, scoped, tag = 'internal scratch']
  #allocation2 [shape = 'f32[8,128]{1,0:T(8,128)}', space=vmem, size = 0x1000, scoped, tag = 'scratch operand']
  #allocation3 [shape = 'f32[8,128]{1,0:T(8,128)}', space=vmem, size = 0x1000, scoped, tag = 'scratch operand']
  %s0 = inlined_call_operand.vmem [shape: f32[8,8,512], index: 0, kind: input, shape index: {}]
  %s1 = inlined_call_operand.vmem [shape: f32[8,512], index: 1, kind: input, shape index: {}]
  %s2 = inlined_call_operand.vmem [shape: f32[128,512], index: 2, kind: input, shape index: {}]
  %s3 = inlined_call_operand.vmem [shape: f32[8,8,1], index: 3, kind: input, shape index: {}]
  %s4 = inlined_call_operand.vmem [shape: f32[8,8,128], index: 4, kind: output, shape index: {}]
  %s5 = sld [smem:[#allocation0]]
  $region30: #{_qgen_forward_impl.8} parent=0
    _
  %s7 = ssub.s32 1, %s5
  %s8 = scalar_select 0, %s7, %s5
  // Predicated region
  $region2: #{_qgen_forward_impl.8} parent=0 // pred_check
    _
  $region3: #{_qgen_forward_impl.8} parent=0 // pred_check_branch
    %10 = sbr.rel (0) target = $region5
  $region4: #{_qgen_forward_impl.8} parent=0 // pred_region
    _
  $region5: #{_qgen_forward_impl.8} parent=0 // pred_fallthru
    _
  // Predicated region
  $region6: #{_qgen_forward_impl.8} parent=0 // pred_check
    _
  $region7: #{_qgen_forward_impl.8} parent=0 // pred_check_branch
    %12 = sbr.rel (0) target = $region9
  $region8: #{_qgen_forward_impl.8} parent=0 // pred_region
    _
  $region9: #{_qgen_forward_impl.8} parent=0 // pred_fallthru
    _
  // Predicated region
  $region10: #{_qgen_forward_impl.8} parent=0 // pred_check
    _
  $region11: #{_qgen_forward_impl.8} parent=0 // pred_check_branch
    %14 = sbr.rel (0) target = $region13
  $region12: #{_qgen_forward_impl.8} parent=0 // pred_region
    _
  $region13: #{_qgen_forward_impl.8} parent=0 // pred_fallthru
    _
  // Predicated region
  $region14: #{_qgen_forward_impl.8} parent=0 // pred_check
    _
  $region15: #{_qgen_forward_impl.8} parent=0 // pred_check_branch
    %16 = sbr.rel (0) target = $region17
  $region16: #{_qgen_forward_impl.8} parent=0 // pred_region
    _
  $region17: #{_qgen_forward_impl.8} parent=0 // pred_fallthru
    _
  %p17 = scmp.eq.s32.totalorder 0, 0
  // Predicated region
  $region18: #{_qgen_forward_impl.8} parent=0 // pred_check
    %p18 = pneg %p17
  $region19: #{_qgen_forward_impl.8} parent=0 // pred_check_branch
    %20 = sbr.rel (%p18) target = $region21
  $region20: #{_qgen_forward_impl.8} parent=0 // pred_region
    %21 = vst [vmem:[#allocation2] sm:$0xff] 0.0
    %22 = vst [vmem:[#allocation3] sm:$0xff] 0.0
  $region21: #{_qgen_forward_impl.8} parent=0 // pred_fallthru
    _
  %v23 = vld [vmem:[%s1] sm:$0xff]
  %v24 = vld [vmem:[%s1 + $0x8] sm:$0xff]
  %v25 = vld [vmem:[%s1 + $0x10] sm:$0xff]
  %v26 = vld [vmem:[%s1 + $0x18] sm:$0xff]
  %v27 = vld [vmem:[%s2] sm:$0xff]
  %v28 = vld [vmem:[%s2 + $0x8] sm:$0xff]
  %v29 = vld [vmem:[%s2 + $0x10] sm:$0xff]
  %v30 = vld [vmem:[%s2 + $0x18] sm:$0xff]
  %v31 = vld [vmem:[%s2 + $0x20] sm:$0xff]
  %v32 = vld [vmem:[%s2 + $0x28] sm:$0xff]
  %v33 = vld [vmem:[%s2 + $0x30] sm:$0xff]
  %v34 = vld [vmem:[%s2 + $0x38] sm:$0xff]
  %v35 = vld [vmem:[%s2 + $0x40] sm:$0xff]
  %v36 = vld [vmem:[%s2 + $0x48] sm:$0xff]
  %v37 = vld [vmem:[%s2 + $0x50] sm:$0xff]
  %v38 = vld [vmem:[%s2 + $0x58] sm:$0xff]
  %v39 = vld [vmem:[%s2 + $0x60] sm:$0xff]
  %v40 = vld [vmem:[%s2 + $0x68] sm:$0xff]
  %v41 = vld [vmem:[%s2 + $0x70] sm:$0xff]
  %v42 = vld [vmem:[%s2 + $0x78] sm:$0xff]
  %v43 = vld [vmem:[%s2 + $0x80] sm:$0xff]
  %v44 = vld [vmem:[%s2 + $0x88] sm:$0xff]
  %v45 = vld [vmem:[%s2 + $0x90] sm:$0xff]
  %v46 = vld [vmem:[%s2 + $0x98] sm:$0xff]
  %v47 = vld [vmem:[%s2 + $0xa0] sm:$0xff]
  %v48 = vld [vmem:[%s2 + $0xa8] sm:$0xff]
  %v49 = vld [vmem:[%s2 + $0xb0] sm:$0xff]
  %v50 = vld [vmem:[%s2 + $0xb8] sm:$0xff]
  %v51 = vld [vmem:[%s2 + $0xc0] sm:$0xff]
  %v52 = vld [vmem:[%s2 + $0xc8] sm:$0xff]
  %v53 = vld [vmem:[%s2 + $0xd0] sm:$0xff]
  %v54 = vld [vmem:[%s2 + $0xd8] sm:$0xff]
  %v55 = vld [vmem:[%s2 + $0xe0] sm:$0xff]
  %v56 = vld [vmem:[%s2 + $0xe8] sm:$0xff]
  %v57 = vld [vmem:[%s2 + $0xf0] sm:$0xff]
  %v58 = vld [vmem:[%s2 + $0xf8] sm:$0xff]
  %v59 = vld [vmem:[%s2 + $0x100] sm:$0xff]
  %v60 = vld [vmem:[%s2 + $0x108] sm:$0xff]
  %v61 = vld [vmem:[%s2 + $0x110] sm:$0xff]
  %v62 = vld [vmem:[%s2 + $0x118] sm:$0xff]
  %v63 = vld [vmem:[%s2 + $0x120] sm:$0xff]
  %v64 = vld [vmem:[%s2 + $0x128] sm:$0xff]
  %v65 = vld [vmem:[%s2 + $0x130] sm:$0xff]
  %v66 = vld [vmem:[%s2 + $0x138] sm:$0xff]
  %v67 = vld [vmem:[%s2 + $0x140] sm:$0xff]
  %v68 = vld [vmem:[%s2 + $0x148] sm:$0xff]
  %v69 = vld [vmem:[%s2 + $0x150] sm:$0xff]
  %v70 = vld [vmem:[%s2 + $0x158] sm:$0xff]
  %v71 = vld [vmem:[%s2 + $0x160] sm:$0xff]
  %v72 = vld [vmem:[%s2 + $0x168] sm:$0xff]
  %v73 = vld [vmem:[%s2 + $0x170] sm:$0xff]
  %v74 = vld [vmem:[%s2 + $0x178] sm:$0xff]
  %v75 = vld [vmem:[%s2 + $0x180] sm:$0xff]
  %v76 = vld [vmem:[%s2 + $0x188] sm:$0xff]
  %v77 = vld [vmem:[%s2 + $0x190] sm:$0xff]
  %v78 = vld [vmem:[%s2 + $0x198] sm:$0xff]
  %v79 = vld [vmem:[%s2 + $0x1a0] sm:$0xff]
  %v80 = vld [vmem:[%s2 + $0x1a8] sm:$0xff]
  %v81 = vld [vmem:[%s2 + $0x1b0] sm:$0xff]
  %v82 = vld [vmem:[%s2 + $0x1b8] sm:$0xff]
  %v83 = vld [vmem:[%s2 + $0x1c0] sm:$0xff]
  %v84 = vld [vmem:[%s2 + $0x1c8] sm:$0xff]
  %v85 = vld [vmem:[%s2 + $0x1d0] sm:$0xff]
  %v86 = vld [vmem:[%s2 + $0x1d8] sm:$0xff]
  %v87 = vld [vmem:[%s2 + $0x1e0] sm:$0xff]
  %v88 = vld [vmem:[%s2 + $0x1e8] sm:$0xff]
  %v89 = vld [vmem:[%s2 + $0x1f0] sm:$0xff]
  %v90 = vld [vmem:[%s2 + $0x1f8] sm:$0xff]
  %v91 = vld [vmem:[#allocation2] sm:$0xff]
  %v92 = vld [vmem:[#allocation3] sm:$0xff]
  %v93 = vld [vmem:[%s0] sm:$0xff]
  %v94 = vld [vmem:[%s0 + $0x8] sm:$0xff]
  %v95 = vld [vmem:[%s0 + $0x10] sm:$0xff]
  %v96 = vld [vmem:[%s0 + $0x18] sm:$0xff]
  %v97 = vadd.f32 %v93, %v23
  %v98 = vadd.f32 %v94, %v24
  %v99 = vadd.f32 %v95, %v25
  %v100 = vadd.f32 %v96, %v26
  %101 = vmatprep.subr.mxu0 %v28
  %102 = vmatpush1.msra.mxu0 %v27
  %103 = vmatprep.subr.mxu0 %v32
  %104 = vmatpush1.msra.mxu0 %v31
  %105 = vmatprep.subr.mxu0 %v36
  %106 = vmatpush1.msra.mxu0 %v35
  %107 = vmatprep.subr.mxu0 %v40
  %108 = vmatpush1.msra.mxu0 %v39
  %109 = vmatprep.subr.mxu0 %v44
  %110 = vmatpush1.msra.mxu0 %v43
  %111 = vmatprep.subr.mxu0 %v48
  %112 = vmatpush1.msra.mxu0 %v47
  %113 = vmatprep.subr.mxu0 %v52
  %114 = vmatpush1.msra.mxu0 %v51
  %115 = vmatprep.subr.mxu0 %v56
  %116 = vmatpush1.msra.mxu0 %v55
  %117 = vmatprep.subr.mxu0 %v60
  %118 = vmatpush1.msra.mxu0 %v59
  %119 = vmatprep.subr.mxu0 %v64
  %120 = vmatpush1.msra.mxu0 %v63
  %121 = vmatprep.subr.mxu0 %v68
  %122 = vmatpush1.msra.mxu0 %v67
  %123 = vmatprep.subr.mxu0 %v72
  %124 = vmatpush1.msra.mxu0 %v71
  %125 = vmatprep.subr.mxu0 %v76
  %126 = vmatpush1.msra.mxu0 %v75
  %127 = vmatprep.subr.mxu0 %v80
  %128 = vmatpush1.msra.mxu0 %v79
  %129 = vmatprep.subr.mxu0 %v84
  %130 = vmatpush1.msra.mxu0 %v83
  %131 = vmatprep.subr.mxu0 %v88
  %132 = vmatpush1.msra.mxu0 %v87
  %133 = vmatprep.subr.mxu0 0.0
  %134 = vmatpush1.msra.mxu0 0.0
  %135 = vmatprep.subr.mxu0 0.0
  %136 = vmatpush1.msra.mxu0 0.0
  %137 = vmatprep.subr.mxu0 0.0
  %138 = vmatpush1.msra.mxu0 0.0
  %139 = vmatprep.subr.mxu0 0.0
  %140 = vmatpush1.msra.mxu0 0.0
  %141 = vmatprep.subr.mxu0 0.0
  %142 = vmatpush1.msra.mxu0 0.0
  %143 = vmatprep.subr.mxu0 0.0
  %144 = vmatpush1.msra.mxu0 0.0
  %145 = vmatprep.subr.mxu0 0.0
  %146 = vmatpush1.msra.mxu0 0.0
  %147 = vmatprep.subr.mxu0 0.0
  %148 = vmatpush1.msra.mxu0 0.0
  %149 = vmatprep.subr.mxu0 0.0
  %150 = vmatpush1.msra.mxu0 0.0
  %151 = vmatprep.subr.mxu0 0.0
  %152 = vmatpush1.msra.mxu0 0.0
  %153 = vmatprep.subr.mxu0 0.0
  %154 = vmatpush1.msra.mxu0 0.0
  %155 = vmatprep.subr.mxu0 0.0
  %156 = vmatpush1.msra.mxu0 0.0
  %157 = vmatprep.subr.mxu0 0.0
  %158 = vmatpush1.msra.mxu0 0.0
  %159 = vmatprep.subr.mxu0 0.0
  %160 = vmatpush1.msra.mxu0 0.0
  %161 = vmatprep.subr.mxu0 0.0
  %162 = vmatpush1.msra.mxu0 0.0
  %163 = vmatprep.subr.mxu0 0.0
  %164 = vmatpush1.msra.mxu0 0.0
  %165 = vmatprep.mubr.f32.mxu0 0.0
  %166 = vmatmul.mubr.f32.gmra.mrb[0].mxu0 %v91
  %v167 = vpop.f32.mrb[0].mxu0
  %v168 = vadd.f32 0.0, %v167
  %v169 = vpop.f32.mrb[0].mxu0
  %v170 = vadd.f32 0.0, %v169
  %171 = vdwg.mxu0
  %172 = vmatprep.subr.mxu0 %v30
  %173 = vmatpush1.msra.mxu0 %v29
  %174 = vmatprep.subr.mxu0 %v34
  %175 = vmatpush1.msra.mxu0 %v33
  %176 = vmatprep.subr.mxu0 %v38
  %177 = vmatpush1.msra.mxu0 %v37
  %178 = vmatprep.subr.mxu0 %v42
  %179 = vmatpush1.msra.mxu0 %v41
  %180 = vmatprep.subr.mxu0 %v46
  %181 = vmatpush1.msra.mxu0 %v45
  %182 = vmatprep.subr.mxu0 %v50
  %183 = vmatpush1.msra.mxu0 %v49
  %184 = vmatprep.subr.mxu0 %v54
  %185 = vmatpush1.msra.mxu0 %v53
  %186 = vmatprep.subr.mxu0 %v58
  %187 = vmatpush1.msra.mxu0 %v57
  %188 = vmatprep.subr.mxu0 %v62
  %189 = vmatpush1.msra.mxu0 %v61
  %190 = vmatprep.subr.mxu0 %v66
  %191 = vmatpush1.msra.mxu0 %v65
  %192 = vmatprep.subr.mxu0 %v70
  %193 = vmatpush1.msra.mxu0 %v69
  %194 = vmatprep.subr.mxu0 %v74
  %195 = vmatpush1.msra.mxu0 %v73
  %196 = vmatprep.subr.mxu0 %v78
  %197 = vmatpush1.msra.mxu0 %v77
  %198 = vmatprep.subr.mxu0 %v82
  %199 = vmatpush1.msra.mxu0 %v81
  %200 = vmatprep.subr.mxu0 %v86
  %201 = vmatpush1.msra.mxu0 %v85
  %202 = vmatprep.subr.mxu0 %v90
  %203 = vmatpush1.msra.mxu0 %v89
  %204 = vmatprep.subr.mxu0 0.0
  %205 = vmatpush1.msra.mxu0 0.0
  %206 = vmatprep.subr.mxu0 0.0
  %207 = vmatpush1.msra.mxu0 0.0
  %208 = vmatprep.subr.mxu0 0.0
  %209 = vmatpush1.msra.mxu0 0.0
  %210 = vmatprep.subr.mxu0 0.0
  %211 = vmatpush1.msra.mxu0 0.0
  %212 = vmatprep.subr.mxu0 0.0
  %213 = vmatpush1.msra.mxu0 0.0
  %214 = vmatprep.subr.mxu0 0.0
  %215 = vmatpush1.msra.mxu0 0.0
  %216 = vmatprep.subr.mxu0 0.0
  %217 = vmatpush1.msra.mxu0 0.0
  %218 = vmatprep.subr.mxu0 0.0
  %219 = vmatpush1.msra.mxu0 0.0
  %220 = vmatprep.subr.mxu0 0.0
  %221 = vmatpush1.msra.mxu0 0.0
  %222 = vmatprep.subr.mxu0 0.0
  %223 = vmatpush1.msra.mxu0 0.0
  %224 = vmatprep.subr.mxu0 0.0
  %225 = vmatpush1.msra.mxu0 0.0
  %226 = vmatprep.subr.mxu0 0.0
  %227 = vmatpush1.msra.mxu0 0.0
  %228 = vmatprep.subr.mxu0 0.0
  %229 = vmatpush1.msra.mxu0 0.0
  %230 = vmatprep.subr.mxu0 0.0
  %231 = vmatpush1.msra.mxu0 0.0
  %232 = vmatprep.subr.mxu0 0.0
  %233 = vmatpush1.msra.mxu0 0.0
  %234 = vmatprep.subr.mxu0 0.0
  %235 = vmatpush1.msra.mxu0 0.0
  %236 = vmatprep.mubr.f32.mxu0 0.0
  %237 = vmatmul.mubr.f32.gmra.mrb[0].mxu0 %v91
  %v238 = vpop.f32.mrb[0].mxu0
  %v239 = vadd.f32 0.0, %v238
  %v240 = vpop.f32.mrb[0].mxu0
  %v241 = vadd.f32 0.0, %v240
  %242 = vdwg.mxu0
  %v243 = vadd.f32 %v97, %v168
  %v244 = vadd.f32 %v98, %v170
  %v245 = vadd.f32 %v99, %v239
  %v246 = vadd.f32 %v100, %v241
  %v247 = vxor.u32 %v243, 2147483648
  %v248 = vmul.f32 %v247, 1.442695
  %v249 = vpow.pop %v248
  %v250 = vadd.f32 %v249, 1.0
  %v251 = vrcp.pop %v250
  %v252 = vmul.f32 1.0, %v251
  %v253 = vxor.u32 %v244, 2147483648
  %v254 = vmul.f32 %v253, 1.442695
  %v255 = vpow.pop %v254
  %v256 = vadd.f32 %v255, 1.0
  %v257 = vrcp.pop %v256
  %v258 = vmul.f32 1.0, %v257
  %v259 = vtanh.pop %v245
  %v260 = vxor.u32 %v246, 2147483648
  %v261 = vmul.f32 %v260, 1.442695
  %v262 = vpow.pop %v261
  %v263 = vadd.f32 %v262, 1.0
  %v264 = vrcp.pop %v263
  %v265 = vmul.f32 1.0, %v264
  %v266 = vmul.f32 %v258, %v92
  %v267 = vmul.f32 %v252, %v259
  %v268 = vadd.f32 %v266, %v267
  %v269 = vtanh.pop %v268
  %v270 = vmul.f32 %v265, %v269
  %v271 = vld [vmem:[%s3] sm:$0xff]
  %273 = vset.pattern.permute.xlu0 0
  %274 = vperm.xlu0 %273, %v271
  %v275 = vpop.permute.xlu0 %274
  %v277 = vmul.f32 %v270, %v275
  %278 = vst [vmem:[%s4] sm:$0xff] %v277
  %s279 = scalar_lea.vmem %s0, 32
  %v280 = vld [vmem:[%s279] sm:$0xff]
  %v281 = vld [vmem:[%s279 + $0x8] sm:$0xff]
  %v282 = vld [vmem:[%s279 + $0x10] sm:$0xff]
  %v283 = vld [vmem:[%s279 + $0x18] sm:$0xff]
  %v284 = vadd.f32 %v280, %v23
  %v285 = vadd.f32 %v281, %v24
  %v286 = vadd.f32 %v282, %v25
  %v287 = vadd.f32 %v283, %v26
  %288 = vmatprep.subr.mxu0 %v28
  %289 = vmatpush1.msra.mxu0 %v27
  %290 = vmatprep.subr.mxu0 %v32
  %291 = vmatpush1.msra.mxu0 %v31
  %292 = vmatprep.subr.mxu0 %v36
  %293 = vmatpush1.msra.mxu0 %v35
  %294 = vmatprep.subr.mxu0 %v40
  %295 = vmatpush1.msra.mxu0 %v39
  %296 = vmatprep.subr.mxu0 %v44
  %297 = vmatpush1.msra.mxu0 %v43
  %298 = vmatprep.subr.mxu0 %v48
  %299 = vmatpush1.msra.mxu0 %v47
  %300 = vmatprep.subr.mxu0 %v52
  %301 = vmatpush1.msra.mxu0 %v51
  %302 = vmatprep.subr.mxu0 %v56
  %303 = vmatpush1.msra.mxu0 %v55
  %304 = vmatprep.subr.mxu0 %v60
  %305 = vmatpush1.msra.mxu0 %v59
  %306 = vmatprep.subr.mxu0 %v64
  %307 = vmatpush1.msra.mxu0 %v63
  %308 = vmatprep.subr.mxu0 %v68
  %309 = vmatpush1.msra.mxu0 %v67
  %310 = vmatprep.subr.mxu0 %v72
  %311 = vmatpush1.msra.mxu0 %v71
  %312 = vmatprep.subr.mxu0 %v76
  %313 = vmatpush1.msra.mxu0 %v75
  %314 = vmatprep.subr.mxu0 %v80
  %315 = vmatpush1.msra.mxu0 %v79
  %316 = vmatprep.subr.mxu0 %v84
  %317 = vmatpush1.msra.mxu0 %v83
  %318 = vmatprep.subr.mxu0 %v88
  %319 = vmatpush1.msra.mxu0 %v87
  %320 = vmatprep.subr.mxu0 0.0
  %321 = vmatpush1.msra.mxu0 0.0
  %322 = vmatprep.subr.mxu0 0.0
  %323 = vmatpush1.msra.mxu0 0.0
  %324 = vmatprep.subr.mxu0 0.0
  %325 = vmatpush1.msra.mxu0 0.0
  %326 = vmatprep.subr.mxu0 0.0
  %327 = vmatpush1.msra.mxu0 0.0
  %328 = vmatprep.subr.mxu0 0.0
  %329 = vmatpush1.msra.mxu0 0.0
  %330 = vmatprep.subr.mxu0 0.0
  %331 = vmatpush1.msra.mxu0 0.0
  %332 = vmatprep.subr.mxu0 0.0
  %333 = vmatpush1.msra.mxu0 0.0
  %334 = vmatprep.subr.mxu0 0.0
  %335 = vmatpush1.msra.mxu0 0.0
  %336 = vmatprep.subr.mxu0 0.0
  %337 = vmatpush1.msra.mxu0 0.0
  %338 = vmatprep.subr.mxu0 0.0
  %339 = vmatpush1.msra.mxu0 0.0
  %340 = vmatprep.subr.mxu0 0.0
  %341 = vmatpush1.msra.mxu0 0.0
  %342 = vmatprep.subr.mxu0 0.0
  %343 = vmatpush1.msra.mxu0 0.0
  %344 = vmatprep.subr.mxu0 0.0
  %345 = vmatpush1.msra.mxu0 0.0
  %346 = vmatprep.subr.mxu0 0.0
  %347 = vmatpush1.msra.mxu0 0.0
  %348 = vmatprep.subr.mxu0 0.0
  %349 = vmatpush1.msra.mxu0 0.0
  %350 = vmatprep.subr.mxu0 0.0
  %351 = vmatpush1.msra.mxu0 0.0
  %352 = vmatprep.mubr.f32.mxu0 0.0
  %353 = vmatmul.mubr.f32.gmra.mrb[0].mxu0 %v270
  %v354 = vpop.f32.mrb[0].mxu0
  %v355 = vadd.f32 0.0, %v354
  %v356 = vpop.f32.mrb[0].mxu0
  %v357 = vadd.f32 0.0, %v356
  %358 = vdwg.mxu0
  %359 = vmatprep.subr.mxu0 %v30
  %360 = vmatpush1.msra.mxu0 %v29
  %361 = vmatprep.subr.mxu0 %v34
  %362 = vmatpush1.msra.mxu0 %v33
  %363 = vmatprep.subr.mxu0 %v38
  %364 = vmatpush1.msra.mxu0 %v37
  %365 = vmatprep.subr.mxu0 %v42
  %366 = vmatpush1.msra.mxu0 %v41
  %367 = vmatprep.subr.mxu0 %v46
  %368 = vmatpush1.msra.mxu0 %v45
  %369 = vmatprep.subr.mxu0 %v50
  %370 = vmatpush1.msra.mxu0 %v49
  %371 = vmatprep.subr.mxu0 %v54
  %372 = vmatpush1.msra.mxu0 %v53
  %373 = vmatprep.subr.mxu0 %v58
  %374 = vmatpush1.msra.mxu0 %v57
  %375 = vmatprep.subr.mxu0 %v62
  %376 = vmatpush1.msra.mxu0 %v61
  %377 = vmatprep.subr.mxu0 %v66
  %378 = vmatpush1.msra.mxu0 %v65
  %379 = vmatprep.subr.mxu0 %v70
  %380 = vmatpush1.msra.mxu0 %v69
  %381 = vmatprep.subr.mxu0 %v74
  %382 = vmatpush1.msra.mxu0 %v73
  %383 = vmatprep.subr.mxu0 %v78
  %384 = vmatpush1.msra.mxu0 %v77
  %385 = vmatprep.subr.mxu0 %v82
  %386 = vmatpush1.msra.mxu0 %v81
  %387 = vmatprep.subr.mxu0 %v86
  %388 = vmatpush1.msra.mxu0 %v85
  %389 = vmatprep.subr.mxu0 %v90
  %390 = vmatpush1.msra.mxu0 %v89
  %391 = vmatprep.subr.mxu0 0.0
  %392 = vmatpush1.msra.mxu0 0.0
  %393 = vmatprep.subr.mxu0 0.0
  %394 = vmatpush1.msra.mxu0 0.0
  %395 = vmatprep.subr.mxu0 0.0
  %396 = vmatpush1.msra.mxu0 0.0
  %397 = vmatprep.subr.mxu0 0.0
  %398 = vmatpush1.msra.mxu0 0.0
  %399 = vmatprep.subr.mxu0 0.0
  %400 = vmatpush1.msra.mxu0 0.0
  %401 = vmatprep.subr.mxu0 0.0
  %402 = vmatpush1.msra.mxu0 0.0
  %403 = vmatprep.subr.mxu0 0.0
  %404 = vmatpush1.msra.mxu0 0.0
  %405 = vmatprep.subr.mxu0 0.0
  %406 = vmatpush1.msra.mxu0 0.0
  %407 = vmatprep.subr.mxu0 0.0
  %408 = vmatpush1.msra.mxu0 0.0
  %409 = vmatprep.subr.mxu0 0.0
  %410 = vmatpush1.msra.mxu0 0.0
  %411 = vmatprep.subr.mxu0 0.0
  %412 = vmatpush1.msra.mxu0 0.0
  %413 = vmatprep.subr.mxu0 0.0
  %414 = vmatpush1.msra.mxu0 0.0
  %415 = vmatprep.subr.mxu0 0.0
  %416 = vmatpush1.msra.mxu0 0.0
  %417 = vmatprep.subr.mxu0 0.0
  %418 = vmatpush1.msra.mxu0 0.0
  %419 = vmatprep.subr.mxu0 0.0
  %420 = vmatpush1.msra.mxu0 0.0
  %421 = vmatprep.subr.mxu0 0.0
  %422 = vmatpush1.msra.mxu0 0.0
  %423 = vmatprep.mubr.f32.mxu0 0.0
  %424 = vmatmul.mubr.f32.gmra.mrb[0].mxu0 %v270
  %v425 = vpop.f32.mrb[0].mxu0
  %v426 = vadd.f32 0.0, %v425
  %v427 = vpop.f32.mrb[0].mxu0
  %v428 = vadd.f32 0.0, %v427
  %429 = vdwg.mxu0
  %v430 = vadd.f32 %v284, %v355
  %v431 = vadd.f32 %v285, %v357
  %v432 = vadd.f32 %v286, %v426
  %v433 = vadd.f32 %v287, %v428
  %v434 = vxor.u32 %v430, 2147483648
  %v435 = vmul.f32 %v434, 1.442695
  %v436 = vpow.pop %v435
  %v437 = vadd.f32 %v436, 1.0
  %v438 = vrcp.pop %v437
  %v439 = vmul.f32 1.0, %v438
  %v440 = vxor.u32 %v431, 2147483648
  %v441 = vmul.f32 %v440, 1.442695
  %v442 = vpow.pop %v441
  %v443 = vadd.f32 %v442, 1.0
  %v444 = vrcp.pop %v443
  %v445 = vmul.f32 1.0, %v444
  %v446 = vtanh.pop %v432
  %v447 = vxor.u32 %v433, 2147483648
  %v448 = vmul.f32 %v447, 1.442695
  %v449 = vpow.pop %v448
  %v450 = vadd.f32 %v449, 1.0
  %v451 = vrcp.pop %v450
  %v452 = vmul.f32 1.0, %v451
  %v453 = vmul.f32 %v445, %v268
  %v454 = vmul.f32 %v439, %v446
  %v455 = vadd.f32 %v453, %v454
  %v456 = vtanh.pop %v455
  %v457 = vmul.f32 %v452, %v456
  %s458 = scalar_lea.vmem %s3, 8
  %v459 = vld [vmem:[%s458] sm:$0xff]
  %461 = vset.pattern.permute.xlu0 0
  %462 = vperm.xlu0 %461, %v459
  %v463 = vpop.permute.xlu0 %462
  %v465 = vmul.f32 %v457, %v463
  %s466 = scalar_lea.vmem %s4, 8
  %467 = vst [vmem:[%s466] sm:$0xff] %v465
  %s468 = scalar_lea.vmem %s0, 64
  %v469 = vld [vmem:[%s468] sm:$0xff]
  %v470 = vld [vmem:[%s468 + $0x8] sm:$0xff]
  %v471 = vld [vmem:[%s468 + $0x10] sm:$0xff]
  %v472 = vld [vmem:[%s468 + $0x18] sm:$0xff]
  %v473 = vadd.f32 %v469, %v23
  %v474 = vadd.f32 %v470, %v24
  %v475 = vadd.f32 %v471, %v25
  %v476 = vadd.f32 %v472, %v26
  %477 = vmatprep.subr.mxu0 %v28
  %478 = vmatpush1.msra.mxu0 %v27
  %479 = vmatprep.subr.mxu0 %v32
  %480 = vmatpush1.msra.mxu0 %v31
  %481 = vmatprep.subr.mxu0 %v36
  %482 = vmatpush1.msra.mxu0 %v35
  %483 = vmatprep.subr.mxu0 %v40
  %484 = vmatpush1.msra.mxu0 %v39
  %485 = vmatprep.subr.mxu0 %v44
  %486 = vmatpush1.msra.mxu0 %v43
  %487 = vmatprep.subr.mxu0 %v48
  %488 = vmatpush1.msra.mxu0 %v47
  %489 = vmatprep.subr.mxu0 %v52
  %490 = vmatpush1.msra.mxu0 %v51
  %491 = vmatprep.subr.mxu0 %v56
  %492 = vmatpush1.msra.mxu0 %v55
  %493 = vmatprep.subr.mxu0 %v60
  %494 = vmatpush1.msra.mxu0 %v59
  %495 = vmatprep.subr.mxu0 %v64
  %496 = vmatpush1.msra.mxu0 %v63
  %497 = vmatprep.subr.mxu0 %v68
  %498 = vmatpush1.msra.mxu0 %v67
  %499 = vmatprep.subr.mxu0 %v72
  %500 = vmatpush1.msra.mxu0 %v71
  %501 = vmatprep.subr.mxu0 %v76
  %502 = vmatpush1.msra.mxu0 %v75
  %503 = vmatprep.subr.mxu0 %v80
  %504 = vmatpush1.msra.mxu0 %v79
  %505 = vmatprep.subr.mxu0 %v84
  %506 = vmatpush1.msra.mxu0 %v83
  %507 = vmatprep.subr.mxu0 %v88
  %508 = vmatpush1.msra.mxu0 %v87
  %509 = vmatprep.subr.mxu0 0.0
  %510 = vmatpush1.msra.mxu0 0.0
  %511 = vmatprep.subr.mxu0 0.0
  %512 = vmatpush1.msra.mxu0 0.0
  %513 = vmatprep.subr.mxu0 0.0
  %514 = vmatpush1.msra.mxu0 0.0
  %515 = vmatprep.subr.mxu0 0.0
  %516 = vmatpush1.msra.mxu0 0.0
  %517 = vmatprep.subr.mxu0 0.0
  %518 = vmatpush1.msra.mxu0 0.0
  %519 = vmatprep.subr.mxu0 0.0
  %520 = vmatpush1.msra.mxu0 0.0
  %521 = vmatprep.subr.mxu0 0.0
  %522 = vmatpush1.msra.mxu0 0.0
  %523 = vmatprep.subr.mxu0 0.0
  %524 = vmatpush1.msra.mxu0 0.0
  %525 = vmatprep.subr.mxu0 0.0
  %526 = vmatpush1.msra.mxu0 0.0
  %527 = vmatprep.subr.mxu0 0.0
  %528 = vmatpush1.msra.mxu0 0.0
  %529 = vmatprep.subr.mxu0 0.0
  %530 = vmatpush1.msra.mxu0 0.0
  %531 = vmatprep.subr.mxu0 0.0
  %532 = vmatpush1.msra.mxu0 0.0
  %533 = vmatprep.subr.mxu0 0.0
  %534 = vmatpush1.msra.mxu0 0.0
  %535 = vmatprep.subr.mxu0 0.0
  %536 = vmatpush1.msra.mxu0 0.0
  %537 = vmatprep.subr.mxu0 0.0
  %538 = vmatpush1.msra.mxu0 0.0
  %539 = vmatprep.subr.mxu0 0.0
  %540 = vmatpush1.msra.mxu0 0.0
  %541 = vmatprep.mubr.f32.mxu0 0.0
  %542 = vmatmul.mubr.f32.gmra.mrb[0].mxu0 %v457
  %v543 = vpop.f32.mrb[0].mxu0
  %v544 = vadd.f32 0.0, %v543
  %v545 = vpop.f32.mrb[0].mxu0
  %v546 = vadd.f32 0.0, %v545
  %547 = vdwg.mxu0
  %548 = vmatprep.subr.mxu0 %v30
  %549 = vmatpush1.msra.mxu0 %v29
  %550 = vmatprep.subr.mxu0 %v34
  %551 = vmatpush1.msra.mxu0 %v33
  %552 = vmatprep.subr.mxu0 %v38
  %553 = vmatpush1.msra.mxu0 %v37
  %554 = vmatprep.subr.mxu0 %v42
  %555 = vmatpush1.msra.mxu0 %v41
  %556 = vmatprep.subr.mxu0 %v46
  %557 = vmatpush1.msra.mxu0 %v45
  %558 = vmatprep.subr.mxu0 %v50
  %559 = vmatpush1.msra.mxu0 %v49
  %560 = vmatprep.subr.mxu0 %v54
  %561 = vmatpush1.msra.mxu0 %v53
  %562 = vmatprep.subr.mxu0 %v58
  %563 = vmatpush1.msra.mxu0 %v57
  %564 = vmatprep.subr.mxu0 %v62
  %565 = vmatpush1.msra.mxu0 %v61
  %566 = vmatprep.subr.mxu0 %v66
  %567 = vmatpush1.msra.mxu0 %v65
  %568 = vmatprep.subr.mxu0 %v70
  %569 = vmatpush1.msra.mxu0 %v69
  %570 = vmatprep.subr.mxu0 %v74
  %571 = vmatpush1.msra.mxu0 %v73
  %572 = vmatprep.subr.mxu0 %v78
  %573 = vmatpush1.msra.mxu0 %v77
  %574 = vmatprep.subr.mxu0 %v82
  %575 = vmatpush1.msra.mxu0 %v81
  %576 = vmatprep.subr.mxu0 %v86
  %577 = vmatpush1.msra.mxu0 %v85
  %578 = vmatprep.subr.mxu0 %v90
  %579 = vmatpush1.msra.mxu0 %v89
  %580 = vmatprep.subr.mxu0 0.0
  %581 = vmatpush1.msra.mxu0 0.0
  %582 = vmatprep.subr.mxu0 0.0
  %583 = vmatpush1.msra.mxu0 0.0
  %584 = vmatprep.subr.mxu0 0.0
  %585 = vmatpush1.msra.mxu0 0.0
  %586 = vmatprep.subr.mxu0 0.0
  %587 = vmatpush1.msra.mxu0 0.0
  %588 = vmatprep.subr.mxu0 0.0
  %589 = vmatpush1.msra.mxu0 0.0
  %590 = vmatprep.subr.mxu0 0.0
  %591 = vmatpush1.msra.mxu0 0.0
  %592 = vmatprep.subr.mxu0 0.0
  %593 = vmatpush1.msra.mxu0 0.0
  %594 = vmatprep.subr.mxu0 0.0
  %595 = vmatpush1.msra.mxu0 0.0
  %596 = vmatprep.subr.mxu0 0.0
  %597 = vmatpush1.msra.mxu0 0.0
  %598 = vmatprep.subr.mxu0 0.0
  %599 = vmatpush1.msra.mxu0 0.0
  %600 = vmatprep.subr.mxu0 0.0
  %601 = vmatpush1.msra.mxu0 0.0
  %602 = vmatprep.subr.mxu0 0.0
  %603 = vmatpush1.msra.mxu0 0.0
  %604 = vmatprep.subr.mxu0 0.0
  %605 = vmatpush1.msra.mxu0 0.0
  %606 = vmatprep.subr.mxu0 0.0
  %607 = vmatpush1.msra.mxu0 0.0
  %608 = vmatprep.subr.mxu0 0.0
  %609 = vmatpush1.msra.mxu0 0.0
  %610 = vmatprep.subr.mxu0 0.0
  %611 = vmatpush1.msra.mxu0 0.0
  %612 = vmatprep.mubr.f32.mxu0 0.0
  %613 = vmatmul.mubr.f32.gmra.mrb[0].mxu0 %v457
  %v614 = vpop.f32.mrb[0].mxu0
  %v615 = vadd.f32 0.0, %v614
  %v616 = vpop.f32.mrb[0].mxu0
  %v617 = vadd.f32 0.0, %v616
  %618 = vdwg.mxu0
  %v619 = vadd.f32 %v473, %v544
  %v620 = vadd.f32 %v474, %v546
  %v621 = vadd.f32 %v475, %v615
  %v622 = vadd.f32 %v476, %v617
  %v623 = vxor.u32 %v619, 2147483648
  %v624 = vmul.f32 %v623, 1.442695
  %v625 = vpow.pop %v624
  %v626 = vadd.f32 %v625, 1.0
  %v627 = vrcp.pop %v626
  %v628 = vmul.f32 1.0, %v627
  %v629 = vxor.u32 %v620, 2147483648
  %v630 = vmul.f32 %v629, 1.442695
  %v631 = vpow.pop %v630
  %v632 = vadd.f32 %v631, 1.0
  %v633 = vrcp.pop %v632
  %v634 = vmul.f32 1.0, %v633
  %v635 = vtanh.pop %v621
  %v636 = vxor.u32 %v622, 2147483648
  %v637 = vmul.f32 %v636, 1.442695
  %v638 = vpow.pop %v637
  %v639 = vadd.f32 %v638, 1.0
  %v640 = vrcp.pop %v639
  %v641 = vmul.f32 1.0, %v640
  %v642 = vmul.f32 %v634, %v455
  %v643 = vmul.f32 %v628, %v635
  %v644 = vadd.f32 %v642, %v643
  %v645 = vtanh.pop %v644
  %v646 = vmul.f32 %v641, %v645
  %s647 = scalar_lea.vmem %s3, 16
  %v648 = vld [vmem:[%s647] sm:$0xff]
  %650 = vset.pattern.permute.xlu0 0
  %651 = vperm.xlu0 %650, %v648
  %v652 = vpop.permute.xlu0 %651
  %v654 = vmul.f32 %v646, %v652
  %s655 = scalar_lea.vmem %s4, 16
  %656 = vst [vmem:[%s655] sm:$0xff] %v654
  %s657 = scalar_lea.vmem %s0, 96
  %v658 = vld [vmem:[%s657] sm:$0xff]
  %v659 = vld [vmem:[%s657 + $0x8] sm:$0xff]
  %v660 = vld [vmem:[%s657 + $0x10] sm:$0xff]
  %v661 = vld [vmem:[%s657 + $0x18] sm:$0xff]
  %v662 = vadd.f32 %v658, %v23
  %v663 = vadd.f32 %v659, %v24
  %v664 = vadd.f32 %v660, %v25
  %v665 = vadd.f32 %v661, %v26
  %666 = vmatprep.subr.mxu0 %v28
  %667 = vmatpush1.msra.mxu0 %v27
  %668 = vmatprep.subr.mxu0 %v32
  %669 = vmatpush1.msra.mxu0 %v31
  %670 = vmatprep.subr.mxu0 %v36
  %671 = vmatpush1.msra.mxu0 %v35
  %672 = vmatprep.subr.mxu0 %v40
  %673 = vmatpush1.msra.mxu0 %v39
  %674 = vmatprep.subr.mxu0 %v44
  %675 = vmatpush1.msra.mxu0 %v43
  %676 = vmatprep.subr.mxu0 %v48
  %677 = vmatpush1.msra.mxu0 %v47
  %678 = vmatprep.subr.mxu0 %v52
  %679 = vmatpush1.msra.mxu0 %v51
  %680 = vmatprep.subr.mxu0 %v56
  %681 = vmatpush1.msra.mxu0 %v55
  %682 = vmatprep.subr.mxu0 %v60
  %683 = vmatpush1.msra.mxu0 %v59
  %684 = vmatprep.subr.mxu0 %v64
  %685 = vmatpush1.msra.mxu0 %v63
  %686 = vmatprep.subr.mxu0 %v68
  %687 = vmatpush1.msra.mxu0 %v67
  %688 = vmatprep.subr.mxu0 %v72
  %689 = vmatpush1.msra.mxu0 %v71
  %690 = vmatprep.subr.mxu0 %v76
  %691 = vmatpush1.msra.mxu0 %v75
  %692 = vmatprep.subr.mxu0 %v80
  %693 = vmatpush1.msra.mxu0 %v79
  %694 = vmatprep.subr.mxu0 %v84
  %695 = vmatpush1.msra.mxu0 %v83
  %696 = vmatprep.subr.mxu0 %v88
  %697 = vmatpush1.msra.mxu0 %v87
  %698 = vmatprep.subr.mxu0 0.0
  %699 = vmatpush1.msra.mxu0 0.0
  %700 = vmatprep.subr.mxu0 0.0
  %701 = vmatpush1.msra.mxu0 0.0
  %702 = vmatprep.subr.mxu0 0.0
  %703 = vmatpush1.msra.mxu0 0.0
  %704 = vmatprep.subr.mxu0 0.0
  %705 = vmatpush1.msra.mxu0 0.0
  %706 = vmatprep.subr.mxu0 0.0
  %707 = vmatpush1.msra.mxu0 0.0
  %708 = vmatprep.subr.mxu0 0.0
  %709 = vmatpush1.msra.mxu0 0.0
  %710 = vmatprep.subr.mxu0 0.0
  %711 = vmatpush1.msra.mxu0 0.0
  %712 = vmatprep.subr.mxu0 0.0
  %713 = vmatpush1.msra.mxu0 0.0
  %714 = vmatprep.subr.mxu0 0.0
  %715 = vmatpush1.msra.mxu0 0.0
  %716 = vmatprep.subr.mxu0 0.0
  %717 = vmatpush1.msra.mxu0 0.0
  %718 = vmatprep.subr.mxu0 0.0
  %719 = vmatpush1.msra.mxu0 0.0
  %720 = vmatprep.subr.mxu0 0.0
  %721 = vmatpush1.msra.mxu0 0.0
  %722 = vmatprep.subr.mxu0 0.0
  %723 = vmatpush1.msra.mxu0 0.0
  %724 = vmatprep.subr.mxu0 0.0
  %725 = vmatpush1.msra.mxu0 0.0
  %726 = vmatprep.subr.mxu0 0.0
  %727 = vmatpush1.msra.mxu0 0.0
  %728 = vmatprep.subr.mxu0 0.0
  %729 = vmatpush1.msra.mxu0 0.0
  %730 = vmatprep.mubr.f32.mxu0 0.0
  %731 = vmatmul.mubr.f32.gmra.mrb[0].mxu0 %v646
  %v732 = vpop.f32.mrb[0].mxu0
  %v733 = vadd.f32 0.0, %v732
  %v734 = vpop.f32.mrb[0].mxu0
  %v735 = vadd.f32 0.0, %v734
  %736 = vdwg.mxu0
  %737 = vmatprep.subr.mxu0 %v30
  %738 = vmatpush1.msra.mxu0 %v29
  %739 = vmatprep.subr.mxu0 %v34
  %740 = vmatpush1.msra.mxu0 %v33
  %741 = vmatprep.subr.mxu0 %v38
  %742 = vmatpush1.msra.mxu0 %v37
  %743 = vmatprep.subr.mxu0 %v42
  %744 = vmatpush1.msra.mxu0 %v41
  %745 = vmatprep.subr.mxu0 %v46
  %746 = vmatpush1.msra.mxu0 %v45
  %747 = vmatprep.subr.mxu0 %v50
  %748 = vmatpush1.msra.mxu0 %v49
  %749 = vmatprep.subr.mxu0 %v54
  %750 = vmatpush1.msra.mxu0 %v53
  %751 = vmatprep.subr.mxu0 %v58
  %752 = vmatpush1.msra.mxu0 %v57
  %753 = vmatprep.subr.mxu0 %v62
  %754 = vmatpush1.msra.mxu0 %v61
  %755 = vmatprep.subr.mxu0 %v66
  %756 = vmatpush1.msra.mxu0 %v65
  %757 = vmatprep.subr.mxu0 %v70
  %758 = vmatpush1.msra.mxu0 %v69
  %759 = vmatprep.subr.mxu0 %v74
  %760 = vmatpush1.msra.mxu0 %v73
  %761 = vmatprep.subr.mxu0 %v78
  %762 = vmatpush1.msra.mxu0 %v77
  %763 = vmatprep.subr.mxu0 %v82
  %764 = vmatpush1.msra.mxu0 %v81
  %765 = vmatprep.subr.mxu0 %v86
  %766 = vmatpush1.msra.mxu0 %v85
  %767 = vmatprep.subr.mxu0 %v90
  %768 = vmatpush1.msra.mxu0 %v89
  %769 = vmatprep.subr.mxu0 0.0
  %770 = vmatpush1.msra.mxu0 0.0
  %771 = vmatprep.subr.mxu0 0.0
  %772 = vmatpush1.msra.mxu0 0.0
  %773 = vmatprep.subr.mxu0 0.0
  %774 = vmatpush1.msra.mxu0 0.0
  %775 = vmatprep.subr.mxu0 0.0
  %776 = vmatpush1.msra.mxu0 0.0
  %777 = vmatprep.subr.mxu0 0.0
  %778 = vmatpush1.msra.mxu0 0.0
  %779 = vmatprep.subr.mxu0 0.0
  %780 = vmatpush1.msra.mxu0 0.0
  %781 = vmatprep.subr.mxu0 0.0
  %782 = vmatpush1.msra.mxu0 0.0
  %783 = vmatprep.subr.mxu0 0.0
  %784 = vmatpush1.msra.mxu0 0.0
  %785 = vmatprep.subr.mxu0 0.0
  %786 = vmatpush1.msra.mxu0 0.0
  %787 = vmatprep.subr.mxu0 0.0
  %788 = vmatpush1.msra.mxu0 0.0
  %789 = vmatprep.subr.mxu0 0.0
  %790 = vmatpush1.msra.mxu0 0.0
  %791 = vmatprep.subr.mxu0 0.0
  %792 = vmatpush1.msra.mxu0 0.0
  %793 = vmatprep.subr.mxu0 0.0
  %794 = vmatpush1.msra.mxu0 0.0
  %795 = vmatprep.subr.mxu0 0.0
  %796 = vmatpush1.msra.mxu0 0.0
  %797 = vmatprep.subr.mxu0 0.0
  %798 = vmatpush1.msra.mxu0 0.0
  %799 = vmatprep.subr.mxu0 0.0
  %800 = vmatpush1.msra.mxu0 0.0
  %801 = vmatprep.mubr.f32.mxu0 0.0
  %802 = vmatmul.mubr.f32.gmra.mrb[0].mxu0 %v646
  %v803 = vpop.f32.mrb[0].mxu0
  %v804 = vadd.f32 0.0, %v803
  %v805 = vpop.f32.mrb[0].mxu0
  %v806 = vadd.f32 0.0, %v805
  %807 = vdwg.mxu0
  %v808 = vadd.f32 %v662, %v733
  %v809 = vadd.f32 %v663, %v735
  %v810 = vadd.f32 %v664, %v804
  %v811 = vadd.f32 %v665, %v806
  %v812 = vxor.u32 %v808, 2147483648
  %v813 = vmul.f32 %v812, 1.442695
  %v814 = vpow.pop %v813
  %v815 = vadd.f32 %v814, 1.0
  %v816 = vrcp.pop %v815
  %v817 = vmul.f32 1.0, %v816
  %v818 = vxor.u32 %v809, 2147483648
  %v819 = vmul.f32 %v818, 1.442695
  %v820 = vpow.pop %v819
  %v821 = vadd.f32 %v820, 1.0
  %v822 = vrcp.pop %v821
  %v823 = vmul.f32 1.0, %v822
  %v824 = vtanh.pop %v810
  %v825 = vxor.u32 %v811, 2147483648
  %v826 = vmul.f32 %v825, 1.442695
  %v827 = vpow.pop %v826
  %v828 = vadd.f32 %v827, 1.0
  %v829 = vrcp.pop %v828
  %v830 = vmul.f32 1.0, %v829
  %v831 = vmul.f32 %v823, %v644
  %v832 = vmul.f32 %v817, %v824
  %v833 = vadd.f32 %v831, %v832
  %v834 = vtanh.pop %v833
  %v835 = vmul.f32 %v830, %v834
  %s836 = scalar_lea.vmem %s3, 24
  %v837 = vld [vmem:[%s836] sm:$0xff]
  %839 = vset.pattern.permute.xlu0 0
  %840 = vperm.xlu0 %839, %v837
  %v841 = vpop.permute.xlu0 %840
  %v843 = vmul.f32 %v835, %v841
  %s844 = scalar_lea.vmem %s4, 24
  %845 = vst [vmem:[%s844] sm:$0xff] %v843
  %s846 = scalar_lea.vmem %s0, 128
  %v847 = vld [vmem:[%s846] sm:$0xff]
  %v848 = vld [vmem:[%s846 + $0x8] sm:$0xff]
  %v849 = vld [vmem:[%s846 + $0x10] sm:$0xff]
  %v850 = vld [vmem:[%s846 + $0x18] sm:$0xff]
  %v851 = vadd.f32 %v847, %v23
  %v852 = vadd.f32 %v848, %v24
  %v853 = vadd.f32 %v849, %v25
  %v854 = vadd.f32 %v850, %v26
  %855 = vmatprep.subr.mxu0 %v28
  %856 = vmatpush1.msra.mxu0 %v27
  %857 = vmatprep.subr.mxu0 %v32
  %858 = vmatpush1.msra.mxu0 %v31
  %859 = vmatprep.subr.mxu0 %v36
  %860 = vmatpush1.msra.mxu0 %v35
  %861 = vmatprep.subr.mxu0 %v40
  %862 = vmatpush1.msra.mxu0 %v39
  %863 = vmatprep.subr.mxu0 %v44
  %864 = vmatpush1.msra.mxu0 %v43
  %865 = vmatprep.subr.mxu0 %v48
  %866 = vmatpush1.msra.mxu0 %v47
  %867 = vmatprep.subr.mxu0 %v52
  %868 = vmatpush1.msra.mxu0 %v51
  %869 = vmatprep.subr.mxu0 %v56
  %870 = vmatpush1.msra.mxu0 %v55
  %871 = vmatprep.subr.mxu0 %v60
  %872 = vmatpush1.msra.mxu0 %v59
  %873 = vmatprep.subr.mxu0 %v64
  %874 = vmatpush1.msra.mxu0 %v63
  %875 = vmatprep.subr.mxu0 %v68
  %876 = vmatpush1.msra.mxu0 %v67
  %877 = vmatprep.subr.mxu0 %v72
  %878 = vmatpush1.msra.mxu0 %v71
  %879 = vmatprep.subr.mxu0 %v76
  %880 = vmatpush1.msra.mxu0 %v75
  %881 = vmatprep.subr.mxu0 %v80
  %882 = vmatpush1.msra.mxu0 %v79
  %883 = vmatprep.subr.mxu0 %v84
  %884 = vmatpush1.msra.mxu0 %v83
  %885 = vmatprep.subr.mxu0 %v88
  %886 = vmatpush1.msra.mxu0 %v87
  %887 = vmatprep.subr.mxu0 0.0
  %888 = vmatpush1.msra.mxu0 0.0
  %889 = vmatprep.subr.mxu0 0.0
  %890 = vmatpush1.msra.mxu0 0.0
  %891 = vmatprep.subr.mxu0 0.0
  %892 = vmatpush1.msra.mxu0 0.0
  %893 = vmatprep.subr.mxu0 0.0
  %894 = vmatpush1.msra.mxu0 0.0
  %895 = vmatprep.subr.mxu0 0.0
  %896 = vmatpush1.msra.mxu0 0.0
  %897 = vmatprep.subr.mxu0 0.0
  %898 = vmatpush1.msra.mxu0 0.0
  %899 = vmatprep.subr.mxu0 0.0
  %900 = vmatpush1.msra.mxu0 0.0
  %901 = vmatprep.subr.mxu0 0.0
  %902 = vmatpush1.msra.mxu0 0.0
  %903 = vmatprep.subr.mxu0 0.0
  %904 = vmatpush1.msra.mxu0 0.0
  %905 = vmatprep.subr.mxu0 0.0
  %906 = vmatpush1.msra.mxu0 0.0
  %907 = vmatprep.subr.mxu0 0.0
  %908 = vmatpush1.msra.mxu0 0.0
  %909 = vmatprep.subr.mxu0 0.0
  %910 = vmatpush1.msra.mxu0 0.0
  %911 = vmatprep.subr.mxu0 0.0
  %912 = vmatpush1.msra.mxu0 0.0
  %913 = vmatprep.subr.mxu0 0.0
  %914 = vmatpush1.msra.mxu0 0.0
  %915 = vmatprep.subr.mxu0 0.0
  %916 = vmatpush1.msra.mxu0 0.0
  %917 = vmatprep.subr.mxu0 0.0
  %918 = vmatpush1.msra.mxu0 0.0
  %919 = vmatprep.mubr.f32.mxu0 0.0
  %920 = vmatmul.mubr.f32.gmra.mrb[0].mxu0 %v835
  %v921 = vpop.f32.mrb[0].mxu0
  %v922 = vadd.f32 0.0, %v921
  %v923 = vpop.f32.mrb[0].mxu0
  %v924 = vadd.f32 0.0, %v923
  %925 = vdwg.mxu0
  %926 = vmatprep.subr.mxu0 %v30
  %927 = vmatpush1.msra.mxu0 %v29
  %928 = vmatprep.subr.mxu0 %v34
  %929 = vmatpush1.msra.mxu0 %v33
  %930 = vmatprep.subr.mxu0 %v38
  %931 = vmatpush1.msra.mxu0 %v37
  %932 = vmatprep.subr.mxu0 %v42
  %933 = vmatpush1.msra.mxu0 %v41
  %934 = vmatprep.subr.mxu0 %v46
  %935 = vmatpush1.msra.mxu0 %v45
  %936 = vmatprep.subr.mxu0 %v50
  %937 = vmatpush1.msra.mxu0 %v49
  %938 = vmatprep.subr.mxu0 %v54
  %939 = vmatpush1.msra.mxu0 %v53
  %940 = vmatprep.subr.mxu0 %v58
  %941 = vmatpush1.msra.mxu0 %v57
  %942 = vmatprep.subr.mxu0 %v62
  %943 = vmatpush1.msra.mxu0 %v61
  %944 = vmatprep.subr.mxu0 %v66
  %945 = vmatpush1.msra.mxu0 %v65
  %946 = vmatprep.subr.mxu0 %v70
  %947 = vmatpush1.msra.mxu0 %v69
  %948 = vmatprep.subr.mxu0 %v74
  %949 = vmatpush1.msra.mxu0 %v73
  %950 = vmatprep.subr.mxu0 %v78
  %951 = vmatpush1.msra.mxu0 %v77
  %952 = vmatprep.subr.mxu0 %v82
  %953 = vmatpush1.msra.mxu0 %v81
  %954 = vmatprep.subr.mxu0 %v86
  %955 = vmatpush1.msra.mxu0 %v85
  %956 = vmatprep.subr.mxu0 %v90
  %957 = vmatpush1.msra.mxu0 %v89
  %958 = vmatprep.subr.mxu0 0.0
  %959 = vmatpush1.msra.mxu0 0.0
  %960 = vmatprep.subr.mxu0 0.0
  %961 = vmatpush1.msra.mxu0 0.0
  %962 = vmatprep.subr.mxu0 0.0
  %963 = vmatpush1.msra.mxu0 0.0
  %964 = vmatprep.subr.mxu0 0.0
  %965 = vmatpush1.msra.mxu0 0.0
  %966 = vmatprep.subr.mxu0 0.0
  %967 = vmatpush1.msra.mxu0 0.0
  %968 = vmatprep.subr.mxu0 0.0
  %969 = vmatpush1.msra.mxu0 0.0
  %970 = vmatprep.subr.mxu0 0.0
  %971 = vmatpush1.msra.mxu0 0.0
  %972 = vmatprep.subr.mxu0 0.0
  %973 = vmatpush1.msra.mxu0 0.0
  %974 = vmatprep.subr.mxu0 0.0
  %975 = vmatpush1.msra.mxu0 0.0
  %976 = vmatprep.subr.mxu0 0.0
  %977 = vmatpush1.msra.mxu0 0.0
  %978 = vmatprep.subr.mxu0 0.0
  %979 = vmatpush1.msra.mxu0 0.0
  %980 = vmatprep.subr.mxu0 0.0
  %981 = vmatpush1.msra.mxu0 0.0
  %982 = vmatprep.subr.mxu0 0.0
  %983 = vmatpush1.msra.mxu0 0.0
  %984 = vmatprep.subr.mxu0 0.0
  %985 = vmatpush1.msra.mxu0 0.0
  %986 = vmatprep.subr.mxu0 0.0
  %987 = vmatpush1.msra.mxu0 0.0
  %988 = vmatprep.subr.mxu0 0.0
  %989 = vmatpush1.msra.mxu0 0.0
  %990 = vmatprep.mubr.f32.mxu0 0.0
  %991 = vmatmul.mubr.f32.gmra.mrb[0].mxu0 %v835
  %v992 = vpop.f32.mrb[0].mxu0
  %v993 = vadd.f32 0.0, %v992
  %v994 = vpop.f32.mrb[0].mxu0
  %v995 = vadd.f32 0.0, %v994
  %996 = vdwg.mxu0
  %v997 = vadd.f32 %v851, %v922
  %v998 = vadd.f32 %v852, %v924
  %v999 = vadd.f32 %v853, %v993
  %v1000 = vadd.f32 %v854, %v995
  %v1001 = vxor.u32 %v997, 2147483648
  %v1002 = vmul.f32 %v1001, 1.442695
  %v1003 = vpow.pop %v1002
  %v1004 = vadd.f32 %v1003, 1.0
  %v1005 = vrcp.pop %v1004
  %v1006 = vmul.f32 1.0, %v1005
  %v1007 = vxor.u32 %v998, 2147483648
  %v1008 = vmul.f32 %v1007, 1.442695
  %v1009 = vpow.pop %v1008
  %v1010 = vadd.f32 %v1009, 1.0
  %v1011 = vrcp.pop %v1010
  %v1012 = vmul.f32 1.0, %v1011
  %v1013 = vtanh.pop %v999
  %v1014 = vxor.u32 %v1000, 2147483648
  %v1015 = vmul.f32 %v1014, 1.442695
  %v1016 = vpow.pop %v1015
  %v1017 = vadd.f32 %v1016, 1.0
  %v1018 = vrcp.pop %v1017
  %v1019 = vmul.f32 1.0, %v1018
  %v1020 = vmul.f32 %v1012, %v833
  %v1021 = vmul.f32 %v1006, %v1013
  %v1022 = vadd.f32 %v1020, %v1021
  %v1023 = vtanh.pop %v1022
  %v1024 = vmul.f32 %v1019, %v1023
  %s1025 = scalar_lea.vmem %s3, 32
  %v1026 = vld [vmem:[%s1025] sm:$0xff]
  %1028 = vset.pattern.permute.xlu0 0
  %1029 = vperm.xlu0 %1028, %v1026
  %v1030 = vpop.permute.xlu0 %1029
  %v1032 = vmul.f32 %v1024, %v1030
  %s1033 = scalar_lea.vmem %s4, 32
  %1034 = vst [vmem:[%s1033] sm:$0xff] %v1032
  %s1035 = scalar_lea.vmem %s0, 160
  %v1036 = vld [vmem:[%s1035] sm:$0xff]
  %v1037 = vld [vmem:[%s1035 + $0x8] sm:$0xff]
  %v1038 = vld [vmem:[%s1035 + $0x10] sm:$0xff]
  %v1039 = vld [vmem:[%s1035 + $0x18] sm:$0xff]
  %v1040 = vadd.f32 %v1036, %v23
  %v1041 = vadd.f32 %v1037, %v24
  %v1042 = vadd.f32 %v1038, %v25
  %v1043 = vadd.f32 %v1039, %v26
  %1044 = vmatprep.subr.mxu0 %v28
  %1045 = vmatpush1.msra.mxu0 %v27
  %1046 = vmatprep.subr.mxu0 %v32
  %1047 = vmatpush1.msra.mxu0 %v31
  %1048 = vmatprep.subr.mxu0 %v36
  %1049 = vmatpush1.msra.mxu0 %v35
  %1050 = vmatprep.subr.mxu0 %v40
  %1051 = vmatpush1.msra.mxu0 %v39
  %1052 = vmatprep.subr.mxu0 %v44
  %1053 = vmatpush1.msra.mxu0 %v43
  %1054 = vmatprep.subr.mxu0 %v48
  %1055 = vmatpush1.msra.mxu0 %v47
  %1056 = vmatprep.subr.mxu0 %v52
  %1057 = vmatpush1.msra.mxu0 %v51
  %1058 = vmatprep.subr.mxu0 %v56
  %1059 = vmatpush1.msra.mxu0 %v55
  %1060 = vmatprep.subr.mxu0 %v60
  %1061 = vmatpush1.msra.mxu0 %v59
  %1062 = vmatprep.subr.mxu0 %v64
  %1063 = vmatpush1.msra.mxu0 %v63
  %1064 = vmatprep.subr.mxu0 %v68
  %1065 = vmatpush1.msra.mxu0 %v67
  %1066 = vmatprep.subr.mxu0 %v72
  %1067 = vmatpush1.msra.mxu0 %v71
  %1068 = vmatprep.subr.mxu0 %v76
  %1069 = vmatpush1.msra.mxu0 %v75
  %1070 = vmatprep.subr.mxu0 %v80
  %1071 = vmatpush1.msra.mxu0 %v79
  %1072 = vmatprep.subr.mxu0 %v84
  %1073 = vmatpush1.msra.mxu0 %v83
  %1074 = vmatprep.subr.mxu0 %v88
  %1075 = vmatpush1.msra.mxu0 %v87
  %1076 = vmatprep.subr.mxu0 0.0
  %1077 = vmatpush1.msra.mxu0 0.0
  %1078 = vmatprep.subr.mxu0 0.0
  %1079 = vmatpush1.msra.mxu0 0.0
  %1080 = vmatprep.subr.mxu0 0.0
  %1081 = vmatpush1.msra.mxu0 0.0
  %1082 = vmatprep.subr.mxu0 0.0
  %1083 = vmatpush1.msra.mxu0 0.0
  %1084 = vmatprep.subr.mxu0 0.0
  %1085 = vmatpush1.msra.mxu0 0.0
  %1086 = vmatprep.subr.mxu0 0.0
  %1087 = vmatpush1.msra.mxu0 0.0
  %1088 = vmatprep.subr.mxu0 0.0
  %1089 = vmatpush1.msra.mxu0 0.0
  %1090 = vmatprep.subr.mxu0 0.0
  %1091 = vmatpush1.msra.mxu0 0.0
  %1092 = vmatprep.subr.mxu0 0.0
  %1093 = vmatpush1.msra.mxu0 0.0
  %1094 = vmatprep.subr.mxu0 0.0
  %1095 = vmatpush1.msra.mxu0 0.0
  %1096 = vmatprep.subr.mxu0 0.0
  %1097 = vmatpush1.msra.mxu0 0.0
  %1098 = vmatprep.subr.mxu0 0.0
  %1099 = vmatpush1.msra.mxu0 0.0
  %1100 = vmatprep.subr.mxu0 0.0
  %1101 = vmatpush1.msra.mxu0 0.0
  %1102 = vmatprep.subr.mxu0 0.0
  %1103 = vmatpush1.msra.mxu0 0.0
  %1104 = vmatprep.subr.mxu0 0.0
  %1105 = vmatpush1.msra.mxu0 0.0
  %1106 = vmatprep.subr.mxu0 0.0
  %1107 = vmatpush1.msra.mxu0 0.0
  %1108 = vmatprep.mubr.f32.mxu0 0.0
  %1109 = vmatmul.mubr.f32.gmra.mrb[0].mxu0 %v1024
  %v1110 = vpop.f32.mrb[0].mxu0
  %v1111 = vadd.f32 0.0, %v1110
  %v1112 = vpop.f32.mrb[0].mxu0
  %v1113 = vadd.f32 0.0, %v1112
  %1114 = vdwg.mxu0
  %1115 = vmatprep.subr.mxu0 %v30
  %1116 = vmatpush1.msra.mxu0 %v29
  %1117 = vmatprep.subr.mxu0 %v34
  %1118 = vmatpush1.msra.mxu0 %v33
  %1119 = vmatprep.subr.mxu0 %v38
  %1120 = vmatpush1.msra.mxu0 %v37
  %1121 = vmatprep.subr.mxu0 %v42
  %1122 = vmatpush1.msra.mxu0 %v41
  %1123 = vmatprep.subr.mxu0 %v46
  %1124 = vmatpush1.msra.mxu0 %v45
  %1125 = vmatprep.subr.mxu0 %v50
  %1126 = vmatpush1.msra.mxu0 %v49
  %1127 = vmatprep.subr.mxu0 %v54
  %1128 = vmatpush1.msra.mxu0 %v53
  %1129 = vmatprep.subr.mxu0 %v58
  %1130 = vmatpush1.msra.mxu0 %v57
  %1131 = vmatprep.subr.mxu0 %v62
  %1132 = vmatpush1.msra.mxu0 %v61
  %1133 = vmatprep.subr.mxu0 %v66
  %1134 = vmatpush1.msra.mxu0 %v65
  %1135 = vmatprep.subr.mxu0 %v70
  %1136 = vmatpush1.msra.mxu0 %v69
  %1137 = vmatprep.subr.mxu0 %v74
  %1138 = vmatpush1.msra.mxu0 %v73
  %1139 = vmatprep.subr.mxu0 %v78
  %1140 = vmatpush1.msra.mxu0 %v77
  %1141 = vmatprep.subr.mxu0 %v82
  %1142 = vmatpush1.msra.mxu0 %v81
  %1143 = vmatprep.subr.mxu0 %v86
  %1144 = vmatpush1.msra.mxu0 %v85
  %1145 = vmatprep.subr.mxu0 %v90
  %1146 = vmatpush1.msra.mxu0 %v89
  %1147 = vmatprep.subr.mxu0 0.0
  %1148 = vmatpush1.msra.mxu0 0.0
  %1149 = vmatprep.subr.mxu0 0.0
  %1150 = vmatpush1.msra.mxu0 0.0
  %1151 = vmatprep.subr.mxu0 0.0
  %1152 = vmatpush1.msra.mxu0 0.0
  %1153 = vmatprep.subr.mxu0 0.0
  %1154 = vmatpush1.msra.mxu0 0.0
  %1155 = vmatprep.subr.mxu0 0.0
  %1156 = vmatpush1.msra.mxu0 0.0
  %1157 = vmatprep.subr.mxu0 0.0
  %1158 = vmatpush1.msra.mxu0 0.0
  %1159 = vmatprep.subr.mxu0 0.0
  %1160 = vmatpush1.msra.mxu0 0.0
  %1161 = vmatprep.subr.mxu0 0.0
  %1162 = vmatpush1.msra.mxu0 0.0
  %1163 = vmatprep.subr.mxu0 0.0
  %1164 = vmatpush1.msra.mxu0 0.0
  %1165 = vmatprep.subr.mxu0 0.0
  %1166 = vmatpush1.msra.mxu0 0.0
  %1167 = vmatprep.subr.mxu0 0.0
  %1168 = vmatpush1.msra.mxu0 0.0
  %1169 = vmatprep.subr.mxu0 0.0
  %1170 = vmatpush1.msra.mxu0 0.0
  %1171 = vmatprep.subr.mxu0 0.0
  %1172 = vmatpush1.msra.mxu0 0.0
  %1173 = vmatprep.subr.mxu0 0.0
  %1174 = vmatpush1.msra.mxu0 0.0
  %1175 = vmatprep.subr.mxu0 0.0
  %1176 = vmatpush1.msra.mxu0 0.0
  %1177 = vmatprep.subr.mxu0 0.0
  %1178 = vmatpush1.msra.mxu0 0.0
  %1179 = vmatprep.mubr.f32.mxu0 0.0
  %1180 = vmatmul.mubr.f32.gmra.mrb[0].mxu0 %v1024
  %v1181 = vpop.f32.mrb[0].mxu0
  %v1182 = vadd.f32 0.0, %v1181
  %v1183 = vpop.f32.mrb[0].mxu0
  %v1184 = vadd.f32 0.0, %v1183
  %1185 = vdwg.mxu0
  %v1186 = vadd.f32 %v1040, %v1111
  %v1187 = vadd.f32 %v1041, %v1113
  %v1188 = vadd.f32 %v1042, %v1182
  %v1189 = vadd.f32 %v1043, %v1184
  %v1190 = vxor.u32 %v1186, 2147483648
  %v1191 = vmul.f32 %v1190, 1.442695
  %v1192 = vpow.pop %v1191
  %v1193 = vadd.f32 %v1192, 1.0
  %v1194 = vrcp.pop %v1193
  %v1195 = vmul.f32 1.0, %v1194
  %v1196 = vxor.u32 %v1187, 2147483648
  %v1197 = vmul.f32 %v1196, 1.442695
  %v1198 = vpow.pop %v1197
  %v1199 = vadd.f32 %v1198, 1.0
  %v1200 = vrcp.pop %v1199
  %v1201 = vmul.f32 1.0, %v1200
  %v1202 = vtanh.pop %v1188
  %v1203 = vxor.u32 %v1189, 2147483648
  %v1204 = vmul.f32 %v1203, 1.442695
  %v1205 = vpow.pop %v1204
  %v1206 = vadd.f32 %v1205, 1.0
  %v1207 = vrcp.pop %v1206
  %v1208 = vmul.f32 1.0, %v1207
  %v1209 = vmul.f32 %v1201, %v1022
  %v1210 = vmul.f32 %v1195, %v1202
  %v1211 = vadd.f32 %v1209, %v1210
  %v1212 = vtanh.pop %v1211
  %v1213 = vmul.f32 %v1208, %v1212
  %s1214 = scalar_lea.vmem %s3, 40
  %v1215 = vld [vmem:[%s1214] sm:$0xff]
  %1217 = vset.pattern.permute.xlu0 0
  %1218 = vperm.xlu0 %1217, %v1215
  %v1219 = vpop.permute.xlu0 %1218
  %v1221 = vmul.f32 %v1213, %v1219
  %s1222 = scalar_lea.vmem %s4, 40
  %1223 = vst [vmem:[%s1222] sm:$0xff] %v1221
  %s1224 = scalar_lea.vmem %s0, 192
  %v1225 = vld [vmem:[%s1224] sm:$0xff]
  %v1226 = vld [vmem:[%s1224 + $0x8] sm:$0xff]
  %v1227 = vld [vmem:[%s1224 + $0x10] sm:$0xff]
  %v1228 = vld [vmem:[%s1224 + $0x18] sm:$0xff]
  %v1229 = vadd.f32 %v1225, %v23
  %v1230 = vadd.f32 %v1226, %v24
  %v1231 = vadd.f32 %v1227, %v25
  %v1232 = vadd.f32 %v1228, %v26
  %1233 = vmatprep.subr.mxu0 %v28
  %1234 = vmatpush1.msra.mxu0 %v27
  %1235 = vmatprep.subr.mxu0 %v32
  %1236 = vmatpush1.msra.mxu0 %v31
  %1237 = vmatprep.subr.mxu0 %v36
  %1238 = vmatpush1.msra.mxu0 %v35
  %1239 = vmatprep.subr.mxu0 %v40
  %1240 = vmatpush1.msra.mxu0 %v39
  %1241 = vmatprep.subr.mxu0 %v44
  %1242 = vmatpush1.msra.mxu0 %v43
  %1243 = vmatprep.subr.mxu0 %v48
  %1244 = vmatpush1.msra.mxu0 %v47
  %1245 = vmatprep.subr.mxu0 %v52
  %1246 = vmatpush1.msra.mxu0 %v51
  %1247 = vmatprep.subr.mxu0 %v56
  %1248 = vmatpush1.msra.mxu0 %v55
  %1249 = vmatprep.subr.mxu0 %v60
  %1250 = vmatpush1.msra.mxu0 %v59
  %1251 = vmatprep.subr.mxu0 %v64
  %1252 = vmatpush1.msra.mxu0 %v63
  %1253 = vmatprep.subr.mxu0 %v68
  %1254 = vmatpush1.msra.mxu0 %v67
  %1255 = vmatprep.subr.mxu0 %v72
  %1256 = vmatpush1.msra.mxu0 %v71
  %1257 = vmatprep.subr.mxu0 %v76
  %1258 = vmatpush1.msra.mxu0 %v75
  %1259 = vmatprep.subr.mxu0 %v80
  %1260 = vmatpush1.msra.mxu0 %v79
  %1261 = vmatprep.subr.mxu0 %v84
  %1262 = vmatpush1.msra.mxu0 %v83
  %1263 = vmatprep.subr.mxu0 %v88
  %1264 = vmatpush1.msra.mxu0 %v87
  %1265 = vmatprep.subr.mxu0 0.0
  %1266 = vmatpush1.msra.mxu0 0.0
  %1267 = vmatprep.subr.mxu0 0.0
  %1268 = vmatpush1.msra.mxu0 0.0
  %1269 = vmatprep.subr.mxu0 0.0
  %1270 = vmatpush1.msra.mxu0 0.0
  %1271 = vmatprep.subr.mxu0 0.0
  %1272 = vmatpush1.msra.mxu0 0.0
  %1273 = vmatprep.subr.mxu0 0.0
  %1274 = vmatpush1.msra.mxu0 0.0
  %1275 = vmatprep.subr.mxu0 0.0
  %1276 = vmatpush1.msra.mxu0 0.0
  %1277 = vmatprep.subr.mxu0 0.0
  %1278 = vmatpush1.msra.mxu0 0.0
  %1279 = vmatprep.subr.mxu0 0.0
  %1280 = vmatpush1.msra.mxu0 0.0
  %1281 = vmatprep.subr.mxu0 0.0
  %1282 = vmatpush1.msra.mxu0 0.0
  %1283 = vmatprep.subr.mxu0 0.0
  %1284 = vmatpush1.msra.mxu0 0.0
  %1285 = vmatprep.subr.mxu0 0.0
  %1286 = vmatpush1.msra.mxu0 0.0
  %1287 = vmatprep.subr.mxu0 0.0
  %1288 = vmatpush1.msra.mxu0 0.0
  %1289 = vmatprep.subr.mxu0 0.0
  %1290 = vmatpush1.msra.mxu0 0.0
  %1291 = vmatprep.subr.mxu0 0.0
  %1292 = vmatpush1.msra.mxu0 0.0
  %1293 = vmatprep.subr.mxu0 0.0
  %1294 = vmatpush1.msra.mxu0 0.0
  %1295 = vmatprep.subr.mxu0 0.0
  %1296 = vmatpush1.msra.mxu0 0.0
  %1297 = vmatprep.mubr.f32.mxu0 0.0
  %1298 = vmatmul.mubr.f32.gmra.mrb[0].mxu0 %v1213
  %v1299 = vpop.f32.mrb[0].mxu0
  %v1300 = vadd.f32 0.0, %v1299
  %v1301 = vpop.f32.mrb[0].mxu0
  %v1302 = vadd.f32 0.0, %v1301
  %1303 = vdwg.mxu0
  %1304 = vmatprep.subr.mxu0 %v30
  %1305 = vmatpush1.msra.mxu0 %v29
  %1306 = vmatprep.subr.mxu0 %v34
  %1307 = vmatpush1.msra.mxu0 %v33
  %1308 = vmatprep.subr.mxu0 %v38
  %1309 = vmatpush1.msra.mxu0 %v37
  %1310 = vmatprep.subr.mxu0 %v42
  %1311 = vmatpush1.msra.mxu0 %v41
  %1312 = vmatprep.subr.mxu0 %v46
  %1313 = vmatpush1.msra.mxu0 %v45
  %1314 = vmatprep.subr.mxu0 %v50
  %1315 = vmatpush1.msra.mxu0 %v49
  %1316 = vmatprep.subr.mxu0 %v54
  %1317 = vmatpush1.msra.mxu0 %v53
  %1318 = vmatprep.subr.mxu0 %v58
  %1319 = vmatpush1.msra.mxu0 %v57
  %1320 = vmatprep.subr.mxu0 %v62
  %1321 = vmatpush1.msra.mxu0 %v61
  %1322 = vmatprep.subr.mxu0 %v66
  %1323 = vmatpush1.msra.mxu0 %v65
  %1324 = vmatprep.subr.mxu0 %v70
  %1325 = vmatpush1.msra.mxu0 %v69
  %1326 = vmatprep.subr.mxu0 %v74
  %1327 = vmatpush1.msra.mxu0 %v73
  %1328 = vmatprep.subr.mxu0 %v78
  %1329 = vmatpush1.msra.mxu0 %v77
  %1330 = vmatprep.subr.mxu0 %v82
  %1331 = vmatpush1.msra.mxu0 %v81
  %1332 = vmatprep.subr.mxu0 %v86
  %1333 = vmatpush1.msra.mxu0 %v85
  %1334 = vmatprep.subr.mxu0 %v90
  %1335 = vmatpush1.msra.mxu0 %v89
  %1336 = vmatprep.subr.mxu0 0.0
  %1337 = vmatpush1.msra.mxu0 0.0
  %1338 = vmatprep.subr.mxu0 0.0
  %1339 = vmatpush1.msra.mxu0 0.0
  %1340 = vmatprep.subr.mxu0 0.0
  %1341 = vmatpush1.msra.mxu0 0.0
  %1342 = vmatprep.subr.mxu0 0.0
  %1343 = vmatpush1.msra.mxu0 0.0
  %1344 = vmatprep.subr.mxu0 0.0
  %1345 = vmatpush1.msra.mxu0 0.0
  %1346 = vmatprep.subr.mxu0 0.0
  %1347 = vmatpush1.msra.mxu0 0.0
  %1348 = vmatprep.subr.mxu0 0.0
  %1349 = vmatpush1.msra.mxu0 0.0
  %1350 = vmatprep.subr.mxu0 0.0
  %1351 = vmatpush1.msra.mxu0 0.0
  %1352 = vmatprep.subr.mxu0 0.0
  %1353 = vmatpush1.msra.mxu0 0.0
  %1354 = vmatprep.subr.mxu0 0.0
  %1355 = vmatpush1.msra.mxu0 0.0
  %1356 = vmatprep.subr.mxu0 0.0
  %1357 = vmatpush1.msra.mxu0 0.0
  %1358 = vmatprep.subr.mxu0 0.0
  %1359 = vmatpush1.msra.mxu0 0.0
  %1360 = vmatprep.subr.mxu0 0.0
  %1361 = vmatpush1.msra.mxu0 0.0
  %1362 = vmatprep.subr.mxu0 0.0
  %1363 = vmatpush1.msra.mxu0 0.0
  %1364 = vmatprep.subr.mxu0 0.0
  %1365 = vmatpush1.msra.mxu0 0.0
  %1366 = vmatprep.subr.mxu0 0.0
  %1367 = vmatpush1.msra.mxu0 0.0
  %1368 = vmatprep.mubr.f32.mxu0 0.0
  %1369 = vmatmul.mubr.f32.gmra.mrb[0].mxu0 %v1213
  %v1370 = vpop.f32.mrb[0].mxu0
  %v1371 = vadd.f32 0.0, %v1370
  %v1372 = vpop.f32.mrb[0].mxu0
  %v1373 = vadd.f32 0.0, %v1372
  %1374 = vdwg.mxu0
  %v1375 = vadd.f32 %v1229, %v1300
  %v1376 = vadd.f32 %v1230, %v1302
  %v1377 = vadd.f32 %v1231, %v1371
  %v1378 = vadd.f32 %v1232, %v1373
  %v1379 = vxor.u32 %v1375, 2147483648
  %v1380 = vmul.f32 %v1379, 1.442695
  %v1381 = vpow.pop %v1380
  %v1382 = vadd.f32 %v1381, 1.0
  %v1383 = vrcp.pop %v1382
  %v1384 = vmul.f32 1.0, %v1383
  %v1385 = vxor.u32 %v1376, 2147483648
  %v1386 = vmul.f32 %v1385, 1.442695
  %v1387 = vpow.pop %v1386
  %v1388 = vadd.f32 %v1387, 1.0
  %v1389 = vrcp.pop %v1388
  %v1390 = vmul.f32 1.0, %v1389
  %v1391 = vtanh.pop %v1377
  %v1392 = vxor.u32 %v1378, 2147483648
  %v1393 = vmul.f32 %v1392, 1.442695
  %v1394 = vpow.pop %v1393
  %v1395 = vadd.f32 %v1394, 1.0
  %v1396 = vrcp.pop %v1395
  %v1397 = vmul.f32 1.0, %v1396
  %v1398 = vmul.f32 %v1390, %v1211
  %v1399 = vmul.f32 %v1384, %v1391
  %v1400 = vadd.f32 %v1398, %v1399
  %v1401 = vtanh.pop %v1400
  %v1402 = vmul.f32 %v1397, %v1401
  %s1403 = scalar_lea.vmem %s3, 48
  %v1404 = vld [vmem:[%s1403] sm:$0xff]
  %1406 = vset.pattern.permute.xlu0 0
  %1407 = vperm.xlu0 %1406, %v1404
  %v1408 = vpop.permute.xlu0 %1407
  %v1410 = vmul.f32 %v1402, %v1408
  %s1411 = scalar_lea.vmem %s4, 48
  %1412 = vst [vmem:[%s1411] sm:$0xff] %v1410
  %s1413 = scalar_lea.vmem %s0, 224
  %v1414 = vld [vmem:[%s1413] sm:$0xff]
  %v1415 = vld [vmem:[%s1413 + $0x8] sm:$0xff]
  %v1416 = vld [vmem:[%s1413 + $0x10] sm:$0xff]
  %v1417 = vld [vmem:[%s1413 + $0x18] sm:$0xff]
  %v1418 = vadd.f32 %v1414, %v23
  %v1419 = vadd.f32 %v1415, %v24
  %v1420 = vadd.f32 %v1416, %v25
  %v1421 = vadd.f32 %v1417, %v26
  %1422 = vmatprep.subr.mxu0 %v28
  %1423 = vmatpush1.msra.mxu0 %v27
  %1424 = vmatprep.subr.mxu0 %v32
  %1425 = vmatpush1.msra.mxu0 %v31
  %1426 = vmatprep.subr.mxu0 %v36
  %1427 = vmatpush1.msra.mxu0 %v35
  %1428 = vmatprep.subr.mxu0 %v40
  %1429 = vmatpush1.msra.mxu0 %v39
  %1430 = vmatprep.subr.mxu0 %v44
  %1431 = vmatpush1.msra.mxu0 %v43
  %1432 = vmatprep.subr.mxu0 %v48
  %1433 = vmatpush1.msra.mxu0 %v47
  %1434 = vmatprep.subr.mxu0 %v52
  %1435 = vmatpush1.msra.mxu0 %v51
  %1436 = vmatprep.subr.mxu0 %v56
  %1437 = vmatpush1.msra.mxu0 %v55
  %1438 = vmatprep.subr.mxu0 %v60
  %1439 = vmatpush1.msra.mxu0 %v59
  %1440 = vmatprep.subr.mxu0 %v64
  %1441 = vmatpush1.msra.mxu0 %v63
  %1442 = vmatprep.subr.mxu0 %v68
  %1443 = vmatpush1.msra.mxu0 %v67
  %1444 = vmatprep.subr.mxu0 %v72
  %1445 = vmatpush1.msra.mxu0 %v71
  %1446 = vmatprep.subr.mxu0 %v76
  %1447 = vmatpush1.msra.mxu0 %v75
  %1448 = vmatprep.subr.mxu0 %v80
  %1449 = vmatpush1.msra.mxu0 %v79
  %1450 = vmatprep.subr.mxu0 %v84
  %1451 = vmatpush1.msra.mxu0 %v83
  %1452 = vmatprep.subr.mxu0 %v88
  %1453 = vmatpush1.msra.mxu0 %v87
  %1454 = vmatprep.subr.mxu0 0.0
  %1455 = vmatpush1.msra.mxu0 0.0
  %1456 = vmatprep.subr.mxu0 0.0
  %1457 = vmatpush1.msra.mxu0 0.0
  %1458 = vmatprep.subr.mxu0 0.0
  %1459 = vmatpush1.msra.mxu0 0.0
  %1460 = vmatprep.subr.mxu0 0.0
  %1461 = vmatpush1.msra.mxu0 0.0
  %1462 = vmatprep.subr.mxu0 0.0
  %1463 = vmatpush1.msra.mxu0 0.0
  %1464 = vmatprep.subr.mxu0 0.0
  %1465 = vmatpush1.msra.mxu0 0.0
  %1466 = vmatprep.subr.mxu0 0.0
  %1467 = vmatpush1.msra.mxu0 0.0
  %1468 = vmatprep.subr.mxu0 0.0
  %1469 = vmatpush1.msra.mxu0 0.0
  %1470 = vmatprep.subr.mxu0 0.0
  %1471 = vmatpush1.msra.mxu0 0.0
  %1472 = vmatprep.subr.mxu0 0.0
  %1473 = vmatpush1.msra.mxu0 0.0
  %1474 = vmatprep.subr.mxu0 0.0
  %1475 = vmatpush1.msra.mxu0 0.0
  %1476 = vmatprep.subr.mxu0 0.0
  %1477 = vmatpush1.msra.mxu0 0.0
  %1478 = vmatprep.subr.mxu0 0.0
  %1479 = vmatpush1.msra.mxu0 0.0
  %1480 = vmatprep.subr.mxu0 0.0
  %1481 = vmatpush1.msra.mxu0 0.0
  %1482 = vmatprep.subr.mxu0 0.0
  %1483 = vmatpush1.msra.mxu0 0.0
  %1484 = vmatprep.subr.mxu0 0.0
  %1485 = vmatpush1.msra.mxu0 0.0
  %1486 = vmatprep.mubr.f32.mxu0 0.0
  %1487 = vmatmul.mubr.f32.gmra.mrb[0].mxu0 %v1402
  %v1488 = vpop.f32.mrb[0].mxu0
  %v1489 = vadd.f32 0.0, %v1488
  %v1490 = vpop.f32.mrb[0].mxu0
  %v1491 = vadd.f32 0.0, %v1490
  %1492 = vdwg.mxu0
  %1493 = vmatprep.subr.mxu0 %v30
  %1494 = vmatpush1.msra.mxu0 %v29
  %1495 = vmatprep.subr.mxu0 %v34
  %1496 = vmatpush1.msra.mxu0 %v33
  %1497 = vmatprep.subr.mxu0 %v38
  %1498 = vmatpush1.msra.mxu0 %v37
  %1499 = vmatprep.subr.mxu0 %v42
  %1500 = vmatpush1.msra.mxu0 %v41
  %1501 = vmatprep.subr.mxu0 %v46
  %1502 = vmatpush1.msra.mxu0 %v45
  %1503 = vmatprep.subr.mxu0 %v50
  %1504 = vmatpush1.msra.mxu0 %v49
  %1505 = vmatprep.subr.mxu0 %v54
  %1506 = vmatpush1.msra.mxu0 %v53
  %1507 = vmatprep.subr.mxu0 %v58
  %1508 = vmatpush1.msra.mxu0 %v57
  %1509 = vmatprep.subr.mxu0 %v62
  %1510 = vmatpush1.msra.mxu0 %v61
  %1511 = vmatprep.subr.mxu0 %v66
  %1512 = vmatpush1.msra.mxu0 %v65
  %1513 = vmatprep.subr.mxu0 %v70
  %1514 = vmatpush1.msra.mxu0 %v69
  %1515 = vmatprep.subr.mxu0 %v74
  %1516 = vmatpush1.msra.mxu0 %v73
  %1517 = vmatprep.subr.mxu0 %v78
  %1518 = vmatpush1.msra.mxu0 %v77
  %1519 = vmatprep.subr.mxu0 %v82
  %1520 = vmatpush1.msra.mxu0 %v81
  %1521 = vmatprep.subr.mxu0 %v86
  %1522 = vmatpush1.msra.mxu0 %v85
  %1523 = vmatprep.subr.mxu0 %v90
  %1524 = vmatpush1.msra.mxu0 %v89
  %1525 = vmatprep.subr.mxu0 0.0
  %1526 = vmatpush1.msra.mxu0 0.0
  %1527 = vmatprep.subr.mxu0 0.0
  %1528 = vmatpush1.msra.mxu0 0.0
  %1529 = vmatprep.subr.mxu0 0.0
  %1530 = vmatpush1.msra.mxu0 0.0
  %1531 = vmatprep.subr.mxu0 0.0
  %1532 = vmatpush1.msra.mxu0 0.0
  %1533 = vmatprep.subr.mxu0 0.0
  %1534 = vmatpush1.msra.mxu0 0.0
  %1535 = vmatprep.subr.mxu0 0.0
  %1536 = vmatpush1.msra.mxu0 0.0
  %1537 = vmatprep.subr.mxu0 0.0
  %1538 = vmatpush1.msra.mxu0 0.0
  %1539 = vmatprep.subr.mxu0 0.0
  %1540 = vmatpush1.msra.mxu0 0.0
  %1541 = vmatprep.subr.mxu0 0.0
  %1542 = vmatpush1.msra.mxu0 0.0
  %1543 = vmatprep.subr.mxu0 0.0
  %1544 = vmatpush1.msra.mxu0 0.0
  %1545 = vmatprep.subr.mxu0 0.0
  %1546 = vmatpush1.msra.mxu0 0.0
  %1547 = vmatprep.subr.mxu0 0.0
  %1548 = vmatpush1.msra.mxu0 0.0
  %1549 = vmatprep.subr.mxu0 0.0
  %1550 = vmatpush1.msra.mxu0 0.0
  %1551 = vmatprep.subr.mxu0 0.0
  %1552 = vmatpush1.msra.mxu0 0.0
  %1553 = vmatprep.subr.mxu0 0.0
  %1554 = vmatpush1.msra.mxu0 0.0
  %1555 = vmatprep.subr.mxu0 0.0
  %1556 = vmatpush1.msra.mxu0 0.0
  %1557 = vmatprep.mubr.f32.mxu0 0.0
  %1558 = vmatmul.mubr.f32.gmra.mrb[0].mxu0 %v1402
  %v1559 = vpop.f32.mrb[0].mxu0
  %v1560 = vadd.f32 0.0, %v1559
  %v1561 = vpop.f32.mrb[0].mxu0
  %v1562 = vadd.f32 0.0, %v1561
  %1563 = vdwg.mxu0
  %v1564 = vadd.f32 %v1418, %v1489
  %v1565 = vadd.f32 %v1419, %v1491
  %v1566 = vadd.f32 %v1420, %v1560
  %v1567 = vadd.f32 %v1421, %v1562
  %v1568 = vxor.u32 %v1564, 2147483648
  %v1569 = vmul.f32 %v1568, 1.442695
  %v1570 = vpow.pop %v1569
  %v1571 = vadd.f32 %v1570, 1.0
  %v1572 = vrcp.pop %v1571
  %v1573 = vmul.f32 1.0, %v1572
  %v1574 = vxor.u32 %v1565, 2147483648
  %v1575 = vmul.f32 %v1574, 1.442695
  %v1576 = vpow.pop %v1575
  %v1577 = vadd.f32 %v1576, 1.0
  %v1578 = vrcp.pop %v1577
  %v1579 = vmul.f32 1.0, %v1578
  %v1580 = vtanh.pop %v1566
  %v1581 = vxor.u32 %v1567, 2147483648
  %v1582 = vmul.f32 %v1581, 1.442695
  %v1583 = vpow.pop %v1582
  %v1584 = vadd.f32 %v1583, 1.0
  %v1585 = vrcp.pop %v1584
  %v1586 = vmul.f32 1.0, %v1585
  %v1587 = vmul.f32 %v1579, %v1400
  %v1588 = vmul.f32 %v1573, %v1580
  %v1589 = vadd.f32 %v1587, %v1588
  %v1590 = vtanh.pop %v1589
  %v1591 = vmul.f32 %v1586, %v1590
  %s1592 = scalar_lea.vmem %s3, 56
  %v1593 = vld [vmem:[%s1592] sm:$0xff]
  %1595 = vset.pattern.permute.xlu0 0
  %1596 = vperm.xlu0 %1595, %v1593
  %v1597 = vpop.permute.xlu0 %1596
  %v1599 = vmul.f32 %v1591, %v1597
  %s1600 = scalar_lea.vmem %s4, 56
  %1601 = vst [vmem:[%s1600] sm:$0xff] %v1599
  %1602 = vst [vmem:[#allocation2] sm:$0xff] %v1591
  %1603 = vst [vmem:[#allocation3] sm:$0xff] %v1589
  // Predicated region
  $region22: #{_qgen_forward_impl.8} parent=0 // pred_check
    _
  $region23: #{_qgen_forward_impl.8} parent=0 // pred_check_branch
    %1605 = sbr.rel (0) target = $region25
  $region24: #{_qgen_forward_impl.8} parent=0 // pred_region
    _
  $region25: #{_qgen_forward_impl.8} parent=0 // pred_fallthru
    _
  // Predicated region
  $region26: #{_qgen_forward_impl.8} parent=0 // pred_check
    _
  $region27: #{_qgen_forward_impl.8} parent=0 // pred_check_branch
    %1607 = sbr.rel (0) target = $region29
  $region28: #{_qgen_forward_impl.8} parent=0 // pred_region
    _
  $region29: #{_qgen_forward_impl.8} parent=0 // pred_fallthru
    _

</llo_original>
